<compile_context>
chip_gen: v7x
topology: tpu7x:2x2x1
jax: 0.10.0
libtpu: 0.0.40
codegen_flags: <defaults>
</compile_context>

<pallas_src>
import functools
import math

import numpy as np
import jax
import jax.numpy as jnp
from jax.experimental import pallas as pl
from jax.experimental.pallas import tpu as pltpu


# ----------------------------------------------------------------------------
# Pallas kernels
# ----------------------------------------------------------------------------
def _matmul_bias_act_kernel(x_ref, w_ref, b_ref, o_ref, *, activation):
    # bf16 MXU inputs, f32 accumulation, f32 epilogue (BN already folded in w/b).
    y = jnp.dot(x_ref[...], w_ref[...], preferred_element_type=jnp.float32)
    y = y + b_ref[...]                     # (1, N) broadcast, f32
    if activation == "relu":
        y = jnp.maximum(y, 0.0)
    elif activation == "sigmoid":
        y = jax.nn.sigmoid(y)
    o_ref[...] = y


def _round_up(x, m):
    return ((x + m - 1) // m) * m


def pallas_linear(x, w, b, activation=None, tile_m=512):
    """y = act(x @ w + b).  x:(M,K) f32, w:(K,N), b:(N,).

    bf16 MXU inputs / f32 accumulation; M-tiled grid (double-buffered pipeline)
    with megacore-parallel semantics.  Lane-dense N (multiple of 128 where it
    is cheap) is handled by the caller via channel padding."""
    M, K = x.shape
    N = w.shape[1]
    tm = min(tile_m, _round_up(M, 16))     # multiple of 16 for bf16 sublane packing
    Mp = _round_up(M, tm)
    if Mp != M:
        x = jnp.pad(x, ((0, Mp - M), (0, 0)))
    out = pl.pallas_call(
        functools.partial(_matmul_bias_act_kernel, activation=activation),
        out_shape=jax.ShapeDtypeStruct((Mp, N), jnp.float32),
        grid=(Mp // tm,),
        in_specs=[
            pl.BlockSpec((tm, K), lambda i: (i, 0)),
            pl.BlockSpec((K, N), lambda i: (0, 0)),
            pl.BlockSpec((1, N), lambda i: (0, 0)),
        ],
        out_specs=pl.BlockSpec((tm, N), lambda i: (i, 0)),
        compiler_params=pltpu.CompilerParams(
            dimension_semantics=("parallel",)),
    )(x.astype(jnp.bfloat16), w.astype(jnp.bfloat16),
      b.reshape(1, N).astype(jnp.float32))
    return out[:M] if Mp != M else out


def _head_kernel(x_ref, wq_ref,
                 w1_ref, b1_ref, w2_ref, b2_ref, w3_ref, b3_ref,
                 w4_ref, b4_ref, w5_ref, b5_ref, w6t_ref, b6_ref,
                 o_ref):
    """Fused so3_integrate + fc1..fc6 (+ folded BN, ReLU, sigmoid)."""
    x = x_ref[...]                               # (B, S, C) f32, conv6 output
    wq = wq_ref[...]                             # (S, 1) quadrature weights
    feat = jnp.sum(x * wq[None, :, :], axis=1)   # so3_integrate -> (B, C)

    def dense_relu(h, w_r, b_r):
        y = jnp.dot(h, w_r[...], preferred_element_type=jnp.float32) + b_r[...]
        return jnp.maximum(y, 0.0)

    h = dense_relu(feat, w1_ref, b1_ref)         # fc1 + BN1d + ReLU (BN folded)
    h = dense_relu(h, w2_ref, b2_ref)            # fc2
    h = dense_relu(h, w3_ref, b3_ref)            # fc3
    h = dense_relu(h, w4_ref, b4_ref)            # fc4
    h = dense_relu(h, w5_ref, b5_ref)            # fc5
    # fc6 (12 -> 1) as a lane reduction + fused sigmoid
    logit = jnp.sum(h * w6t_ref[...], axis=1, keepdims=True) + b6_ref[...]
    o_ref[...] = jax.nn.sigmoid(logit)


def pallas_head(x_bsc, w_quad, fc_ws, fc_bs):
    """x_bsc:(B,S,C) conv6 output; w_quad:(S,); fc_ws/fc_bs already BN-folded."""
    B, S, C = x_bsc.shape
    in_specs = [pl.BlockSpec((B, S, C), lambda i: (0, 0, 0)),
                pl.BlockSpec((S, 1), lambda i: (0, 0))]
    args = [x_bsc.astype(jnp.float32), w_quad.reshape(S, 1).astype(jnp.float32)]
    last = len(fc_ws) - 1
    for j, (w, b) in enumerate(zip(fc_ws, fc_bs)):
        if j == last:
            w = w.T                              # (1, K): final layer as lane reduce
        K, N = w.shape
        in_specs.append(pl.BlockSpec((K, N), lambda i: (0, 0)))
        in_specs.append(pl.BlockSpec((1, b.shape[0]), lambda i: (0, 0)))
        args.append(w.astype(jnp.float32))
        args.append(b.reshape(1, -1).astype(jnp.float32))
    return pl.pallas_call(
        _head_kernel,
        out_shape=jax.ShapeDtypeStruct((B, 1), jnp.float32),
        grid=(1,),
        in_specs=in_specs,
        out_specs=pl.BlockSpec((B, 1), lambda i: (0, 0)),
    )(*args)


# ----------------------------------------------------------------------------
# Glue: band-limit resampling, quadrature weights, parameter init
# ----------------------------------------------------------------------------
def resample_matrix(n_in, n_out):
    """Linear-interpolation matrix (n_out, n_in); rows sum to 1."""
    R = np.zeros((n_out, n_in), dtype=np.float32)
    for i in range(n_out):
        p = 0.0 if n_out == 1 else i * (n_in - 1) / (n_out - 1)
        lo = int(math.floor(p))
        hi = min(lo + 1, n_in - 1)
        frac = p - lo
        R[i, lo] += 1.0 - frac
        R[i, hi] += frac
    return jnp.asarray(R)


def so3_quadrature_weights(b):
    """Driscoll-Healy quadrature weights over beta (length 2b), with the
    alpha/gamma uniform-grid measure (2*pi/(2b))^2 folded in."""
    w = np.zeros(2 * b, dtype=np.float64)
    for j in range(2 * b):
        s = sum(
            1.0 / (2 * k + 1) * math.sin((2 * j + 1) * (2 * k + 1) * math.pi / (4.0 * b))
            for k in range(b)
        )
        w[j] = (2.0 / b) * math.sin(math.pi * (2 * j + 1) / (4.0 * b)) * s
    w *= (2.0 * math.pi / (2 * b)) ** 2
    return jnp.asarray(w, dtype=jnp.float32)


def init_linear(key, fan_in, fan_out):
    k1, k2 = jax.random.split(key)
    bound = 1.0 / math.sqrt(fan_in)
    w = jax.random.uniform(k1, (fan_in, fan_out), jnp.float32, -bound, bound)
    b = jax.random.uniform(k2, (fan_out,), jnp.float32, -bound, bound)
    return w, b


def init_bn(c, eps=1e-5):
    """Eval-mode BatchNorm as per-channel scale/shift (running stats 0/1)."""
    gamma = jnp.ones((c,), jnp.float32)
    beta = jnp.zeros((c,), jnp.float32)
    run_mean = jnp.zeros((c,), jnp.float32)
    run_var = jnp.ones((c,), jnp.float32)
    scale = gamma / jnp.sqrt(run_var + eps)
    shift = beta - run_mean * scale
    return scale, shift


# ----------------------------------------------------------------------------
# Model: static config (Python ints) is kept OUT of the jitted params pytree.
# ----------------------------------------------------------------------------
def build_model(time_channel, key):
    c_in, spatial = time_channel
    bw = np.linspace(spatial / 2, 2, 7).astype(int)   # [8,7,6,5,4,3,2] for 16
    conv_dims = [(c_in, 20), (20, 40), (40, 60), (60, 120), (120, 200), (200, 256)]
    fc_dims = [(256, 256), (256, 190), (190, 128), (128, 64), (64, 12), (12, 1)]

    cfg = {
        "bw": tuple(int(v) for v in bw),
        # lane-pad Cout only where the relative cost is small (120->128, 200->256)
        "conv_cout_pad": (20, 40, 60, 128, 256, 256),
    }

    keys = jax.random.split(key, len(conv_dims) + len(fc_dims))
    convs, fcs = [], []
    for i, (ci, co) in enumerate(conv_dims):
        w, b = init_linear(keys[i], ci, co)
        scale, shift = init_bn(co)
        convs.append({"w": w, "b": b, "bn_scale": scale, "bn_shift": shift})
    for j, (ci, co) in enumerate(fc_dims):
        w, b = init_linear(keys[len(conv_dims) + j], ci, co)
        entry = {"w": w, "b": b}
        if j < 5:                                  # fc1..fc5 have BatchNorm1d + ReLU
            scale, shift = init_bn(co)
            entry["bn_scale"], entry["bn_shift"] = scale, shift
        fcs.append(entry)
    params = {"convs": convs, "fcs": fcs}
    return cfg, params


def s2convnet_forward(params, x_nchw, *, cfg):
    # NCHW -> channels-last (B, beta, alpha, C)
    x = jnp.transpose(x_nchw, (0, 2, 3, 1)).astype(jnp.float32)
    B = x.shape[0]
    bw = cfg["bw"]

    # conv1 (S2) .. conv6 (SO3): resample-then-matmul (commutes exactly),
    # BatchNorm folded into the matmul, ReLU fused in the kernel epilogue.
    for li, layer in enumerate(params["convs"]):
        n_in = x.shape[1]
        n_out = 2 * bw[li + 1]
        R = resample_matrix(n_in, n_out)             # small static constant
        x = jnp.einsum("ij,bjac->biac", R, x)        # beta resample (Cin channels)
        x = jnp.einsum("ij,bxjc->bxic", R, x)        # alpha resample
        w = layer["w"] * layer["bn_scale"][None, :]  # fold eval-mode BN
        b = layer["b"] * layer["bn_scale"] + layer["bn_shift"]
        Cin = x.shape[-1]
        if w.shape[0] < Cin:                         # previous layer was lane-padded
            w = jnp.pad(w, ((0, Cin - w.shape[0]), (0, 0)))
        cpad = cfg["conv_cout_pad"][li]
        if cpad > w.shape[1]:                        # lane-dense output stores
            w = jnp.pad(w, ((0, 0), (0, cpad - w.shape[1])))
            b = jnp.pad(b, (0, cpad - b.shape[0]))
        y = pallas_linear(x.reshape(-1, Cin), w, b, activation="relu")
        x = y.reshape(B, n_out, n_out, cpad)
        # dropout (sdo*) is identity in eval mode

    # so3_integrate + FC stack, fused in one Pallas kernel.
    n = x.shape[1]                                   # final grid = 2 * bw[-1]
    C = x.shape[-1]
    w_beta = so3_quadrature_weights(n // 2)          # includes (2*pi/n)^2 measure
    # TODO(synk): the gamma axis of the SO(3) lift is a pure broadcast in this
    # approximation (all gamma slices identical through the whole net), so it is
    # dropped and accounted for by the factor n below; not valid for a true
    # Wigner-transform SO(3) convolution.
    w_quad = jnp.repeat(w_beta * float(n), n)        # (n*n,) over (beta, alpha)

    fc_ws, fc_bs = [], []
    for j, f in enumerate(params["fcs"]):
        w, b = f["w"], f["b"]
        if j < 5:                                    # fold BN1d (eval) into fc
            w = w * f["bn_scale"][None, :]
            b = b * f["bn_scale"] + f["bn_shift"]
        fc_ws.append(w)
        fc_bs.append(b)
    return pallas_head(x.reshape(B, n * n, C), w_quad, fc_ws, fc_bs)   # (B, 1)


# ----------------------------------------------------------------------------
# Main
# ----------------------------------------------------------------------------
if __name__ == "__main__":
    time_channel = (4, 16)             # (n_features_in, spatial = 2*b_in)
    batch = 2

    key = jax.random.PRNGKey(0)
    k_x, k_p = jax.random.split(key)
    x = jax.random.normal(
        k_x, (batch, time_channel[0], time_channel[1], time_channel[1]),
        dtype=jnp.float32)
    cfg, params = build_model(time_channel, k_p)

    fwd = jax.jit(functools.partial(s2convnet_forward, cfg=cfg))
    out = jax.block_until_ready(fwd(params, x))
    assert out.shape == (batch, 1), out.shape
    assert bool(jnp.all(jnp.isfinite(out)))
    print("KERNEL_OK")
</pallas_src>

<mosaic_0001>
module attributes {stable_mosaic.version = 11 : i64} {
  func.func @_matmul_bias_act_kernel(%arg0: i32, %arg1: memref<400x4xbf16, #tpu.memory_space<vmem>>, %arg2: memref<4x20xbf16, #tpu.memory_space<vmem>>, %arg3: memref<1x20xf32, #tpu.memory_space<vmem>>, %arg4: memref<400x20xf32, #tpu.memory_space<vmem>>) attributes {dimension_semantics = [#tpu.dimension_semantics<parallel>], iteration_bounds = array<i64: 1>, scalar_prefetch = 0 : i64, scratch_operands = 0 : i64, tpu.core_type = #tpu.core_type<tc>, window_params = [{transform_indices = @transform_0, window_bounds = array<i64: 400, 4>}, {pipeline_mode = #tpu.pipeline_mode<synchronous>, transform_indices = @transform_1, window_bounds = array<i64: 4, 20>}, {pipeline_mode = #tpu.pipeline_mode<synchronous>, transform_indices = @transform_2, window_bounds = array<i64: 1, 20>}, {transform_indices = @transform_3, window_bounds = array<i64: 400, 20>}]} {
    %c0 = arith.constant 0 : index
    %c0_0 = arith.constant 0 : index
    %0 = vector.load %arg1[%c0, %c0_0] : memref<400x4xbf16, #tpu.memory_space<vmem>>, vector<400x4xbf16>
    %c0_1 = arith.constant 0 : index
    %c0_2 = arith.constant 0 : index
    %1 = vector.load %arg2[%c0_1, %c0_2] : memref<4x20xbf16, #tpu.memory_space<vmem>>, vector<4x20xbf16>
    %cst = arith.constant dense<0.000000e+00> : vector<400x20xf32>
    %2 = tpu.matmul %0, %1, %cst {dimension_numbers = #tpu.dot_dimension_numbers<[1], [0], [0], [1], [0, 0, 1, 1], [], []>} : vector<400x4xbf16>, vector<4x20xbf16>, vector<400x20xf32> -> vector<400x20xf32>
    %c0_3 = arith.constant 0 : index
    %c0_4 = arith.constant 0 : index
    %3 = vector.load %arg3[%c0_3, %c0_4] : memref<1x20xf32, #tpu.memory_space<vmem>>, vector<1x20xf32>
    %4 = vector.broadcast %3 : vector<1x20xf32> to vector<400x20xf32>
    %5 = arith.addf %2, %4 : vector<400x20xf32>
    %cst_5 = arith.constant 0.000000e+00 : f32
    %6 = vector.broadcast %cst_5 : f32 to vector<400x20xf32>
    %7 = arith.maximumf %5, %6 : vector<400x20xf32>
    %c0_6 = arith.constant 0 : index
    %c0_7 = arith.constant 0 : index
    %8 = vector.load %arg4[%c0_6, %c0_7] : memref<400x20xf32, #tpu.memory_space<vmem>>, vector<400x20xf32>
    tpu.vector_store %arg4[%c0_6, %c0_7], %7 {strides = array<i32>} : memref<400x20xf32, #tpu.memory_space<vmem>>, vector<400x20xf32>,
    return
  }
  func.func @transform_0(%arg0: i32) -> (i32, i32) {
    %c0_i32 = arith.constant 0 : i32
    %c0_i32_0 = arith.constant 0 : i32
    return %arg0, %c0_i32 : i32, i32
  }
  func.func @transform_1(%arg0: i32) -> (i32, i32) {
    %c0_i32 = arith.constant 0 : i32
    %c0_i32_0 = arith.constant 0 : i32
    %c0_i32_1 = arith.constant 0 : i32
    return %c0_i32, %c0_i32_0 : i32, i32
  }
  func.func @transform_2(%arg0: i32) -> (i32, i32) {
    %c0_i32 = arith.constant 0 : i32
    %c0_i32_0 = arith.constant 0 : i32
    %c0_i32_1 = arith.constant 0 : i32
    return %c0_i32, %c0_i32_0 : i32, i32
  }
  func.func @transform_3(%arg0: i32) -> (i32, i32) {
    %c0_i32 = arith.constant 0 : i32
    %c0_i32_0 = arith.constant 0 : i32
    return %arg0, %c0_i32 : i32, i32
  }
}

module attributes {stable_mosaic.version = 11 : i64} {
  func.func @_matmul_bias_act_kernel(%arg0: i32, %arg1: memref<288x20xbf16, #tpu.memory_space<vmem>>, %arg2: memref<20x40xbf16, #tpu.memory_space<vmem>>, %arg3: memref<1x40xf32, #tpu.memory_space<vmem>>, %arg4: memref<288x40xf32, #tpu.memory_space<vmem>>) attributes {dimension_semantics = [#tpu.dimension_semantics<parallel>], iteration_bounds = array<i64: 1>, scalar_prefetch = 0 : i64, scratch_operands = 0 : i64, tpu.core_type = #tpu.core_type<tc>, window_params = [{transform_indices = @transform_0, window_bounds = array<i64: 288, 20>}, {pipeline_mode = #tpu.pipeline_mode<synchronous>, transform_indices = @transform_1, window_bounds = array<i64: 20, 40>}, {pipeline_mode = #tpu.pipeline_mode<synchronous>, transform_indices = @transform_2, window_bounds = array<i64: 1, 40>}, {transform_indices = @transform_3, window_bounds = array<i64: 288, 40>}]} {
    %c0 = arith.constant 0 : index
    %c0_0 = arith.constant 0 : index
    %0 = vector.load %arg1[%c0, %c0_0] : memref<288x20xbf16, #tpu.memory_space<vmem>>, vector<288x20xbf16>
    %c0_1 = arith.constant 0 : index
    %c0_2 = arith.constant 0 : index
    %1 = vector.load %arg2[%c0_1, %c0_2] : memref<20x40xbf16, #tpu.memory_space<vmem>>, vector<20x40xbf16>
    %cst = arith.constant dense<0.000000e+00> : vector<288x40xf32>
    %2 = tpu.matmul %0, %1, %cst {dimension_numbers = #tpu.dot_dimension_numbers<[1], [0], [0], [1], [0, 0, 1, 1], [], []>} : vector<288x20xbf16>, vector<20x40xbf16>, vector<288x40xf32> -> vector<288x40xf32>
    %c0_3 = arith.constant 0 : index
    %c0_4 = arith.constant 0 : index
    %3 = vector.load %arg3[%c0_3, %c0_4] : memref<1x40xf32, #tpu.memory_space<vmem>>, vector<1x40xf32>
    %4 = vector.broadcast %3 : vector<1x40xf32> to vector<288x40xf32>
    %5 = arith.addf %2, %4 : vector<288x40xf32>
    %cst_5 = arith.constant 0.000000e+00 : f32
    %6 = vector.broadcast %cst_5 : f32 to vector<288x40xf32>
    %7 = arith.maximumf %5, %6 : vector<288x40xf32>
    %c0_6 = arith.constant 0 : index
    %c0_7 = arith.constant 0 : index
    %8 = vector.load %arg4[%c0_6, %c0_7] : memref<288x40xf32, #tpu.memory_space<vmem>>, vector<288x40xf32>
    tpu.vector_store %arg4[%c0_6, %c0_7], %7 {strides = array<i32>} : memref<288x40xf32, #tpu.memory_space<vmem>>, vector<288x40xf32>,
    return
  }
  func.func @transform_0(%arg0: i32) -> (i32, i32) {
    %c0_i32 = arith.constant 0 : i32
    %c0_i32_0 = arith.constant 0 : i32
    return %arg0, %c0_i32 : i32, i32
  }
  func.func @transform_1(%arg0: i32) -> (i32, i32) {
    %c0_i32 = arith.constant 0 : i32
    %c0_i32_0 = arith.constant 0 : i32
    %c0_i32_1 = arith.constant 0 : i32
    return %c0_i32, %c0_i32_0 : i32, i32
  }
  func.func @transform_2(%arg0: i32) -> (i32, i32) {
    %c0_i32 = arith.constant 0 : i32
    %c0_i32_0 = arith.constant 0 : i32
    %c0_i32_1 = arith.constant 0 : i32
    return %c0_i32, %c0_i32_0 : i32, i32
  }
  func.func @transform_3(%arg0: i32) -> (i32, i32) {
    %c0_i32 = arith.constant 0 : i32
    %c0_i32_0 = arith.constant 0 : i32
    return %arg0, %c0_i32 : i32, i32
  }
}

module attributes {stable_mosaic.version = 11 : i64} {
  func.func @_matmul_bias_act_kernel(%arg0: i32, %arg1: memref<208x40xbf16, #tpu.memory_space<vmem>>, %arg2: memref<40x60xbf16, #tpu.memory_space<vmem>>, %arg3: memref<1x60xf32, #tpu.memory_space<vmem>>, %arg4: memref<208x60xf32, #tpu.memory_space<vmem>>) attributes {dimension_semantics = [#tpu.dimension_semantics<parallel>], iteration_bounds = array<i64: 1>, scalar_prefetch = 0 : i64, scratch_operands = 0 : i64, tpu.core_type = #tpu.core_type<tc>, window_params = [{transform_indices = @transform_0, window_bounds = array<i64: 208, 40>}, {pipeline_mode = #tpu.pipeline_mode<synchronous>, transform_indices = @transform_1, window_bounds = array<i64: 40, 60>}, {pipeline_mode = #tpu.pipeline_mode<synchronous>, transform_indices = @transform_2, window_bounds = array<i64: 1, 60>}, {transform_indices = @transform_3, window_bounds = array<i64: 208, 60>}]} {
    %c0 = arith.constant 0 : index
    %c0_0 = arith.constant 0 : index
    %0 = vector.load %arg1[%c0, %c0_0] : memref<208x40xbf16, #tpu.memory_space<vmem>>, vector<208x40xbf16>
    %c0_1 = arith.constant 0 : index
    %c0_2 = arith.constant 0 : index
    %1 = vector.load %arg2[%c0_1, %c0_2] : memref<40x60xbf16, #tpu.memory_space<vmem>>, vector<40x60xbf16>
    %cst = arith.constant dense<0.000000e+00> : vector<208x60xf32>
    %2 = tpu.matmul %0, %1, %cst {dimension_numbers = #tpu.dot_dimension_numbers<[1], [0], [0], [1], [0, 0, 1, 1], [], []>} : vector<208x40xbf16>, vector<40x60xbf16>, vector<208x60xf32> -> vector<208x60xf32>
    %c0_3 = arith.constant 0 : index
    %c0_4 = arith.constant 0 : index
    %3 = vector.load %arg3[%c0_3, %c0_4] : memref<1x60xf32, #tpu.memory_space<vmem>>, vector<1x60xf32>
    %4 = vector.broadcast %3 : vector<1x60xf32> to vector<208x60xf32>
    %5 = arith.addf %2, %4 : vector<208x60xf32>
    %cst_5 = arith.constant 0.000000e+00 : f32
    %6 = vector.broadcast %cst_5 : f32 to vector<208x60xf32>
    %7 = arith.maximumf %5, %6 : vector<208x60xf32>
    %c0_6 = arith.constant 0 : index
    %c0_7 = arith.constant 0 : index
    %8 = vector.load %arg4[%c0_6, %c0_7] : memref<208x60xf32, #tpu.memory_space<vmem>>, vector<208x60xf32>
    tpu.vector_store %arg4[%c0_6, %c0_7], %7 {strides = array<i32>} : memref<208x60xf32, #tpu.memory_space<vmem>>, vector<208x60xf32>,
    return
  }
  func.func @transform_0(%arg0: i32) -> (i32, i32) {
    %c0_i32 = arith.constant 0 : i32
    %c0_i32_0 = arith.constant 0 : i32
    return %arg0, %c0_i32 : i32, i32
  }
  func.func @transform_1(%arg0: i32) -> (i32, i32) {
    %c0_i32 = arith.constant 0 : i32
    %c0_i32_0 = arith.constant 0 : i32
    %c0_i32_1 = arith.constant 0 : i32
    return %c0_i32, %c0_i32_0 : i32, i32
  }
  func.func @transform_2(%arg0: i32) -> (i32, i32) {
    %c0_i32 = arith.constant 0 : i32
    %c0_i32_0 = arith.constant 0 : i32
    %c0_i32_1 = arith.constant 0 : i32
    return %c0_i32, %c0_i32_0 : i32, i32
  }
  func.func @transform_3(%arg0: i32) -> (i32, i32) {
    %c0_i32 = arith.constant 0 : i32
    %c0_i32_0 = arith.constant 0 : i32
    return %arg0, %c0_i32 : i32, i32
  }
}

module attributes {stable_mosaic.version = 11 : i64} {
  func.func @_matmul_bias_act_kernel(%arg0: i32, %arg1: memref<128x60xbf16, #tpu.memory_space<vmem>>, %arg2: memref<60x128xbf16, #tpu.memory_space<vmem>>, %arg3: memref<1x128xf32, #tpu.memory_space<vmem>>, %arg4: memref<128x128xf32, #tpu.memory_space<vmem>>) attributes {dimension_semantics = [#tpu.dimension_semantics<parallel>], iteration_bounds = array<i64: 1>, scalar_prefetch = 0 : i64, scratch_operands = 0 : i64, tpu.core_type = #tpu.core_type<tc>, window_params = [{transform_indices = @transform_0, window_bounds = array<i64: 128, 60>}, {pipeline_mode = #tpu.pipeline_mode<synchronous>, transform_indices = @transform_1, window_bounds = array<i64: 60, 128>}, {pipeline_mode = #tpu.pipeline_mode<synchronous>, transform_indices = @transform_2, window_bounds = array<i64: 1, 128>}, {transform_indices = @transform_3, window_bounds = array<i64: 128, 128>}]} {
    %c0 = arith.constant 0 : index
    %c0_0 = arith.constant 0 : index
    %0 = vector.load %arg1[%c0, %c0_0] : memref<128x60xbf16, #tpu.memory_space<vmem>>, vector<128x60xbf16>
    %c0_1 = arith.constant 0 : index
    %c0_2 = arith.constant 0 : index
    %1 = vector.load %arg2[%c0_1, %c0_2] : memref<60x128xbf16, #tpu.memory_space<vmem>>, vector<60x128xbf16>
    %cst = arith.constant dense<0.000000e+00> : vector<128x128xf32>
    %2 = tpu.matmul %0, %1, %cst {dimension_numbers = #tpu.dot_dimension_numbers<[1], [0], [0], [1], [0, 0, 1, 1], [], []>} : vector<128x60xbf16>, vector<60x128xbf16>, vector<128x128xf32> -> vector<128x128xf32>
    %c0_3 = arith.constant 0 : index
    %c0_4 = arith.constant 0 : index
    %3 = vector.load %arg3[%c0_3, %c0_4] : memref<1x128xf32, #tpu.memory_space<vmem>>, vector<1x128xf32>
    %4 = vector.broadcast %3 : vector<1x128xf32> to vector<128x128xf32>
    %5 = arith.addf %2, %4 : vector<128x128xf32>
    %cst_5 = arith.constant 0.000000e+00 : f32
    %6 = vector.broadcast %cst_5 : f32 to vector<128x128xf32>
    %7 = arith.maximumf %5, %6 : vector<128x128xf32>
    %c0_6 = arith.constant 0 : index
    %c0_7 = arith.constant 0 : index
    %8 = vector.load %arg4[%c0_6, %c0_7] : memref<128x128xf32, #tpu.memory_space<vmem>>, vector<128x128xf32>
    tpu.vector_store %arg4[%c0_6, %c0_7], %7 {strides = array<i32>} : memref<128x128xf32, #tpu.memory_space<vmem>>, vector<128x128xf32>,
    return
  }
  func.func @transform_0(%arg0: i32) -> (i32, i32) {
    %c0_i32 = arith.constant 0 : i32
    %c0_i32_0 = arith.constant 0 : i32
    return %arg0, %c0_i32 : i32, i32
  }
  func.func @transform_1(%arg0: i32) -> (i32, i32) {
    %c0_i32 = arith.constant 0 : i32
    %c0_i32_0 = arith.constant 0 : i32
    %c0_i32_1 = arith.constant 0 : i32
    return %c0_i32, %c0_i32_0 : i32, i32
  }
  func.func @transform_2(%arg0: i32) -> (i32, i32) {
    %c0_i32 = arith.constant 0 : i32
    %c0_i32_0 = arith.constant 0 : i32
    %c0_i32_1 = arith.constant 0 : i32
    return %c0_i32, %c0_i32_0 : i32, i32
  }
  func.func @transform_3(%arg0: i32) -> (i32, i32) {
    %c0_i32 = arith.constant 0 : i32
    %c0_i32_0 = arith.constant 0 : i32
    return %arg0, %c0_i32 : i32, i32
  }
}

module attributes {stable_mosaic.version = 11 : i64} {
  func.func @_matmul_bias_act_kernel(%arg0: i32, %arg1: memref<80x128xbf16, #tpu.memory_space<vmem>>, %arg2: memref<128x256xbf16, #tpu.memory_space<vmem>>, %arg3: memref<1x256xf32, #tpu.memory_space<vmem>>, %arg4: memref<80x256xf32, #tpu.memory_space<vmem>>) attributes {dimension_semantics = [#tpu.dimension_semantics<parallel>], iteration_bounds = array<i64: 1>, scalar_prefetch = 0 : i64, scratch_operands = 0 : i64, tpu.core_type = #tpu.core_type<tc>, window_params = [{transform_indices = @transform_0, window_bounds = array<i64: 80, 128>}, {pipeline_mode = #tpu.pipeline_mode<synchronous>, transform_indices = @transform_1, window_bounds = array<i64: 128, 256>}, {pipeline_mode = #tpu.pipeline_mode<synchronous>, transform_indices = @transform_2, window_bounds = array<i64: 1, 256>}, {transform_indices = @transform_3, window_bounds = array<i64: 80, 256>}]} {
    %c0 = arith.constant 0 : index
    %c0_0 = arith.constant 0 : index
    %0 = vector.load %arg1[%c0, %c0_0] : memref<80x128xbf16, #tpu.memory_space<vmem>>, vector<80x128xbf16>
    %c0_1 = arith.constant 0 : index
    %c0_2 = arith.constant 0 : index
    %1 = vector.load %arg2[%c0_1, %c0_2] : memref<128x256xbf16, #tpu.memory_space<vmem>>, vector<128x256xbf16>
    %cst = arith.constant dense<0.000000e+00> : vector<80x256xf32>
    %2 = tpu.matmul %0, %1, %cst {dimension_numbers = #tpu.dot_dimension_numbers<[1], [0], [0], [1], [0, 0, 1, 1], [], []>} : vector<80x128xbf16>, vector<128x256xbf16>, vector<80x256xf32> -> vector<80x256xf32>
    %c0_3 = arith.constant 0 : index
    %c0_4 = arith.constant 0 : index
    %3 = vector.load %arg3[%c0_3, %c0_4] : memref<1x256xf32, #tpu.memory_space<vmem>>, vector<1x256xf32>
    %4 = vector.broadcast %3 : vector<1x256xf32> to vector<80x256xf32>
    %5 = arith.addf %2, %4 : vector<80x256xf32>
    %cst_5 = arith.constant 0.000000e+00 : f32
    %6 = vector.broadcast %cst_5 : f32 to vector<80x256xf32>
    %7 = arith.maximumf %5, %6 : vector<80x256xf32>
    %c0_6 = arith.constant 0 : index
    %c0_7 = arith.constant 0 : index
    %8 = vector.load %arg4[%c0_6, %c0_7] : memref<80x256xf32, #tpu.memory_space<vmem>>, vector<80x256xf32>
    tpu.vector_store %arg4[%c0_6, %c0_7], %7 {strides = array<i32>} : memref<80x256xf32, #tpu.memory_space<vmem>>, vector<80x256xf32>,
    return
  }
  func.func @transform_0(%arg0: i32) -> (i32, i32) {
    %c0_i32 = arith.constant 0 : i32
    %c0_i32_0 = arith.constant 0 : i32
    return %arg0, %c0_i32 : i32, i32
  }
  func.func @transform_1(%arg0: i32) -> (i32, i32) {
    %c0_i32 = arith.constant 0 : i32
    %c0_i32_0 = arith.constant 0 : i32
    %c0_i32_1 = arith.constant 0 : i32
    return %c0_i32, %c0_i32_0 : i32, i32
  }
  func.func @transform_2(%arg0: i32) -> (i32, i32) {
    %c0_i32 = arith.constant 0 : i32
    %c0_i32_0 = arith.constant 0 : i32
    %c0_i32_1 = arith.constant 0 : i32
    return %c0_i32, %c0_i32_0 : i32, i32
  }
  func.func @transform_3(%arg0: i32) -> (i32, i32) {
    %c0_i32 = arith.constant 0 : i32
    %c0_i32_0 = arith.constant 0 : i32
    return %arg0, %c0_i32 : i32, i32
  }
}

module attributes {stable_mosaic.version = 11 : i64} {
  func.func @_matmul_bias_act_kernel(%arg0: i32, %arg1: memref<32x256xbf16, #tpu.memory_space<vmem>>, %arg2: memref<256x256xbf16, #tpu.memory_space<vmem>>, %arg3: memref<1x256xf32, #tpu.memory_space<vmem>>, %arg4: memref<32x256xf32, #tpu.memory_space<vmem>>) attributes {dimension_semantics = [#tpu.dimension_semantics<parallel>], iteration_bounds = array<i64: 1>, scalar_prefetch = 0 : i64, scratch_operands = 0 : i64, tpu.core_type = #tpu.core_type<tc>, window_params = [{transform_indices = @transform_0, window_bounds = array<i64: 32, 256>}, {pipeline_mode = #tpu.pipeline_mode<synchronous>, transform_indices = @transform_1, window_bounds = array<i64: 256, 256>}, {pipeline_mode = #tpu.pipeline_mode<synchronous>, transform_indices = @transform_2, window_bounds = array<i64: 1, 256>}, {transform_indices = @transform_3, window_bounds = array<i64: 32, 256>}]} {
    %c0 = arith.constant 0 : index
    %c0_0 = arith.constant 0 : index
    %0 = vector.load %arg1[%c0, %c0_0] : memref<32x256xbf16, #tpu.memory_space<vmem>>, vector<32x256xbf16>
    %c0_1 = arith.constant 0 : index
    %c0_2 = arith.constant 0 : index
    %1 = vector.load %arg2[%c0_1, %c0_2] : memref<256x256xbf16, #tpu.memory_space<vmem>>, vector<256x256xbf16>
    %cst = arith.constant dense<0.000000e+00> : vector<32x256xf32>
    %2 = tpu.matmul %0, %1, %cst {dimension_numbers = #tpu.dot_dimension_numbers<[1], [0], [0], [1], [0, 0, 1, 1], [], []>} : vector<32x256xbf16>, vector<256x256xbf16>, vector<32x256xf32> -> vector<32x256xf32>
    %c0_3 = arith.constant 0 : index
    %c0_4 = arith.constant 0 : index
    %3 = vector.load %arg3[%c0_3, %c0_4] : memref<1x256xf32, #tpu.memory_space<vmem>>, vector<1x256xf32>
    %4 = vector.broadcast %3 : vector<1x256xf32> to vector<32x256xf32>
    %5 = arith.addf %2, %4 : vector<32x256xf32>
    %cst_5 = arith.constant 0.000000e+00 : f32
    %6 = vector.broadcast %cst_5 : f32 to vector<32x256xf32>
    %7 = arith.maximumf %5, %6 : vector<32x256xf32>
    %c0_6 = arith.constant 0 : index
    %c0_7 = arith.constant 0 : index
    %8 = vector.load %arg4[%c0_6, %c0_7] : memref<32x256xf32, #tpu.memory_space<vmem>>, vector<32x256xf32>
    tpu.vector_store %arg4[%c0_6, %c0_7], %7 {strides = array<i32>} : memref<32x256xf32, #tpu.memory_space<vmem>>, vector<32x256xf32>,
    return
  }
  func.func @transform_0(%arg0: i32) -> (i32, i32) {
    %c0_i32 = arith.constant 0 : i32
    %c0_i32_0 = arith.constant 0 : i32
    return %arg0, %c0_i32 : i32, i32
  }
  func.func @transform_1(%arg0: i32) -> (i32, i32) {
    %c0_i32 = arith.constant 0 : i32
    %c0_i32_0 = arith.constant 0 : i32
    %c0_i32_1 = arith.constant 0 : i32
    return %c0_i32, %c0_i32_0 : i32, i32
  }
  func.func @transform_2(%arg0: i32) -> (i32, i32) {
    %c0_i32 = arith.constant 0 : i32
    %c0_i32_0 = arith.constant 0 : i32
    %c0_i32_1 = arith.constant 0 : i32
    return %c0_i32, %c0_i32_0 : i32, i32
  }
  func.func @transform_3(%arg0: i32) -> (i32, i32) {
    %c0_i32 = arith.constant 0 : i32
    %c0_i32_0 = arith.constant 0 : i32
    return %arg0, %c0_i32 : i32, i32
  }
}

module attributes {stable_mosaic.version = 11 : i64} {
  func.func @_head_kernel(%arg0: i32, %arg1: memref<2x16x256xf32, #tpu.memory_space<vmem>>, %arg2: memref<16x1xf32, #tpu.memory_space<vmem>>, %arg3: memref<256x256xf32, #tpu.memory_space<vmem>>, %arg4: memref<1x256xf32, #tpu.memory_space<vmem>>, %arg5: memref<256x190xf32, #tpu.memory_space<vmem>>, %arg6: memref<1x190xf32, #tpu.memory_space<vmem>>, %arg7: memref<190x128xf32, #tpu.memory_space<vmem>>, %arg8: memref<1x128xf32, #tpu.memory_space<vmem>>, %arg9: memref<128x64xf32, #tpu.memory_space<vmem>>, %arg10: memref<1x64xf32, #tpu.memory_space<vmem>>, %arg11: memref<64x12xf32, #tpu.memory_space<vmem>>, %arg12: memref<1x12xf32, #tpu.memory_space<vmem>>, %arg13: memref<1x12xf32, #tpu.memory_space<vmem>>, %arg14: memref<1x1xf32, #tpu.memory_space<vmem>>, %arg15: memref<2x1xf32, #tpu.memory_space<vmem>>) attributes {dimension_semantics = [#tpu.dimension_semantics<arbitrary>], iteration_bounds = array<i64: 1>, scalar_prefetch = 0 : i64, scratch_operands = 0 : i64, tpu.core_type = #tpu.core_type<tc>, window_params = [{pipeline_mode = #tpu.pipeline_mode<synchronous>, transform_indices = @transform_0, window_bounds = array<i64: 2, 16, 256>}, {pipeline_mode = #tpu.pipeline_mode<synchronous>, transform_indices = @transform_1, window_bounds = array<i64: 16, 1>}, {pipeline_mode = #tpu.pipeline_mode<synchronous>, transform_indices = @transform_2, window_bounds = array<i64: 256, 256>}, {pipeline_mode = #tpu.pipeline_mode<synchronous>, transform_indices = @transform_3, window_bounds = array<i64: 1, 256>}, {pipeline_mode = #tpu.pipeline_mode<synchronous>, transform_indices = @transform_4, window_bounds = array<i64: 256, 190>}, {pipeline_mode = #tpu.pipeline_mode<synchronous>, transform_indices = @transform_5, window_bounds = array<i64: 1, 190>}, {pipeline_mode = #tpu.pipeline_mode<synchronous>, transform_indices = @transform_6, window_bounds = array<i64: 190, 128>}, {pipeline_mode = #tpu.pipeline_mode<synchronous>, transform_indices = @transform_7, window_bounds = array<i64: 1, 128>}, {pipeline_mode = #tpu.pipeline_mode<synchronous>, transform_indices = @transform_8, window_bounds = array<i64: 128, 64>}, {pipeline_mode = #tpu.pipeline_mode<synchronous>, transform_indices = @transform_9, window_bounds = array<i64: 1, 64>}, {pipeline_mode = #tpu.pipeline_mode<synchronous>, transform_indices = @transform_10, window_bounds = array<i64: 64, 12>}, {pipeline_mode = #tpu.pipeline_mode<synchronous>, transform_indices = @transform_11, window_bounds = array<i64: 1, 12>}, {pipeline_mode = #tpu.pipeline_mode<synchronous>, transform_indices = @transform_12, window_bounds = array<i64: 1, 12>}, {pipeline_mode = #tpu.pipeline_mode<synchronous>, transform_indices = @transform_13, window_bounds = array<i64: 1, 1>}, {pipeline_mode = #tpu.pipeline_mode<synchronous>, transform_indices = @transform_14, window_bounds = array<i64: 2, 1>}]} {
    %c0 = arith.constant 0 : index
    %c0_0 = arith.constant 0 : index
    %c0_1 = arith.constant 0 : index
    %0 = vector.load %arg1[%c0, %c0_0, %c0_1] : memref<2x16x256xf32, #tpu.memory_space<vmem>>, vector<2x16x256xf32>
    %c0_2 = arith.constant 0 : index
    %c0_3 = arith.constant 0 : index
    %1 = vector.load %arg2[%c0_2, %c0_3] : memref<16x1xf32, #tpu.memory_space<vmem>>, vector<16x1xf32>
    %2 = vector.shape_cast %1 : vector<16x1xf32> to vector<1x16x1xf32>
    %3 = vector.broadcast %2 : vector<1x16x1xf32> to vector<2x16x256xf32>
    %4 = arith.mulf %0, %3 : vector<2x16x256xf32>
    %cst = arith.constant dense<0.000000e+00> : vector<2x256xf32>
    %5 = vector.multi_reduction <add>, %4, %cst [1] : vector<2x16x256xf32> to vector<2x256xf32>
    %c0_4 = arith.constant 0 : index
    %c0_5 = arith.constant 0 : index
    %6 = vector.load %arg3[%c0_4, %c0_5] : memref<256x256xf32, #tpu.memory_space<vmem>>, vector<256x256xf32>
    %cst_6 = arith.constant dense<0.000000e+00> : vector<2x256xf32>
    %7 = tpu.matmul %5, %6, %cst_6 {dimension_numbers = #tpu.dot_dimension_numbers<[1], [0], [0], [1], [0, 0, 1, 1], [], []>} : vector<2x256xf32>, vector<256x256xf32>, vector<2x256xf32> -> vector<2x256xf32>
    %c0_7 = arith.constant 0 : index
    %c0_8 = arith.constant 0 : index
    %8 = vector.load %arg4[%c0_7, %c0_8] : memref<1x256xf32, #tpu.memory_space<vmem>>, vector<1x256xf32>
    %9 = vector.broadcast %8 : vector<1x256xf32> to vector<2x256xf32>
    %10 = arith.addf %7, %9 : vector<2x256xf32>
    %cst_9 = arith.constant 0.000000e+00 : f32
    %11 = vector.broadcast %cst_9 : f32 to vector<2x256xf32>
    %12 = arith.maximumf %10, %11 : vector<2x256xf32>
    %c0_10 = arith.constant 0 : index
    %c0_11 = arith.constant 0 : index
    %13 = vector.load %arg5[%c0_10, %c0_11] : memref<256x190xf32, #tpu.memory_space<vmem>>, vector<256x190xf32>
    %cst_12 = arith.constant dense<0.000000e+00> : vector<2x190xf32>
    %14 = tpu.matmul %12, %13, %cst_12 {dimension_numbers = #tpu.dot_dimension_numbers<[1], [0], [0], [1], [0, 0, 1, 1], [], []>} : vector<2x256xf32>, vector<256x190xf32>, vector<2x190xf32> -> vector<2x190xf32>
    %c0_13 = arith.constant 0 : index
    %c0_14 = arith.constant 0 : index
    %15 = vector.load %arg6[%c0_13, %c0_14] : memref<1x190xf32, #tpu.memory_space<vmem>>, vector<1x190xf32>
    %16 = vector.broadcast %15 : vector<1x190xf32> to vector<2x190xf32>
    %17 = arith.addf %14, %16 : vector<2x190xf32>
    %cst_15 = arith.constant 0.000000e+00 : f32
    %18 = vector.broadcast %cst_15 : f32 to vector<2x190xf32>
    %19 = arith.maximumf %17, %18 : vector<2x190xf32>
    %c0_16 = arith.constant 0 : index
    %c0_17 = arith.constant 0 : index
    %20 = vector.load %arg7[%c0_16, %c0_17] : memref<190x128xf32, #tpu.memory_space<vmem>>, vector<190x128xf32>
    %cst_18 = arith.constant dense<0.000000e+00> : vector<2x128xf32>
    %21 = tpu.matmul %19, %20, %cst_18 {dimension_numbers = #tpu.dot_dimension_numbers<[1], [0], [0], [1], [0, 0, 1, 1], [], []>} : vector<2x190xf32>, vector<190x128xf32>, vector<2x128xf32> -> vector<2x128xf32>
    %c0_19 = arith.constant 0 : index
    %c0_20 = arith.constant 0 : index
    %22 = vector.load %arg8[%c0_19, %c0_20] : memref<1x128xf32, #tpu.memory_space<vmem>>, vector<1x128xf32>
    %23 = vector.broadcast %22 : vector<1x128xf32> to vector<2x128xf32>
    %24 = arith.addf %21, %23 : vector<2x128xf32>
    %cst_21 = arith.constant 0.000000e+00 : f32
    %25 = vector.broadcast %cst_21 : f32 to vector<2x128xf32>
    %26 = arith.maximumf %24, %25 : vector<2x128xf32>
    %c0_22 = arith.constant 0 : index
    %c0_23 = arith.constant 0 : index
    %27 = vector.load %arg9[%c0_22, %c0_23] : memref<128x64xf32, #tpu.memory_space<vmem>>, vector<128x64xf32>
    %cst_24 = arith.constant dense<0.000000e+00> : vector<2x64xf32>
    %28 = tpu.matmul %26, %27, %cst_24 {dimension_numbers = #tpu.dot_dimension_numbers<[1], [0], [0], [1], [0, 0, 1, 1], [], []>} : vector<2x128xf32>, vector<128x64xf32>, vector<2x64xf32> -> vector<2x64xf32>
    %c0_25 = arith.constant 0 : index
    %c0_26 = arith.constant 0 : index
    %29 = vector.load %arg10[%c0_25, %c0_26] : memref<1x64xf32, #tpu.memory_space<vmem>>, vector<1x64xf32>
    %30 = vector.broadcast %29 : vector<1x64xf32> to vector<2x64xf32>
    %31 = arith.addf %28, %30 : vector<2x64xf32>
    %cst_27 = arith.constant 0.000000e+00 : f32
    %32 = vector.broadcast %cst_27 : f32 to vector<2x64xf32>
    %33 = arith.maximumf %31, %32 : vector<2x64xf32>
    %c0_28 = arith.constant 0 : index
    %c0_29 = arith.constant 0 : index
    %34 = vector.load %arg11[%c0_28, %c0_29] : memref<64x12xf32, #tpu.memory_space<vmem>>, vector<64x12xf32>
    %cst_30 = arith.constant dense<0.000000e+00> : vector<2x12xf32>
    %35 = tpu.matmul %33, %34, %cst_30 {dimension_numbers = #tpu.dot_dimension_numbers<[1], [0], [0], [1], [0, 0, 1, 1], [], []>} : vector<2x64xf32>, vector<64x12xf32>, vector<2x12xf32> -> vector<2x12xf32>
    %c0_31 = arith.constant 0 : index
    %c0_32 = arith.constant 0 : index
    %36 = vector.load %arg12[%c0_31, %c0_32] : memref<1x12xf32, #tpu.memory_space<vmem>>, vector<1x12xf32>
    %37 = vector.broadcast %36 : vector<1x12xf32> to vector<2x12xf32>
    %38 = arith.addf %35, %37 : vector<2x12xf32>
    %cst_33 = arith.constant 0.000000e+00 : f32
    %39 = vector.broadcast %cst_33 : f32 to vector<2x12xf32>
    %40 = arith.maximumf %38, %39 : vector<2x12xf32>
    %c0_34 = arith.constant 0 : index
    %c0_35 = arith.constant 0 : index
    %41 = vector.load %arg13[%c0_34, %c0_35] : memref<1x12xf32, #tpu.memory_space<vmem>>, vector<1x12xf32>
    %42 = vector.broadcast %41 : vector<1x12xf32> to vector<2x12xf32>
    %43 = arith.mulf %40, %42 : vector<2x12xf32>
    %cst_36 = arith.constant dense<0.000000e+00> : vector<2xf32>
    %44 = vector.multi_reduction <add>, %43, %cst_36 [1] : vector<2x12xf32> to vector<2xf32>
    %45 = vector.shape_cast %44 : vector<2xf32> to vector<2x1xf32>
    %c0_37 = arith.constant 0 : index
    %c0_38 = arith.constant 0 : index
    %46 = vector.load %arg14[%c0_37, %c0_38] : memref<1x1xf32, #tpu.memory_space<vmem>>, vector<1x1xf32>
    %47 = vector.broadcast %46 : vector<1x1xf32> to vector<2x1xf32>
    %48 = arith.addf %45, %47 : vector<2x1xf32>
    %49 = arith.negf %48 : vector<2x1xf32>
    %50 = math.exp %49 : vector<2x1xf32>
    %cst_39 = arith.constant 1.000000e+00 : f32
    %51 = vector.broadcast %cst_39 : f32 to vector<2x1xf32>
    %52 = arith.addf %51, %50 : vector<2x1xf32>
    %53 = arith.divf %51, %52 : vector<2x1xf32>
    %c0_40 = arith.constant 0 : index
    %c0_41 = arith.constant 0 : index
    %54 = vector.load %arg15[%c0_40, %c0_41] : memref<2x1xf32, #tpu.memory_space<vmem>>, vector<2x1xf32>
    tpu.vector_store %arg15[%c0_40, %c0_41], %53 {strides = array<i32>} : memref<2x1xf32, #tpu.memory_space<vmem>>, vector<2x1xf32>,
    return
  }
  func.func @transform_0(%arg0: i32) -> (i32, i32, i32) {
    %c0_i32 = arith.constant 0 : i32
    %c0_i32_0 = arith.constant 0 : i32
    %c0_i32_1 = arith.constant 0 : i32
    %c0_i32_2 = arith.constant 0 : i32
    return %c0_i32, %c0_i32_0, %c0_i32_1 : i32, i32, i32
  }
  func.func @transform_1(%arg0: i32) -> (i32, i32) {
    %c0_i32 = arith.constant 0 : i32
    %c0_i32_0 = arith.constant 0 : i32
    %c0_i32_1 = arith.constant 0 : i32
    return %c0_i32, %c0_i32_0 : i32, i32
  }
  func.func @transform_2(%arg0: i32) -> (i32, i32) {
    %c0_i32 = arith.constant 0 : i32
    %c0_i32_0 = arith.constant 0 : i32
    %c0_i32_1 = arith.constant 0 : i32
    return %c0_i32, %c0_i32_0 : i32, i32
  }
  func.func @transform_3(%arg0: i32) -> (i32, i32) {
    %c0_i32 = arith.constant 0 : i32
    %c0_i32_0 = arith.constant 0 : i32
    %c0_i32_1 = arith.constant 0 : i32
    return %c0_i32, %c0_i32_0 : i32, i32
  }
  func.func @transform_4(%arg0: i32) -> (i32, i32) {
    %c0_i32 = arith.constant 0 : i32
    %c0_i32_0 = arith.constant 0 : i32
    %c0_i32_1 = arith.constant 0 : i32
    return %c0_i32, %c0_i32_0 : i32, i32
  }
  func.func @transform_5(%arg0: i32) -> (i32, i32) {
    %c0_i32 = arith.constant 0 : i32
    %c0_i32_0 = arith.constant 0 : i32
    %c0_i32_1 = arith.constant 0 : i32
    return %c0_i32, %c0_i32_0 : i32, i32
  }
  func.func @transform_6(%arg0: i32) -> (i32, i32) {
    %c0_i32 = arith.constant 0 : i32
    %c0_i32_0 = arith.constant 0 : i32
    %c0_i32_1 = arith.constant 0 : i32
    return %c0_i32, %c0_i32_0 : i32, i32
  }
  func.func @transform_7(%arg0: i32) -> (i32, i32) {
    %c0_i32 = arith.constant 0 : i32
    %c0_i32_0 = arith.constant 0 : i32
    %c0_i32_1 = arith.constant 0 : i32
    return %c0_i32, %c0_i32_0 : i32, i32
  }
  func.func @transform_8(%arg0: i32) -> (i32, i32) {
    %c0_i32 = arith.constant 0 : i32
    %c0_i32_0 = arith.constant 0 : i32
    %c0_i32_1 = arith.constant 0 : i32
    return %c0_i32, %c0_i32_0 : i32, i32
  }
  func.func @transform_9(%arg0: i32) -> (i32, i32) {
    %c0_i32 = arith.constant 0 : i32
    %c0_i32_0 = arith.constant 0 : i32
    %c0_i32_1 = arith.constant 0 : i32
    return %c0_i32, %c0_i32_0 : i32, i32
  }
  func.func @transform_10(%arg0: i32) -> (i32, i32) {
    %c0_i32 = arith.constant 0 : i32
    %c0_i32_0 = arith.constant 0 : i32
    %c0_i32_1 = arith.constant 0 : i32
    return %c0_i32, %c0_i32_0 : i32, i32
  }
  func.func @transform_11(%arg0: i32) -> (i32, i32) {
    %c0_i32 = arith.constant 0 : i32
    %c0_i32_0 = arith.constant 0 : i32
    %c0_i32_1 = arith.constant 0 : i32
    return %c0_i32, %c0_i32_0 : i32, i32
  }
  func.func @transform_12(%arg0: i32) -> (i32, i32) {
    %c0_i32 = arith.constant 0 : i32
    %c0_i32_0 = arith.constant 0 : i32
    %c0_i32_1 = arith.constant 0 : i32
    return %c0_i32, %c0_i32_0 : i32, i32
  }
  func.func @transform_13(%arg0: i32) -> (i32, i32) {
    %c0_i32 = arith.constant 0 : i32
    %c0_i32_0 = arith.constant 0 : i32
    %c0_i32_1 = arith.constant 0 : i32
    return %c0_i32, %c0_i32_0 : i32, i32
  }
  func.func @transform_14(%arg0: i32) -> (i32, i32) {
    %c0_i32 = arith.constant 0 : i32
    %c0_i32_0 = arith.constant 0 : i32
    %c0_i32_1 = arith.constant 0 : i32
    return %c0_i32, %c0_i32_0 : i32, i32
  }
}

</mosaic_0001>

<llo_original>
// kernel: s2convnet_forward.7
$region0: #{s2convnet_forward.7}
  #allocation0 [shape = 'u32[]', space=smem, size = 0x4, offset = 0x4, fixed_abs, tag = 'smem constant byte address 0x4 - core index']
  #allocation1 [shape = 'u32[144,128]{1,0:T(1,128)}', space=vmem, size = 0x12000, scoped, tag = 'internal scratch']
  %s0 = inlined_call_operand.vmem [shape: bf16[400,4], index: 0, kind: input, shape index: {}]
  %s1 = inlined_call_operand.vmem [shape: bf16[4,20], index: 1, kind: input, shape index: {}]
  %s2 = inlined_call_operand.vmem [shape: f32[1,20], index: 2, kind: input, shape index: {}]
  %s3 = inlined_call_operand.vmem [shape: f32[400,20], index: 3, kind: output, shape index: {}]
  %s4 = sld [smem:[#allocation0]]
  $region22: #{s2convnet_forward.7} parent=0
    _
  %s6 = ssub.s32 1, %s4
  %s7 = scalar_select 0, %s6, %s4
  // Predicated region
  $region2: #{s2convnet_forward.7} parent=0 // pred_check
    _
  $region3: #{s2convnet_forward.7} parent=0 // pred_check_branch
    %9 = sbr.rel (0) target = $region5
  $region4: #{s2convnet_forward.7} parent=0 // pred_region
    _
  $region5: #{s2convnet_forward.7} parent=0 // pred_fallthru
    _
  // Predicated region
  $region6: #{s2convnet_forward.7} parent=0 // pred_check
    _
  $region7: #{s2convnet_forward.7} parent=0 // pred_check_branch
    %11 = sbr.rel (0) target = $region9
  $region8: #{s2convnet_forward.7} parent=0 // pred_region
    _
  $region9: #{s2convnet_forward.7} parent=0 // pred_fallthru
    _
  // Predicated region
  $region10: #{s2convnet_forward.7} parent=0 // pred_check
    _
  $region11: #{s2convnet_forward.7} parent=0 // pred_check_branch
    %13 = sbr.rel (0) target = $region13
  $region12: #{s2convnet_forward.7} parent=0 // pred_region
    _
  $region13: #{s2convnet_forward.7} parent=0 // pred_fallthru
    _
  %v15 = vld [vmem:[%s0] sm:$0xf]
  %v16 = vld [vmem:[%s0 + $0x4] sm:$0xf]
  %v17 = vld [vmem:[%s0 + $0x8] sm:$0xf]
  %v18 = vld [vmem:[%s0 + $0xc] sm:$0xf]
  %v19 = vld [vmem:[%s0 + $0x10] sm:$0xf]
  %v20 = vld [vmem:[%s0 + $0x14] sm:$0xf]
  %v21 = vld [vmem:[%s0 + $0x18] sm:$0xf]
  %v22 = vld [vmem:[%s0 + $0x1c] sm:$0xf]
  %v23 = vld [vmem:[%s0 + $0x20] sm:$0xf]
  %v24 = vld [vmem:[%s0 + $0x24] sm:$0xf]
  %v25 = vld [vmem:[%s0 + $0x28] sm:$0xf]
  %v26 = vld [vmem:[%s0 + $0x2c] sm:$0xf]
  %v27 = vld [vmem:[%s0 + $0x30] sm:$0xf]
  %v28 = vld [vmem:[%s0 + $0x34] sm:$0xf]
  %v29 = vld [vmem:[%s0 + $0x38] sm:$0xf]
  %v30 = vld [vmem:[%s0 + $0x3c] sm:$0xf]
  %v31 = vld [vmem:[%s0 + $0x40] sm:$0xf]
  %v32 = vld [vmem:[%s0 + $0x44] sm:$0xf]
  %v33 = vld [vmem:[%s0 + $0x48] sm:$0xf]
  %v34 = vld [vmem:[%s0 + $0x4c] sm:$0xf]
  %v35 = vld [vmem:[%s0 + $0x50] sm:$0xf]
  %v36 = vld [vmem:[%s0 + $0x54] sm:$0xf]
  %v37 = vld [vmem:[%s0 + $0x58] sm:$0xf]
  %v38 = vld [vmem:[%s0 + $0x5c] sm:$0xf]
  %v39 = vld [vmem:[%s0 + $0x60] sm:$0xf]
  %v40 = vld [vmem:[%s0 + $0x64] sm:$0xf]
  %v41 = vld [vmem:[%s0 + $0x68] sm:$0xf]
  %v42 = vld [vmem:[%s0 + $0x6c] sm:$0xf]
  %v43 = vld [vmem:[%s0 + $0x70] sm:$0xf]
  %v44 = vld [vmem:[%s0 + $0x74] sm:$0xf]
  %v45 = vld [vmem:[%s0 + $0x78] sm:$0xf]
  %v46 = vld [vmem:[%s0 + $0x7c] sm:$0xf]
  %v47 = vld [vmem:[%s0 + $0x80] sm:$0xf]
  %v48 = vld [vmem:[%s0 + $0x84] sm:$0xf]
  %v49 = vld [vmem:[%s0 + $0x88] sm:$0xf]
  %v50 = vld [vmem:[%s0 + $0x8c] sm:$0xf]
  %v51 = vld [vmem:[%s0 + $0x90] sm:$0xf]
  %v52 = vld [vmem:[%s0 + $0x94] sm:$0xf]
  %v53 = vld [vmem:[%s0 + $0x98] sm:$0xf]
  %v54 = vld [vmem:[%s0 + $0x9c] sm:$0xf]
  %v55 = vld [vmem:[%s0 + $0xa0] sm:$0xf]
  %v56 = vld [vmem:[%s0 + $0xa4] sm:$0xf]
  %v57 = vld [vmem:[%s0 + $0xa8] sm:$0xf]
  %v58 = vld [vmem:[%s0 + $0xac] sm:$0xf]
  %v59 = vld [vmem:[%s0 + $0xb0] sm:$0xf]
  %v60 = vld [vmem:[%s0 + $0xb4] sm:$0xf]
  %v61 = vld [vmem:[%s0 + $0xb8] sm:$0xf]
  %v62 = vld [vmem:[%s0 + $0xbc] sm:$0xf]
  %v63 = vld [vmem:[%s0 + $0xc0] sm:$0xf]
  %v64 = vld [vmem:[%s0 + $0xc4] sm:$0xf]
  %v65 = vld [vmem:[%s1] sm:$0x3]
  %v66 = vld [vmem:[%s2] sm:$0x1]
  %v68 = vlaneseq
  %v69 = vshrl.u32 %v68, 7
  %v70 = vsub.s32 0, %v69
  %v71 = vrot.slane %v66, %v70
  %v123 = vunpack.c.l.b16 %v15
  %v124 = vunpack.c.l.b16 %v16
  %v125 = vunpack.c.l.b16 %v17
  %v126 = vunpack.c.l.b16 %v18
  %v127 = vunpack.c.l.b16 %v19
  %v128 = vunpack.c.l.b16 %v20
  %v129 = vunpack.c.l.b16 %v21
  %v130 = vunpack.c.l.b16 %v22
  %v131 = vunpack.c.l.b16 %v23
  %v132 = vunpack.c.l.b16 %v24
  %v133 = vunpack.c.l.b16 %v25
  %v134 = vunpack.c.l.b16 %v26
  %v135 = vunpack.c.l.b16 %v27
  %v136 = vunpack.c.l.b16 %v28
  %v137 = vunpack.c.l.b16 %v29
  %v138 = vunpack.c.l.b16 %v30
  %v139 = vunpack.c.l.b16 %v31
  %v140 = vunpack.c.l.b16 %v32
  %v141 = vunpack.c.l.b16 %v33
  %v142 = vunpack.c.l.b16 %v34
  %v143 = vunpack.c.l.b16 %v35
  %v144 = vunpack.c.l.b16 %v36
  %v145 = vunpack.c.l.b16 %v37
  %v146 = vunpack.c.l.b16 %v38
  %v147 = vunpack.c.l.b16 %v39
  %v148 = vunpack.c.l.b16 %v40
  %v149 = vunpack.c.l.b16 %v41
  %v150 = vunpack.c.l.b16 %v42
  %v151 = vunpack.c.l.b16 %v43
  %v152 = vunpack.c.l.b16 %v44
  %v153 = vunpack.c.l.b16 %v45
  %v154 = vunpack.c.l.b16 %v46
  %v155 = vunpack.c.l.b16 %v47
  %v156 = vunpack.c.l.b16 %v48
  %v157 = vunpack.c.l.b16 %v49
  %v158 = vunpack.c.l.b16 %v50
  %v159 = vunpack.c.l.b16 %v51
  %v160 = vunpack.c.l.b16 %v52
  %v161 = vunpack.c.l.b16 %v53
  %v162 = vunpack.c.l.b16 %v54
  %v163 = vunpack.c.l.b16 %v55
  %v164 = vunpack.c.l.b16 %v56
  %v165 = vunpack.c.l.b16 %v57
  %v166 = vunpack.c.l.b16 %v58
  %v167 = vunpack.c.l.b16 %v59
  %v168 = vunpack.c.l.b16 %v60
  %v169 = vunpack.c.l.b16 %v61
  %v170 = vunpack.c.l.b16 %v62
  %v171 = vunpack.c.l.b16 %v63
  %v172 = vunpack.c.l.b16 %v64
  %v173 = vpack.c.b16 %v124, %v123
  %v174 = vpack.c.b16 %v126, %v125
  %v175 = vpack.c.b16 %v128, %v127
  %v176 = vpack.c.b16 %v130, %v129
  %v177 = vpack.c.b16 %v132, %v131
  %v178 = vpack.c.b16 %v134, %v133
  %v179 = vpack.c.b16 %v136, %v135
  %v180 = vpack.c.b16 %v138, %v137
  %v181 = vpack.c.b16 %v140, %v139
  %v182 = vpack.c.b16 %v142, %v141
  %v183 = vpack.c.b16 %v144, %v143
  %v184 = vpack.c.b16 %v146, %v145
  %v185 = vpack.c.b16 %v148, %v147
  %v186 = vpack.c.b16 %v150, %v149
  %v187 = vpack.c.b16 %v152, %v151
  %v188 = vpack.c.b16 %v154, %v153
  %v189 = vpack.c.b16 %v156, %v155
  %v190 = vpack.c.b16 %v158, %v157
  %v191 = vpack.c.b16 %v160, %v159
  %v192 = vpack.c.b16 %v162, %v161
  %v193 = vpack.c.b16 %v164, %v163
  %v194 = vpack.c.b16 %v166, %v165
  %v195 = vpack.c.b16 %v168, %v167
  %v196 = vpack.c.b16 %v170, %v169
  %v197 = vpack.c.b16 %v172, %v171
  %vm198 = vcmask 31744
  %v200 = vsel %vm198, %v173, 0
  %v203 = vsel %vm198, %v174, 0
  %v206 = vsel %vm198, %v175, 0
  %v209 = vsel %vm198, %v176, 0
  %v212 = vsel %vm198, %v177, 0
  %v215 = vsel %vm198, %v178, 0
  %v218 = vsel %vm198, %v179, 0
  %v221 = vsel %vm198, %v180, 0
  %v224 = vsel %vm198, %v181, 0
  %v227 = vsel %vm198, %v182, 0
  %v230 = vsel %vm198, %v183, 0
  %v233 = vsel %vm198, %v184, 0
  %v236 = vsel %vm198, %v185, 0
  %v239 = vsel %vm198, %v186, 0
  %v242 = vsel %vm198, %v187, 0
  %v245 = vsel %vm198, %v188, 0
  %v248 = vsel %vm198, %v189, 0
  %v251 = vsel %vm198, %v190, 0
  %v254 = vsel %vm198, %v191, 0
  %v257 = vsel %vm198, %v192, 0
  %v260 = vsel %vm198, %v193, 0
  %v263 = vsel %vm198, %v194, 0
  %v266 = vsel %vm198, %v195, 0
  %v269 = vsel %vm198, %v196, 0
  %v272 = vsel %vm198, %v197, 0
  %vm274 = vcmask 1041408
  %v276 = vsel %vm274, %v65, 0
  %278 = vmatprep.subr.bf16.mxu0 0
  %279 = vmatpush1.bf16.msra.mxu0 %v276
  %280 = vmatprep.subr.bf16.mxu0 0
  %281 = vmatpush1.bf16.msra.mxu0 0
  %282 = vmatprep.subr.bf16.mxu0 0
  %283 = vmatpush1.bf16.msra.mxu0 0
  %284 = vmatprep.subr.bf16.mxu0 0
  %285 = vmatpush1.bf16.msra.mxu0 0
  %286 = vmatprep.subr.bf16.mxu0 0
  %287 = vmatpush1.bf16.msra.mxu0 0
  %288 = vmatprep.subr.bf16.mxu0 0
  %289 = vmatpush1.bf16.msra.mxu0 0
  %290 = vmatprep.subr.bf16.mxu0 0
  %291 = vmatpush1.bf16.msra.mxu0 0
  %292 = vmatprep.subr.bf16.mxu0 0
  %293 = vmatpush1.bf16.msra.mxu0 0
  %294 = vmatprep.subr.bf16.mxu0 0
  %295 = vmatpush1.bf16.msra.mxu0 0
  %296 = vmatprep.subr.bf16.mxu0 0
  %297 = vmatpush1.bf16.msra.mxu0 0
  %298 = vmatprep.subr.bf16.mxu0 0
  %299 = vmatpush1.bf16.msra.mxu0 0
  %300 = vmatprep.subr.bf16.mxu0 0
  %301 = vmatpush1.bf16.msra.mxu0 0
  %302 = vmatprep.subr.bf16.mxu0 0
  %303 = vmatpush1.bf16.msra.mxu0 0
  %304 = vmatprep.subr.bf16.mxu0 0
  %305 = vmatpush1.bf16.msra.mxu0 0
  %306 = vmatprep.subr.bf16.mxu0 0
  %307 = vmatpush1.bf16.msra.mxu0 0
  %308 = vmatprep.subr.bf16.mxu0 0
  %309 = vmatpush1.bf16.msra.mxu0 0
  %310 = vmatprep.mubr.bf16.mxu0 0
  %311 = vmatmul.mubr.bf16.gmra.mrb[0].mxu0 %v200
  %v312 = vpop.f32.mrb[0].mxu0
  %v313 = vadd.f32 %v71, %v312
  %v314 = vpop.f32.mrb[0].mxu0
  %v315 = vpop.f32.mrb[0].mxu0
  %v316 = vadd.f32 %v71, %v315
  %v317 = vpop.f32.mrb[0].mxu0
  %318 = vmatprep.mubr.bf16.mxu0 0
  %319 = vmatmul.mubr.bf16.gmra.mrb[0].mxu0 %v203
  %v320 = vpop.f32.mrb[0].mxu0
  %v321 = vadd.f32 %v71, %v320
  %v322 = vpop.f32.mrb[0].mxu0
  %v323 = vpop.f32.mrb[0].mxu0
  %v324 = vadd.f32 %v71, %v323
  %v325 = vpop.f32.mrb[0].mxu0
  %326 = vmatprep.mubr.bf16.mxu0 0
  %327 = vmatmul.mubr.bf16.gmra.mrb[0].mxu0 %v206
  %v328 = vpop.f32.mrb[0].mxu0
  %v329 = vadd.f32 %v71, %v328
  %v330 = vpop.f32.mrb[0].mxu0
  %v331 = vpop.f32.mrb[0].mxu0
  %v332 = vadd.f32 %v71, %v331
  %v333 = vpop.f32.mrb[0].mxu0
  %334 = vmatprep.mubr.bf16.mxu0 0
  %335 = vmatmul.mubr.bf16.gmra.mrb[0].mxu0 %v209
  %v336 = vpop.f32.mrb[0].mxu0
  %v337 = vadd.f32 %v71, %v336
  %v338 = vpop.f32.mrb[0].mxu0
  %v339 = vpop.f32.mrb[0].mxu0
  %v340 = vadd.f32 %v71, %v339
  %v341 = vpop.f32.mrb[0].mxu0
  %342 = vmatprep.mubr.bf16.mxu0 0
  %343 = vmatmul.mubr.bf16.gmra.mrb[0].mxu0 %v212
  %v344 = vpop.f32.mrb[0].mxu0
  %v345 = vadd.f32 %v71, %v344
  %v346 = vpop.f32.mrb[0].mxu0
  %v347 = vpop.f32.mrb[0].mxu0
  %v348 = vadd.f32 %v71, %v347
  %v349 = vpop.f32.mrb[0].mxu0
  %350 = vmatprep.mubr.bf16.mxu0 0
  %351 = vmatmul.mubr.bf16.gmra.mrb[0].mxu0 %v215
  %v352 = vpop.f32.mrb[0].mxu0
  %v353 = vadd.f32 %v71, %v352
  %v354 = vpop.f32.mrb[0].mxu0
  %v355 = vpop.f32.mrb[0].mxu0
  %v356 = vadd.f32 %v71, %v355
  %v357 = vpop.f32.mrb[0].mxu0
  %358 = vmatprep.mubr.bf16.mxu0 0
  %359 = vmatmul.mubr.bf16.gmra.mrb[0].mxu0 %v218
  %v360 = vpop.f32.mrb[0].mxu0
  %v361 = vadd.f32 %v71, %v360
  %v362 = vpop.f32.mrb[0].mxu0
  %v363 = vpop.f32.mrb[0].mxu0
  %v364 = vadd.f32 %v71, %v363
  %v365 = vpop.f32.mrb[0].mxu0
  %366 = vmatprep.mubr.bf16.mxu0 0
  %367 = vmatmul.mubr.bf16.gmra.mrb[0].mxu0 %v221
  %v368 = vpop.f32.mrb[0].mxu0
  %v369 = vadd.f32 %v71, %v368
  %v370 = vpop.f32.mrb[0].mxu0
  %v371 = vpop.f32.mrb[0].mxu0
  %v372 = vadd.f32 %v71, %v371
  %v373 = vpop.f32.mrb[0].mxu0
  %374 = vmatprep.mubr.bf16.mxu0 0
  %375 = vmatmul.mubr.bf16.gmra.mrb[0].mxu0 %v224
  %v376 = vpop.f32.mrb[0].mxu0
  %v377 = vadd.f32 %v71, %v376
  %v378 = vpop.f32.mrb[0].mxu0
  %v379 = vpop.f32.mrb[0].mxu0
  %v380 = vadd.f32 %v71, %v379
  %v381 = vpop.f32.mrb[0].mxu0
  %382 = vmatprep.mubr.bf16.mxu0 0
  %383 = vmatmul.mubr.bf16.gmra.mrb[0].mxu0 %v227
  %v384 = vpop.f32.mrb[0].mxu0
  %v385 = vadd.f32 %v71, %v384
  %v386 = vpop.f32.mrb[0].mxu0
  %v387 = vpop.f32.mrb[0].mxu0
  %v388 = vadd.f32 %v71, %v387
  %v389 = vpop.f32.mrb[0].mxu0
  %390 = vmatprep.mubr.bf16.mxu0 0
  %391 = vmatmul.mubr.bf16.gmra.mrb[0].mxu0 %v230
  %v392 = vpop.f32.mrb[0].mxu0
  %v393 = vadd.f32 %v71, %v392
  %v394 = vpop.f32.mrb[0].mxu0
  %v395 = vpop.f32.mrb[0].mxu0
  %v396 = vadd.f32 %v71, %v395
  %v397 = vpop.f32.mrb[0].mxu0
  %398 = vmatprep.mubr.bf16.mxu0 0
  %399 = vmatmul.mubr.bf16.gmra.mrb[0].mxu0 %v233
  %v400 = vpop.f32.mrb[0].mxu0
  %v401 = vadd.f32 %v71, %v400
  %v402 = vpop.f32.mrb[0].mxu0
  %v403 = vpop.f32.mrb[0].mxu0
  %v404 = vadd.f32 %v71, %v403
  %v405 = vpop.f32.mrb[0].mxu0
  %406 = vmatprep.mubr.bf16.mxu0 0
  %407 = vmatmul.mubr.bf16.gmra.mrb[0].mxu0 %v236
  %v408 = vpop.f32.mrb[0].mxu0
  %v409 = vadd.f32 %v71, %v408
  %v410 = vpop.f32.mrb[0].mxu0
  %v411 = vpop.f32.mrb[0].mxu0
  %v412 = vadd.f32 %v71, %v411
  %v413 = vpop.f32.mrb[0].mxu0
  %414 = vmatprep.mubr.bf16.mxu0 0
  %415 = vmatmul.mubr.bf16.gmra.mrb[0].mxu0 %v239
  %v416 = vpop.f32.mrb[0].mxu0
  %v417 = vadd.f32 %v71, %v416
  %v418 = vpop.f32.mrb[0].mxu0
  %v419 = vpop.f32.mrb[0].mxu0
  %v420 = vadd.f32 %v71, %v419
  %v421 = vpop.f32.mrb[0].mxu0
  %422 = vmatprep.mubr.bf16.mxu0 0
  %423 = vmatmul.mubr.bf16.gmra.mrb[0].mxu0 %v242
  %v424 = vpop.f32.mrb[0].mxu0
  %v425 = vadd.f32 %v71, %v424
  %v426 = vpop.f32.mrb[0].mxu0
  %v427 = vpop.f32.mrb[0].mxu0
  %v428 = vadd.f32 %v71, %v427
  %v429 = vpop.f32.mrb[0].mxu0
  %430 = vmatprep.mubr.bf16.mxu0 0
  %431 = vmatmul.mubr.bf16.gmra.mrb[0].mxu0 %v245
  %v432 = vpop.f32.mrb[0].mxu0
  %v433 = vadd.f32 %v71, %v432
  %v434 = vpop.f32.mrb[0].mxu0
  %v435 = vpop.f32.mrb[0].mxu0
  %v436 = vadd.f32 %v71, %v435
  %v437 = vpop.f32.mrb[0].mxu0
  %438 = vmatprep.mubr.bf16.mxu0 0
  %439 = vmatmul.mubr.bf16.gmra.mrb[0].mxu0 %v248
  %v440 = vpop.f32.mrb[0].mxu0
  %v441 = vadd.f32 %v71, %v440
  %v442 = vpop.f32.mrb[0].mxu0
  %v443 = vpop.f32.mrb[0].mxu0
  %v444 = vadd.f32 %v71, %v443
  %v445 = vpop.f32.mrb[0].mxu0
  %446 = vmatprep.mubr.bf16.mxu0 0
  %447 = vmatmul.mubr.bf16.gmra.mrb[0].mxu0 %v251
  %v448 = vpop.f32.mrb[0].mxu0
  %v449 = vadd.f32 %v71, %v448
  %v450 = vpop.f32.mrb[0].mxu0
  %v451 = vpop.f32.mrb[0].mxu0
  %v452 = vadd.f32 %v71, %v451
  %v453 = vpop.f32.mrb[0].mxu0
  %454 = vmatprep.mubr.bf16.mxu0 0
  %455 = vmatmul.mubr.bf16.gmra.mrb[0].mxu0 %v254
  %v456 = vpop.f32.mrb[0].mxu0
  %v457 = vadd.f32 %v71, %v456
  %v458 = vpop.f32.mrb[0].mxu0
  %v459 = vpop.f32.mrb[0].mxu0
  %v460 = vadd.f32 %v71, %v459
  %v461 = vpop.f32.mrb[0].mxu0
  %462 = vmatprep.mubr.bf16.mxu0 0
  %463 = vmatmul.mubr.bf16.gmra.mrb[0].mxu0 %v257
  %v464 = vpop.f32.mrb[0].mxu0
  %v465 = vadd.f32 %v71, %v464
  %v466 = vpop.f32.mrb[0].mxu0
  %v467 = vpop.f32.mrb[0].mxu0
  %v468 = vadd.f32 %v71, %v467
  %v469 = vpop.f32.mrb[0].mxu0
  %470 = vmatprep.mubr.bf16.mxu0 0
  %471 = vmatmul.mubr.bf16.gmra.mrb[0].mxu0 %v260
  %v472 = vpop.f32.mrb[0].mxu0
  %v473 = vadd.f32 %v71, %v472
  %v474 = vpop.f32.mrb[0].mxu0
  %v475 = vpop.f32.mrb[0].mxu0
  %v476 = vadd.f32 %v71, %v475
  %v477 = vpop.f32.mrb[0].mxu0
  %478 = vmatprep.mubr.bf16.mxu0 0
  %479 = vmatmul.mubr.bf16.gmra.mrb[0].mxu0 %v263
  %v480 = vpop.f32.mrb[0].mxu0
  %v481 = vadd.f32 %v71, %v480
  %v482 = vpop.f32.mrb[0].mxu0
  %v483 = vpop.f32.mrb[0].mxu0
  %v484 = vadd.f32 %v71, %v483
  %v485 = vpop.f32.mrb[0].mxu0
  %486 = vmatprep.mubr.bf16.mxu0 0
  %487 = vmatmul.mubr.bf16.gmra.mrb[0].mxu0 %v266
  %v488 = vpop.f32.mrb[0].mxu0
  %v489 = vadd.f32 %v71, %v488
  %v490 = vpop.f32.mrb[0].mxu0
  %v491 = vpop.f32.mrb[0].mxu0
  %v492 = vadd.f32 %v71, %v491
  %v493 = vpop.f32.mrb[0].mxu0
  %494 = vmatprep.mubr.bf16.mxu0 0
  %495 = vmatmul.mubr.bf16.gmra.mrb[0].mxu0 %v269
  %v496 = vpop.f32.mrb[0].mxu0
  %v497 = vadd.f32 %v71, %v496
  %v498 = vpop.f32.mrb[0].mxu0
  %v499 = vpop.f32.mrb[0].mxu0
  %v500 = vadd.f32 %v71, %v499
  %v501 = vpop.f32.mrb[0].mxu0
  %502 = vmatprep.mubr.bf16.mxu0 0
  %503 = vmatmul.mubr.bf16.gmra.mrb[0].mxu0 %v272
  %v504 = vpop.f32.mrb[0].mxu0
  %v505 = vadd.f32 %v71, %v504
  %v506 = vpop.f32.mrb[0].mxu0
  %v507 = vpop.f32.mrb[0].mxu0
  %v508 = vadd.f32 %v71, %v507
  %v509 = vpop.f32.mrb[0].mxu0
  %510 = vdwg.mxu0
  %v511 = vmax.f32 %v313, 0.0
  %v512 = vmax.f32 %v316, 0.0
  %v513 = vmax.f32 %v321, 0.0
  %v514 = vmax.f32 %v324, 0.0
  %v515 = vmax.f32 %v329, 0.0
  %v516 = vmax.f32 %v332, 0.0
  %v517 = vmax.f32 %v337, 0.0
  %v518 = vmax.f32 %v340, 0.0
  %v519 = vmax.f32 %v345, 0.0
  %v520 = vmax.f32 %v348, 0.0
  %v521 = vmax.f32 %v353, 0.0
  %v522 = vmax.f32 %v356, 0.0
  %v523 = vmax.f32 %v361, 0.0
  %v524 = vmax.f32 %v364, 0.0
  %v525 = vmax.f32 %v369, 0.0
  %v526 = vmax.f32 %v372, 0.0
  %v527 = vmax.f32 %v377, 0.0
  %v528 = vmax.f32 %v380, 0.0
  %v529 = vmax.f32 %v385, 0.0
  %v530 = vmax.f32 %v388, 0.0
  %v531 = vmax.f32 %v393, 0.0
  %v532 = vmax.f32 %v396, 0.0
  %v533 = vmax.f32 %v401, 0.0
  %v534 = vmax.f32 %v404, 0.0
  %v535 = vmax.f32 %v409, 0.0
  %v536 = vmax.f32 %v412, 0.0
  %v537 = vmax.f32 %v417, 0.0
  %v538 = vmax.f32 %v420, 0.0
  %v539 = vmax.f32 %v425, 0.0
  %v540 = vmax.f32 %v428, 0.0
  %v541 = vmax.f32 %v433, 0.0
  %v542 = vmax.f32 %v436, 0.0
  %v543 = vmax.f32 %v441, 0.0
  %v544 = vmax.f32 %v444, 0.0
  %v545 = vmax.f32 %v449, 0.0
  %v546 = vmax.f32 %v452, 0.0
  %v547 = vmax.f32 %v457, 0.0
  %v548 = vmax.f32 %v460, 0.0
  %v549 = vmax.f32 %v465, 0.0
  %v550 = vmax.f32 %v468, 0.0
  %v551 = vmax.f32 %v473, 0.0
  %v552 = vmax.f32 %v476, 0.0
  %v553 = vmax.f32 %v481, 0.0
  %v554 = vmax.f32 %v484, 0.0
  %v555 = vmax.f32 %v489, 0.0
  %v556 = vmax.f32 %v492, 0.0
  %v557 = vmax.f32 %v497, 0.0
  %v558 = vmax.f32 %v500, 0.0
  %v559 = vmax.f32 %v505, 0.0
  %v560 = vmax.f32 %v508, 0.0
  %vm561 = vcmask 162816
  %562 = vst.msk [vmem:[%s3] sm:$0xff] %vm561, %v511
  %563 = vst.msk [vmem:[%s3 + $0x8] sm:$0xff] %vm561, %v512
  %564 = vst.msk [vmem:[%s3 + $0x10] sm:$0xff] %vm561, %v513
  %565 = vst.msk [vmem:[%s3 + $0x18] sm:$0xff] %vm561, %v514
  %566 = vst.msk [vmem:[%s3 + $0x20] sm:$0xff] %vm561, %v515
  %567 = vst.msk [vmem:[%s3 + $0x28] sm:$0xff] %vm561, %v516
  %568 = vst.msk [vmem:[%s3 + $0x30] sm:$0xff] %vm561, %v517
  %569 = vst.msk [vmem:[%s3 + $0x38] sm:$0xff] %vm561, %v518
  %570 = vst.msk [vmem:[%s3 + $0x40] sm:$0xff] %vm561, %v519
  %571 = vst.msk [vmem:[%s3 + $0x48] sm:$0xff] %vm561, %v520
  %572 = vst.msk [vmem:[%s3 + $0x50] sm:$0xff] %vm561, %v521
  %573 = vst.msk [vmem:[%s3 + $0x58] sm:$0xff] %vm561, %v522
  %574 = vst.msk [vmem:[%s3 + $0x60] sm:$0xff] %vm561, %v523
  %575 = vst.msk [vmem:[%s3 + $0x68] sm:$0xff] %vm561, %v524
  %576 = vst.msk [vmem:[%s3 + $0x70] sm:$0xff] %vm561, %v525
  %577 = vst.msk [vmem:[%s3 + $0x78] sm:$0xff] %vm561, %v526
  %578 = vst.msk [vmem:[%s3 + $0x80] sm:$0xff] %vm561, %v527
  %579 = vst.msk [vmem:[%s3 + $0x88] sm:$0xff] %vm561, %v528
  %580 = vst.msk [vmem:[%s3 + $0x90] sm:$0xff] %vm561, %v529
  %581 = vst.msk [vmem:[%s3 + $0x98] sm:$0xff] %vm561, %v530
  %582 = vst.msk [vmem:[%s3 + $0xa0] sm:$0xff] %vm561, %v531
  %583 = vst.msk [vmem:[%s3 + $0xa8] sm:$0xff] %vm561, %v532
  %584 = vst.msk [vmem:[%s3 + $0xb0] sm:$0xff] %vm561, %v533
  %585 = vst.msk [vmem:[%s3 + $0xb8] sm:$0xff] %vm561, %v534
  %586 = vst.msk [vmem:[%s3 + $0xc0] sm:$0xff] %vm561, %v535
  %587 = vst.msk [vmem:[%s3 + $0xc8] sm:$0xff] %vm561, %v536
  %588 = vst.msk [vmem:[%s3 + $0xd0] sm:$0xff] %vm561, %v537
  %589 = vst.msk [vmem:[%s3 + $0xd8] sm:$0xff] %vm561, %v538
  %590 = vst.msk [vmem:[%s3 + $0xe0] sm:$0xff] %vm561, %v539
  %591 = vst.msk [vmem:[%s3 + $0xe8] sm:$0xff] %vm561, %v540
  %592 = vst.msk [vmem:[%s3 + $0xf0] sm:$0xff] %vm561, %v541
  %593 = vst.msk [vmem:[%s3 + $0xf8] sm:$0xff] %vm561, %v542
  %594 = vst.msk [vmem:[%s3 + $0x100] sm:$0xff] %vm561, %v543
  %595 = vst.msk [vmem:[%s3 + $0x108] sm:$0xff] %vm561, %v544
  %596 = vst.msk [vmem:[%s3 + $0x110] sm:$0xff] %vm561, %v545
  %597 = vst.msk [vmem:[%s3 + $0x118] sm:$0xff] %vm561, %v546
  %598 = vst.msk [vmem:[%s3 + $0x120] sm:$0xff] %vm561, %v547
  %599 = vst.msk [vmem:[%s3 + $0x128] sm:$0xff] %vm561, %v548
  %600 = vst.msk [vmem:[%s3 + $0x130] sm:$0xff] %vm561, %v549
  %601 = vst.msk [vmem:[%s3 + $0x138] sm:$0xff] %vm561, %v550
  %602 = vst.msk [vmem:[%s3 + $0x140] sm:$0xff] %vm561, %v551
  %603 = vst.msk [vmem:[%s3 + $0x148] sm:$0xff] %vm561, %v552
  %604 = vst.msk [vmem:[%s3 + $0x150] sm:$0xff] %vm561, %v553
  %605 = vst.msk [vmem:[%s3 + $0x158] sm:$0xff] %vm561, %v554
  %606 = vst.msk [vmem:[%s3 + $0x160] sm:$0xff] %vm561, %v555
  %607 = vst.msk [vmem:[%s3 + $0x168] sm:$0xff] %vm561, %v556
  %608 = vst.msk [vmem:[%s3 + $0x170] sm:$0xff] %vm561, %v557
  %609 = vst.msk [vmem:[%s3 + $0x178] sm:$0xff] %vm561, %v558
  %610 = vst.msk [vmem:[%s3 + $0x180] sm:$0xff] %vm561, %v559
  %611 = vst.msk [vmem:[%s3 + $0x188] sm:$0xff] %vm561, %v560
  // Predicated region
  $region14: #{s2convnet_forward.7} parent=0 // pred_check
    _
  $region15: #{s2convnet_forward.7} parent=0 // pred_check_branch
    %613 = sbr.rel (0) target = $region17
  $region16: #{s2convnet_forward.7} parent=0 // pred_region
    _
  $region17: #{s2convnet_forward.7} parent=0 // pred_fallthru
    _
  // Predicated region
  $region18: #{s2convnet_forward.7} parent=0 // pred_check
    _
  $region19: #{s2convnet_forward.7} parent=0 // pred_check_branch
    %615 = sbr.rel (0) target = $region21
  $region20: #{s2convnet_forward.7} parent=0 // pred_region
    _
  $region21: #{s2convnet_forward.7} parent=0 // pred_fallthru
    _

// kernel: s2convnet_forward.8
$region0: #{s2convnet_forward.8}
  #allocation0 [shape = 'u32[]', space=smem, size = 0x4, offset = 0x4, fixed_abs, tag = 'smem constant byte address 0x4 - core index']
  #allocation1 [shape = 'u32[144,128]{1,0:T(1,128)}', space=vmem, size = 0x12000, scoped, tag = 'internal scratch']
  %s0 = inlined_call_operand.vmem [shape: bf16[288,20], index: 0, kind: input, shape index: {}]
  %s1 = inlined_call_operand.vmem [shape: bf16[20,40], index: 1, kind: input, shape index: {}]
  %s2 = inlined_call_operand.vmem [shape: f32[1,40], index: 2, kind: input, shape index: {}]
  %s3 = inlined_call_operand.vmem [shape: f32[288,40], index: 3, kind: output, shape index: {}]
  %s4 = sld [smem:[#allocation0]]
  $region22: #{s2convnet_forward.8} parent=0
    _
  %s6 = ssub.s32 1, %s4
  %s7 = scalar_select 0, %s6, %s4
  // Predicated region
  $region2: #{s2convnet_forward.8} parent=0 // pred_check
    _
  $region3: #{s2convnet_forward.8} parent=0 // pred_check_branch
    %9 = sbr.rel (0) target = $region5
  $region4: #{s2convnet_forward.8} parent=0 // pred_region
    _
  $region5: #{s2convnet_forward.8} parent=0 // pred_fallthru
    _
  // Predicated region
  $region6: #{s2convnet_forward.8} parent=0 // pred_check
    _
  $region7: #{s2convnet_forward.8} parent=0 // pred_check_branch
    %11 = sbr.rel (0) target = $region9
  $region8: #{s2convnet_forward.8} parent=0 // pred_region
    _
  $region9: #{s2convnet_forward.8} parent=0 // pred_fallthru
    _
  // Predicated region
  $region10: #{s2convnet_forward.8} parent=0 // pred_check
    _
  $region11: #{s2convnet_forward.8} parent=0 // pred_check_branch
    %13 = sbr.rel (0) target = $region13
  $region12: #{s2convnet_forward.8} parent=0 // pred_region
    _
  $region13: #{s2convnet_forward.8} parent=0 // pred_fallthru
    _
  %v15 = vld [vmem:[%s0] sm:$0xf]
  %v16 = vld [vmem:[%s0 + $0x4] sm:$0xf]
  %v17 = vld [vmem:[%s0 + $0x8] sm:$0xf]
  %v18 = vld [vmem:[%s0 + $0xc] sm:$0xf]
  %v19 = vld [vmem:[%s0 + $0x10] sm:$0xf]
  %v20 = vld [vmem:[%s0 + $0x14] sm:$0xf]
  %v21 = vld [vmem:[%s0 + $0x18] sm:$0xf]
  %v22 = vld [vmem:[%s0 + $0x1c] sm:$0xf]
  %v23 = vld [vmem:[%s0 + $0x20] sm:$0xf]
  %v24 = vld [vmem:[%s0 + $0x24] sm:$0xf]
  %v25 = vld [vmem:[%s0 + $0x28] sm:$0xf]
  %v26 = vld [vmem:[%s0 + $0x2c] sm:$0xf]
  %v27 = vld [vmem:[%s0 + $0x30] sm:$0xf]
  %v28 = vld [vmem:[%s0 + $0x34] sm:$0xf]
  %v29 = vld [vmem:[%s0 + $0x38] sm:$0xf]
  %v30 = vld [vmem:[%s0 + $0x3c] sm:$0xf]
  %v31 = vld [vmem:[%s0 + $0x40] sm:$0xf]
  %v32 = vld [vmem:[%s0 + $0x44] sm:$0xf]
  %v33 = vld [vmem:[%s0 + $0x48] sm:$0xf]
  %v34 = vld [vmem:[%s0 + $0x4c] sm:$0xf]
  %v35 = vld [vmem:[%s0 + $0x50] sm:$0xf]
  %v36 = vld [vmem:[%s0 + $0x54] sm:$0xf]
  %v37 = vld [vmem:[%s0 + $0x58] sm:$0xf]
  %v38 = vld [vmem:[%s0 + $0x5c] sm:$0xf]
  %v39 = vld [vmem:[%s0 + $0x60] sm:$0xf]
  %v40 = vld [vmem:[%s0 + $0x64] sm:$0xf]
  %v41 = vld [vmem:[%s0 + $0x68] sm:$0xf]
  %v42 = vld [vmem:[%s0 + $0x6c] sm:$0xf]
  %v43 = vld [vmem:[%s0 + $0x70] sm:$0xf]
  %v44 = vld [vmem:[%s0 + $0x74] sm:$0xf]
  %v45 = vld [vmem:[%s0 + $0x78] sm:$0xf]
  %v46 = vld [vmem:[%s0 + $0x7c] sm:$0xf]
  %v47 = vld [vmem:[%s0 + $0x80] sm:$0xf]
  %v48 = vld [vmem:[%s0 + $0x84] sm:$0xf]
  %v49 = vld [vmem:[%s0 + $0x88] sm:$0xf]
  %v50 = vld [vmem:[%s0 + $0x8c] sm:$0xf]
  %v51 = vld [vmem:[%s1] sm:$0xf]
  %v52 = vld [vmem:[%s1 + $0x4] sm:$0xf]
  %v53 = vld [vmem:[%s1 + $0x8] sm:$0x3]
  %v54 = vld [vmem:[%s2] sm:$0x1]
  %v56 = vlaneseq
  %v57 = vshrl.u32 %v56, 7
  %v58 = vsub.s32 0, %v57
  %v59 = vrot.slane %v54, %v58
  %v97 = vunpack.c.l.b16 %v15
  %v98 = vunpack.c.l.b16 %v16
  %v99 = vunpack.c.l.b16 %v17
  %v100 = vunpack.c.l.b16 %v18
  %v101 = vunpack.c.l.b16 %v19
  %v102 = vunpack.c.l.b16 %v20
  %v103 = vunpack.c.l.b16 %v21
  %v104 = vunpack.c.l.b16 %v22
  %v105 = vunpack.c.l.b16 %v23
  %v106 = vunpack.c.l.b16 %v24
  %v107 = vunpack.c.l.b16 %v25
  %v108 = vunpack.c.l.b16 %v26
  %v109 = vunpack.c.l.b16 %v27
  %v110 = vunpack.c.l.b16 %v28
  %v111 = vunpack.c.l.b16 %v29
  %v112 = vunpack.c.l.b16 %v30
  %v113 = vunpack.c.l.b16 %v31
  %v114 = vunpack.c.l.b16 %v32
  %v115 = vunpack.c.l.b16 %v33
  %v116 = vunpack.c.l.b16 %v34
  %v117 = vunpack.c.l.b16 %v35
  %v118 = vunpack.c.l.b16 %v36
  %v119 = vunpack.c.l.b16 %v37
  %v120 = vunpack.c.l.b16 %v38
  %v121 = vunpack.c.l.b16 %v39
  %v122 = vunpack.c.l.b16 %v40
  %v123 = vunpack.c.l.b16 %v41
  %v124 = vunpack.c.l.b16 %v42
  %v125 = vunpack.c.l.b16 %v43
  %v126 = vunpack.c.l.b16 %v44
  %v127 = vunpack.c.l.b16 %v45
  %v128 = vunpack.c.l.b16 %v46
  %v129 = vunpack.c.l.b16 %v47
  %v130 = vunpack.c.l.b16 %v48
  %v131 = vunpack.c.l.b16 %v49
  %v132 = vunpack.c.l.b16 %v50
  %v133 = vpack.c.b16 %v98, %v97
  %v134 = vpack.c.b16 %v100, %v99
  %v135 = vpack.c.b16 %v102, %v101
  %v136 = vpack.c.b16 %v104, %v103
  %v137 = vpack.c.b16 %v106, %v105
  %v138 = vpack.c.b16 %v108, %v107
  %v139 = vpack.c.b16 %v110, %v109
  %v140 = vpack.c.b16 %v112, %v111
  %v141 = vpack.c.b16 %v114, %v113
  %v142 = vpack.c.b16 %v116, %v115
  %v143 = vpack.c.b16 %v118, %v117
  %v144 = vpack.c.b16 %v120, %v119
  %v145 = vpack.c.b16 %v122, %v121
  %v146 = vpack.c.b16 %v124, %v123
  %v147 = vpack.c.b16 %v126, %v125
  %v148 = vpack.c.b16 %v128, %v127
  %v149 = vpack.c.b16 %v130, %v129
  %v150 = vpack.c.b16 %v132, %v131
  %v154 = vunpack.c.l.b16 %v51
  %v155 = vunpack.c.l.b16 %v52
  %v156 = vunpack.c.l.b16 %v53
  %v157 = vpack.c.b16 %v155, %v154
  %v158 = vpack.c.b16 %v156, %v156
  %vm160 = vcmask 162816
  %v162 = vsel %vm160, %v133, 0
  %v165 = vsel %vm160, %v134, 0
  %v168 = vsel %vm160, %v135, 0
  %v171 = vsel %vm160, %v136, 0
  %v174 = vsel %vm160, %v137, 0
  %v177 = vsel %vm160, %v138, 0
  %v180 = vsel %vm160, %v139, 0
  %v183 = vsel %vm160, %v140, 0
  %v186 = vsel %vm160, %v141, 0
  %v189 = vsel %vm160, %v142, 0
  %v192 = vsel %vm160, %v143, 0
  %v195 = vsel %vm160, %v144, 0
  %v198 = vsel %vm160, %v145, 0
  %v201 = vsel %vm160, %v146, 0
  %v204 = vsel %vm160, %v147, 0
  %v207 = vsel %vm160, %v148, 0
  %v210 = vsel %vm160, %v149, 0
  %v213 = vsel %vm160, %v150, 0
  %vm215 = vcmask 1041408
  %v217 = vsel %vm215, %v158, 0
  %219 = vmatprep.subr.bf16.mxu0 0
  %220 = vmatpush1.bf16.msra.mxu0 %v157
  %221 = vmatprep.subr.bf16.mxu0 0
  %222 = vmatpush1.bf16.msra.mxu0 %v217
  %223 = vmatprep.subr.bf16.mxu0 0
  %224 = vmatpush1.bf16.msra.mxu0 0
  %225 = vmatprep.subr.bf16.mxu0 0
  %226 = vmatpush1.bf16.msra.mxu0 0
  %227 = vmatprep.subr.bf16.mxu0 0
  %228 = vmatpush1.bf16.msra.mxu0 0
  %229 = vmatprep.subr.bf16.mxu0 0
  %230 = vmatpush1.bf16.msra.mxu0 0
  %231 = vmatprep.subr.bf16.mxu0 0
  %232 = vmatpush1.bf16.msra.mxu0 0
  %233 = vmatprep.subr.bf16.mxu0 0
  %234 = vmatpush1.bf16.msra.mxu0 0
  %235 = vmatprep.subr.bf16.mxu0 0
  %236 = vmatpush1.bf16.msra.mxu0 0
  %237 = vmatprep.subr.bf16.mxu0 0
  %238 = vmatpush1.bf16.msra.mxu0 0
  %239 = vmatprep.subr.bf16.mxu0 0
  %240 = vmatpush1.bf16.msra.mxu0 0
  %241 = vmatprep.subr.bf16.mxu0 0
  %242 = vmatpush1.bf16.msra.mxu0 0
  %243 = vmatprep.subr.bf16.mxu0 0
  %244 = vmatpush1.bf16.msra.mxu0 0
  %245 = vmatprep.subr.bf16.mxu0 0
  %246 = vmatpush1.bf16.msra.mxu0 0
  %247 = vmatprep.subr.bf16.mxu0 0
  %248 = vmatpush1.bf16.msra.mxu0 0
  %249 = vmatprep.subr.bf16.mxu0 0
  %250 = vmatpush1.bf16.msra.mxu0 0
  %251 = vmatprep.mubr.bf16.mxu0 0
  %252 = vmatmul.mubr.bf16.gmra.mrb[0].mxu0 %v162
  %v253 = vpop.f32.mrb[0].mxu0
  %v254 = vadd.f32 %v59, %v253
  %v255 = vpop.f32.mrb[0].mxu0
  %v256 = vpop.f32.mrb[0].mxu0
  %v257 = vadd.f32 %v59, %v256
  %v258 = vpop.f32.mrb[0].mxu0
  %259 = vmatprep.mubr.bf16.mxu0 0
  %260 = vmatmul.mubr.bf16.gmra.mrb[0].mxu0 %v165
  %v261 = vpop.f32.mrb[0].mxu0
  %v262 = vadd.f32 %v59, %v261
  %v263 = vpop.f32.mrb[0].mxu0
  %v264 = vpop.f32.mrb[0].mxu0
  %v265 = vadd.f32 %v59, %v264
  %v266 = vpop.f32.mrb[0].mxu0
  %267 = vmatprep.mubr.bf16.mxu0 0
  %268 = vmatmul.mubr.bf16.gmra.mrb[0].mxu0 %v168
  %v269 = vpop.f32.mrb[0].mxu0
  %v270 = vadd.f32 %v59, %v269
  %v271 = vpop.f32.mrb[0].mxu0
  %v272 = vpop.f32.mrb[0].mxu0
  %v273 = vadd.f32 %v59, %v272
  %v274 = vpop.f32.mrb[0].mxu0
  %275 = vmatprep.mubr.bf16.mxu0 0
  %276 = vmatmul.mubr.bf16.gmra.mrb[0].mxu0 %v171
  %v277 = vpop.f32.mrb[0].mxu0
  %v278 = vadd.f32 %v59, %v277
  %v279 = vpop.f32.mrb[0].mxu0
  %v280 = vpop.f32.mrb[0].mxu0
  %v281 = vadd.f32 %v59, %v280
  %v282 = vpop.f32.mrb[0].mxu0
  %283 = vmatprep.mubr.bf16.mxu0 0
  %284 = vmatmul.mubr.bf16.gmra.mrb[0].mxu0 %v174
  %v285 = vpop.f32.mrb[0].mxu0
  %v286 = vadd.f32 %v59, %v285
  %v287 = vpop.f32.mrb[0].mxu0
  %v288 = vpop.f32.mrb[0].mxu0
  %v289 = vadd.f32 %v59, %v288
  %v290 = vpop.f32.mrb[0].mxu0
  %291 = vmatprep.mubr.bf16.mxu0 0
  %292 = vmatmul.mubr.bf16.gmra.mrb[0].mxu0 %v177
  %v293 = vpop.f32.mrb[0].mxu0
  %v294 = vadd.f32 %v59, %v293
  %v295 = vpop.f32.mrb[0].mxu0
  %v296 = vpop.f32.mrb[0].mxu0
  %v297 = vadd.f32 %v59, %v296
  %v298 = vpop.f32.mrb[0].mxu0
  %299 = vmatprep.mubr.bf16.mxu0 0
  %300 = vmatmul.mubr.bf16.gmra.mrb[0].mxu0 %v180
  %v301 = vpop.f32.mrb[0].mxu0
  %v302 = vadd.f32 %v59, %v301
  %v303 = vpop.f32.mrb[0].mxu0
  %v304 = vpop.f32.mrb[0].mxu0
  %v305 = vadd.f32 %v59, %v304
  %v306 = vpop.f32.mrb[0].mxu0
  %307 = vmatprep.mubr.bf16.mxu0 0
  %308 = vmatmul.mubr.bf16.gmra.mrb[0].mxu0 %v183
  %v309 = vpop.f32.mrb[0].mxu0
  %v310 = vadd.f32 %v59, %v309
  %v311 = vpop.f32.mrb[0].mxu0
  %v312 = vpop.f32.mrb[0].mxu0
  %v313 = vadd.f32 %v59, %v312
  %v314 = vpop.f32.mrb[0].mxu0
  %315 = vmatprep.mubr.bf16.mxu0 0
  %316 = vmatmul.mubr.bf16.gmra.mrb[0].mxu0 %v186
  %v317 = vpop.f32.mrb[0].mxu0
  %v318 = vadd.f32 %v59, %v317
  %v319 = vpop.f32.mrb[0].mxu0
  %v320 = vpop.f32.mrb[0].mxu0
  %v321 = vadd.f32 %v59, %v320
  %v322 = vpop.f32.mrb[0].mxu0
  %323 = vmatprep.mubr.bf16.mxu0 0
  %324 = vmatmul.mubr.bf16.gmra.mrb[0].mxu0 %v189
  %v325 = vpop.f32.mrb[0].mxu0
  %v326 = vadd.f32 %v59, %v325
  %v327 = vpop.f32.mrb[0].mxu0
  %v328 = vpop.f32.mrb[0].mxu0
  %v329 = vadd.f32 %v59, %v328
  %v330 = vpop.f32.mrb[0].mxu0
  %331 = vmatprep.mubr.bf16.mxu0 0
  %332 = vmatmul.mubr.bf16.gmra.mrb[0].mxu0 %v192
  %v333 = vpop.f32.mrb[0].mxu0
  %v334 = vadd.f32 %v59, %v333
  %v335 = vpop.f32.mrb[0].mxu0
  %v336 = vpop.f32.mrb[0].mxu0
  %v337 = vadd.f32 %v59, %v336
  %v338 = vpop.f32.mrb[0].mxu0
  %339 = vmatprep.mubr.bf16.mxu0 0
  %340 = vmatmul.mubr.bf16.gmra.mrb[0].mxu0 %v195
  %v341 = vpop.f32.mrb[0].mxu0
  %v342 = vadd.f32 %v59, %v341
  %v343 = vpop.f32.mrb[0].mxu0
  %v344 = vpop.f32.mrb[0].mxu0
  %v345 = vadd.f32 %v59, %v344
  %v346 = vpop.f32.mrb[0].mxu0
  %347 = vmatprep.mubr.bf16.mxu0 0
  %348 = vmatmul.mubr.bf16.gmra.mrb[0].mxu0 %v198
  %v349 = vpop.f32.mrb[0].mxu0
  %v350 = vadd.f32 %v59, %v349
  %v351 = vpop.f32.mrb[0].mxu0
  %v352 = vpop.f32.mrb[0].mxu0
  %v353 = vadd.f32 %v59, %v352
  %v354 = vpop.f32.mrb[0].mxu0
  %355 = vmatprep.mubr.bf16.mxu0 0
  %356 = vmatmul.mubr.bf16.gmra.mrb[0].mxu0 %v201
  %v357 = vpop.f32.mrb[0].mxu0
  %v358 = vadd.f32 %v59, %v357
  %v359 = vpop.f32.mrb[0].mxu0
  %v360 = vpop.f32.mrb[0].mxu0
  %v361 = vadd.f32 %v59, %v360
  %v362 = vpop.f32.mrb[0].mxu0
  %363 = vmatprep.mubr.bf16.mxu0 0
  %364 = vmatmul.mubr.bf16.gmra.mrb[0].mxu0 %v204
  %v365 = vpop.f32.mrb[0].mxu0
  %v366 = vadd.f32 %v59, %v365
  %v367 = vpop.f32.mrb[0].mxu0
  %v368 = vpop.f32.mrb[0].mxu0
  %v369 = vadd.f32 %v59, %v368
  %v370 = vpop.f32.mrb[0].mxu0
  %371 = vmatprep.mubr.bf16.mxu0 0
  %372 = vmatmul.mubr.bf16.gmra.mrb[0].mxu0 %v207
  %v373 = vpop.f32.mrb[0].mxu0
  %v374 = vadd.f32 %v59, %v373
  %v375 = vpop.f32.mrb[0].mxu0
  %v376 = vpop.f32.mrb[0].mxu0
  %v377 = vadd.f32 %v59, %v376
  %v378 = vpop.f32.mrb[0].mxu0
  %379 = vmatprep.mubr.bf16.mxu0 0
  %380 = vmatmul.mubr.bf16.gmra.mrb[0].mxu0 %v210
  %v381 = vpop.f32.mrb[0].mxu0
  %v382 = vadd.f32 %v59, %v381
  %v383 = vpop.f32.mrb[0].mxu0
  %v384 = vpop.f32.mrb[0].mxu0
  %v385 = vadd.f32 %v59, %v384
  %v386 = vpop.f32.mrb[0].mxu0
  %387 = vmatprep.mubr.bf16.mxu0 0
  %388 = vmatmul.mubr.bf16.gmra.mrb[0].mxu0 %v213
  %v389 = vpop.f32.mrb[0].mxu0
  %v390 = vadd.f32 %v59, %v389
  %v391 = vpop.f32.mrb[0].mxu0
  %v392 = vpop.f32.mrb[0].mxu0
  %v393 = vadd.f32 %v59, %v392
  %v394 = vpop.f32.mrb[0].mxu0
  %395 = vdwg.mxu0
  %v396 = vmax.f32 %v254, 0.0
  %v397 = vmax.f32 %v257, 0.0
  %v398 = vmax.f32 %v262, 0.0
  %v399 = vmax.f32 %v265, 0.0
  %v400 = vmax.f32 %v270, 0.0
  %v401 = vmax.f32 %v273, 0.0
  %v402 = vmax.f32 %v278, 0.0
  %v403 = vmax.f32 %v281, 0.0
  %v404 = vmax.f32 %v286, 0.0
  %v405 = vmax.f32 %v289, 0.0
  %v406 = vmax.f32 %v294, 0.0
  %v407 = vmax.f32 %v297, 0.0
  %v408 = vmax.f32 %v302, 0.0
  %v409 = vmax.f32 %v305, 0.0
  %v410 = vmax.f32 %v310, 0.0
  %v411 = vmax.f32 %v313, 0.0
  %v412 = vmax.f32 %v318, 0.0
  %v413 = vmax.f32 %v321, 0.0
  %v414 = vmax.f32 %v326, 0.0
  %v415 = vmax.f32 %v329, 0.0
  %v416 = vmax.f32 %v334, 0.0
  %v417 = vmax.f32 %v337, 0.0
  %v418 = vmax.f32 %v342, 0.0
  %v419 = vmax.f32 %v345, 0.0
  %v420 = vmax.f32 %v350, 0.0
  %v421 = vmax.f32 %v353, 0.0
  %v422 = vmax.f32 %v358, 0.0
  %v423 = vmax.f32 %v361, 0.0
  %v424 = vmax.f32 %v366, 0.0
  %v425 = vmax.f32 %v369, 0.0
  %v426 = vmax.f32 %v374, 0.0
  %v427 = vmax.f32 %v377, 0.0
  %v428 = vmax.f32 %v382, 0.0
  %v429 = vmax.f32 %v385, 0.0
  %v430 = vmax.f32 %v390, 0.0
  %v431 = vmax.f32 %v393, 0.0
  %vm432 = vcmask 326656
  %433 = vst.msk [vmem:[%s3] sm:$0xff] %vm432, %v396
  %434 = vst.msk [vmem:[%s3 + $0x8] sm:$0xff] %vm432, %v397
  %435 = vst.msk [vmem:[%s3 + $0x10] sm:$0xff] %vm432, %v398
  %436 = vst.msk [vmem:[%s3 + $0x18] sm:$0xff] %vm432, %v399
  %437 = vst.msk [vmem:[%s3 + $0x20] sm:$0xff] %vm432, %v400
  %438 = vst.msk [vmem:[%s3 + $0x28] sm:$0xff] %vm432, %v401
  %439 = vst.msk [vmem:[%s3 + $0x30] sm:$0xff] %vm432, %v402
  %440 = vst.msk [vmem:[%s3 + $0x38] sm:$0xff] %vm432, %v403
  %441 = vst.msk [vmem:[%s3 + $0x40] sm:$0xff] %vm432, %v404
  %442 = vst.msk [vmem:[%s3 + $0x48] sm:$0xff] %vm432, %v405
  %443 = vst.msk [vmem:[%s3 + $0x50] sm:$0xff] %vm432, %v406
  %444 = vst.msk [vmem:[%s3 + $0x58] sm:$0xff] %vm432, %v407
  %445 = vst.msk [vmem:[%s3 + $0x60] sm:$0xff] %vm432, %v408
  %446 = vst.msk [vmem:[%s3 + $0x68] sm:$0xff] %vm432, %v409
  %447 = vst.msk [vmem:[%s3 + $0x70] sm:$0xff] %vm432, %v410
  %448 = vst.msk [vmem:[%s3 + $0x78] sm:$0xff] %vm432, %v411
  %449 = vst.msk [vmem:[%s3 + $0x80] sm:$0xff] %vm432, %v412
  %450 = vst.msk [vmem:[%s3 + $0x88] sm:$0xff] %vm432, %v413
  %451 = vst.msk [vmem:[%s3 + $0x90] sm:$0xff] %vm432, %v414
  %452 = vst.msk [vmem:[%s3 + $0x98] sm:$0xff] %vm432, %v415
  %453 = vst.msk [vmem:[%s3 + $0xa0] sm:$0xff] %vm432, %v416
  %454 = vst.msk [vmem:[%s3 + $0xa8] sm:$0xff] %vm432, %v417
  %455 = vst.msk [vmem:[%s3 + $0xb0] sm:$0xff] %vm432, %v418
  %456 = vst.msk [vmem:[%s3 + $0xb8] sm:$0xff] %vm432, %v419
  %457 = vst.msk [vmem:[%s3 + $0xc0] sm:$0xff] %vm432, %v420
  %458 = vst.msk [vmem:[%s3 + $0xc8] sm:$0xff] %vm432, %v421
  %459 = vst.msk [vmem:[%s3 + $0xd0] sm:$0xff] %vm432, %v422
  %460 = vst.msk [vmem:[%s3 + $0xd8] sm:$0xff] %vm432, %v423
  %461 = vst.msk [vmem:[%s3 + $0xe0] sm:$0xff] %vm432, %v424
  %462 = vst.msk [vmem:[%s3 + $0xe8] sm:$0xff] %vm432, %v425
  %463 = vst.msk [vmem:[%s3 + $0xf0] sm:$0xff] %vm432, %v426
  %464 = vst.msk [vmem:[%s3 + $0xf8] sm:$0xff] %vm432, %v427
  %465 = vst.msk [vmem:[%s3 + $0x100] sm:$0xff] %vm432, %v428
  %466 = vst.msk [vmem:[%s3 + $0x108] sm:$0xff] %vm432, %v429
  %467 = vst.msk [vmem:[%s3 + $0x110] sm:$0xff] %vm432, %v430
  %468 = vst.msk [vmem:[%s3 + $0x118] sm:$0xff] %vm432, %v431
  // Predicated region
  $region14: #{s2convnet_forward.8} parent=0 // pred_check
    _
  $region15: #{s2convnet_forward.8} parent=0 // pred_check_branch
    %470 = sbr.rel (0) target = $region17
  $region16: #{s2convnet_forward.8} parent=0 // pred_region
    _
  $region17: #{s2convnet_forward.8} parent=0 // pred_fallthru
    _
  // Predicated region
  $region18: #{s2convnet_forward.8} parent=0 // pred_check
    _
  $region19: #{s2convnet_forward.8} parent=0 // pred_check_branch
    %472 = sbr.rel (0) target = $region21
  $region20: #{s2convnet_forward.8} parent=0 // pred_region
    _
  $region21: #{s2convnet_forward.8} parent=0 // pred_fallthru
    _

// kernel: s2convnet_forward.9
$region0: #{s2convnet_forward.9}
  #allocation0 [shape = 'u32[]', space=smem, size = 0x4, offset = 0x4, fixed_abs, tag = 'smem constant byte address 0x4 - core index']
  #allocation1 [shape = 'u32[144,128]{1,0:T(1,128)}', space=vmem, size = 0x12000, scoped, tag = 'internal scratch']
  %s0 = inlined_call_operand.vmem [shape: bf16[208,40], index: 0, kind: input, shape index: {}]
  %s1 = inlined_call_operand.vmem [shape: bf16[40,60], index: 1, kind: input, shape index: {}]
  %s2 = inlined_call_operand.vmem [shape: f32[1,60], index: 2, kind: input, shape index: {}]
  %s3 = inlined_call_operand.vmem [shape: f32[208,60], index: 3, kind: output, shape index: {}]
  %s4 = sld [smem:[#allocation0]]
  $region22: #{s2convnet_forward.9} parent=0
    _
  %s6 = ssub.s32 1, %s4
  %s7 = scalar_select 0, %s6, %s4
  // Predicated region
  $region2: #{s2convnet_forward.9} parent=0 // pred_check
    _
  $region3: #{s2convnet_forward.9} parent=0 // pred_check_branch
    %9 = sbr.rel (0) target = $region5
  $region4: #{s2convnet_forward.9} parent=0 // pred_region
    _
  $region5: #{s2convnet_forward.9} parent=0 // pred_fallthru
    _
  // Predicated region
  $region6: #{s2convnet_forward.9} parent=0 // pred_check
    _
  $region7: #{s2convnet_forward.9} parent=0 // pred_check_branch
    %11 = sbr.rel (0) target = $region9
  $region8: #{s2convnet_forward.9} parent=0 // pred_region
    _
  $region9: #{s2convnet_forward.9} parent=0 // pred_fallthru
    _
  // Predicated region
  $region10: #{s2convnet_forward.9} parent=0 // pred_check
    _
  $region11: #{s2convnet_forward.9} parent=0 // pred_check_branch
    %13 = sbr.rel (0) target = $region13
  $region12: #{s2convnet_forward.9} parent=0 // pred_region
    _
  $region13: #{s2convnet_forward.9} parent=0 // pred_fallthru
    _
  %v15 = vld [vmem:[%s0] sm:$0xf]
  %v16 = vld [vmem:[%s0 + $0x4] sm:$0xf]
  %v17 = vld [vmem:[%s0 + $0x8] sm:$0xf]
  %v18 = vld [vmem:[%s0 + $0xc] sm:$0xf]
  %v19 = vld [vmem:[%s0 + $0x10] sm:$0xf]
  %v20 = vld [vmem:[%s0 + $0x14] sm:$0xf]
  %v21 = vld [vmem:[%s0 + $0x18] sm:$0xf]
  %v22 = vld [vmem:[%s0 + $0x1c] sm:$0xf]
  %v23 = vld [vmem:[%s0 + $0x20] sm:$0xf]
  %v24 = vld [vmem:[%s0 + $0x24] sm:$0xf]
  %v25 = vld [vmem:[%s0 + $0x28] sm:$0xf]
  %v26 = vld [vmem:[%s0 + $0x2c] sm:$0xf]
  %v27 = vld [vmem:[%s0 + $0x30] sm:$0xf]
  %v28 = vld [vmem:[%s0 + $0x34] sm:$0xf]
  %v29 = vld [vmem:[%s0 + $0x38] sm:$0xf]
  %v30 = vld [vmem:[%s0 + $0x3c] sm:$0xf]
  %v31 = vld [vmem:[%s0 + $0x40] sm:$0xf]
  %v32 = vld [vmem:[%s0 + $0x44] sm:$0xf]
  %v33 = vld [vmem:[%s0 + $0x48] sm:$0xf]
  %v34 = vld [vmem:[%s0 + $0x4c] sm:$0xf]
  %v35 = vld [vmem:[%s0 + $0x50] sm:$0xf]
  %v36 = vld [vmem:[%s0 + $0x54] sm:$0xf]
  %v37 = vld [vmem:[%s0 + $0x58] sm:$0xf]
  %v38 = vld [vmem:[%s0 + $0x5c] sm:$0xf]
  %v39 = vld [vmem:[%s0 + $0x60] sm:$0xf]
  %v40 = vld [vmem:[%s0 + $0x64] sm:$0xf]
  %v41 = vld [vmem:[%s1] sm:$0xf]
  %v42 = vld [vmem:[%s1 + $0x4] sm:$0xf]
  %v43 = vld [vmem:[%s1 + $0x8] sm:$0xf]
  %v44 = vld [vmem:[%s1 + $0xc] sm:$0xf]
  %v45 = vld [vmem:[%s1 + $0x10] sm:$0xf]
  %v46 = vld [vmem:[%s2] sm:$0x1]
  %v48 = vlaneseq
  %v49 = vshrl.u32 %v48, 7
  %v50 = vsub.s32 0, %v49
  %v51 = vrot.slane %v46, %v50
  %v79 = vunpack.c.l.b16 %v15
  %v80 = vunpack.c.l.b16 %v16
  %v81 = vunpack.c.l.b16 %v17
  %v82 = vunpack.c.l.b16 %v18
  %v83 = vunpack.c.l.b16 %v19
  %v84 = vunpack.c.l.b16 %v20
  %v85 = vunpack.c.l.b16 %v21
  %v86 = vunpack.c.l.b16 %v22
  %v87 = vunpack.c.l.b16 %v23
  %v88 = vunpack.c.l.b16 %v24
  %v89 = vunpack.c.l.b16 %v25
  %v90 = vunpack.c.l.b16 %v26
  %v91 = vunpack.c.l.b16 %v27
  %v92 = vunpack.c.l.b16 %v28
  %v93 = vunpack.c.l.b16 %v29
  %v94 = vunpack.c.l.b16 %v30
  %v95 = vunpack.c.l.b16 %v31
  %v96 = vunpack.c.l.b16 %v32
  %v97 = vunpack.c.l.b16 %v33
  %v98 = vunpack.c.l.b16 %v34
  %v99 = vunpack.c.l.b16 %v35
  %v100 = vunpack.c.l.b16 %v36
  %v101 = vunpack.c.l.b16 %v37
  %v102 = vunpack.c.l.b16 %v38
  %v103 = vunpack.c.l.b16 %v39
  %v104 = vunpack.c.l.b16 %v40
  %v105 = vpack.c.b16 %v80, %v79
  %v106 = vpack.c.b16 %v82, %v81
  %v107 = vpack.c.b16 %v84, %v83
  %v108 = vpack.c.b16 %v86, %v85
  %v109 = vpack.c.b16 %v88, %v87
  %v110 = vpack.c.b16 %v90, %v89
  %v111 = vpack.c.b16 %v92, %v91
  %v112 = vpack.c.b16 %v94, %v93
  %v113 = vpack.c.b16 %v96, %v95
  %v114 = vpack.c.b16 %v98, %v97
  %v115 = vpack.c.b16 %v100, %v99
  %v116 = vpack.c.b16 %v102, %v101
  %v117 = vpack.c.b16 %v104, %v103
  %v123 = vunpack.c.l.b16 %v41
  %v124 = vunpack.c.l.b16 %v42
  %v125 = vunpack.c.l.b16 %v43
  %v126 = vunpack.c.l.b16 %v44
  %v127 = vunpack.c.l.b16 %v45
  %v128 = vpack.c.b16 %v124, %v123
  %v129 = vpack.c.b16 %v126, %v125
  %v130 = vpack.c.b16 %v127, %v127
  %vm133 = vcmask 326656
  %v135 = vsel %vm133, %v105, 0
  %v138 = vsel %vm133, %v106, 0
  %v141 = vsel %vm133, %v107, 0
  %v144 = vsel %vm133, %v108, 0
  %v147 = vsel %vm133, %v109, 0
  %v150 = vsel %vm133, %v110, 0
  %v153 = vsel %vm133, %v111, 0
  %v156 = vsel %vm133, %v112, 0
  %v159 = vsel %vm133, %v113, 0
  %v162 = vsel %vm133, %v114, 0
  %v165 = vsel %vm133, %v115, 0
  %v168 = vsel %vm133, %v116, 0
  %v171 = vsel %vm133, %v117, 0
  %vm173 = vcmask 1043456
  %v175 = vsel %vm173, %v130, 0
  %177 = vmatprep.subr.bf16.mxu0 0
  %178 = vmatpush1.bf16.msra.mxu0 %v128
  %179 = vmatprep.subr.bf16.mxu0 0
  %180 = vmatpush1.bf16.msra.mxu0 %v129
  %181 = vmatprep.subr.bf16.mxu0 0
  %182 = vmatpush1.bf16.msra.mxu0 %v175
  %183 = vmatprep.subr.bf16.mxu0 0
  %184 = vmatpush1.bf16.msra.mxu0 0
  %185 = vmatprep.subr.bf16.mxu0 0
  %186 = vmatpush1.bf16.msra.mxu0 0
  %187 = vmatprep.subr.bf16.mxu0 0
  %188 = vmatpush1.bf16.msra.mxu0 0
  %189 = vmatprep.subr.bf16.mxu0 0
  %190 = vmatpush1.bf16.msra.mxu0 0
  %191 = vmatprep.subr.bf16.mxu0 0
  %192 = vmatpush1.bf16.msra.mxu0 0
  %193 = vmatprep.subr.bf16.mxu0 0
  %194 = vmatpush1.bf16.msra.mxu0 0
  %195 = vmatprep.subr.bf16.mxu0 0
  %196 = vmatpush1.bf16.msra.mxu0 0
  %197 = vmatprep.subr.bf16.mxu0 0
  %198 = vmatpush1.bf16.msra.mxu0 0
  %199 = vmatprep.subr.bf16.mxu0 0
  %200 = vmatpush1.bf16.msra.mxu0 0
  %201 = vmatprep.subr.bf16.mxu0 0
  %202 = vmatpush1.bf16.msra.mxu0 0
  %203 = vmatprep.subr.bf16.mxu0 0
  %204 = vmatpush1.bf16.msra.mxu0 0
  %205 = vmatprep.subr.bf16.mxu0 0
  %206 = vmatpush1.bf16.msra.mxu0 0
  %207 = vmatprep.subr.bf16.mxu0 0
  %208 = vmatpush1.bf16.msra.mxu0 0
  %209 = vmatprep.mubr.bf16.mxu0 0
  %210 = vmatmul.mubr.bf16.gmra.mrb[0].mxu0 %v135
  %v211 = vpop.f32.mrb[0].mxu0
  %v212 = vadd.f32 %v51, %v211
  %v213 = vpop.f32.mrb[0].mxu0
  %v214 = vpop.f32.mrb[0].mxu0
  %v215 = vadd.f32 %v51, %v214
  %v216 = vpop.f32.mrb[0].mxu0
  %217 = vmatprep.mubr.bf16.mxu0 0
  %218 = vmatmul.mubr.bf16.gmra.mrb[0].mxu0 %v138
  %v219 = vpop.f32.mrb[0].mxu0
  %v220 = vadd.f32 %v51, %v219
  %v221 = vpop.f32.mrb[0].mxu0
  %v222 = vpop.f32.mrb[0].mxu0
  %v223 = vadd.f32 %v51, %v222
  %v224 = vpop.f32.mrb[0].mxu0
  %225 = vmatprep.mubr.bf16.mxu0 0
  %226 = vmatmul.mubr.bf16.gmra.mrb[0].mxu0 %v141
  %v227 = vpop.f32.mrb[0].mxu0
  %v228 = vadd.f32 %v51, %v227
  %v229 = vpop.f32.mrb[0].mxu0
  %v230 = vpop.f32.mrb[0].mxu0
  %v231 = vadd.f32 %v51, %v230
  %v232 = vpop.f32.mrb[0].mxu0
  %233 = vmatprep.mubr.bf16.mxu0 0
  %234 = vmatmul.mubr.bf16.gmra.mrb[0].mxu0 %v144
  %v235 = vpop.f32.mrb[0].mxu0
  %v236 = vadd.f32 %v51, %v235
  %v237 = vpop.f32.mrb[0].mxu0
  %v238 = vpop.f32.mrb[0].mxu0
  %v239 = vadd.f32 %v51, %v238
  %v240 = vpop.f32.mrb[0].mxu0
  %241 = vmatprep.mubr.bf16.mxu0 0
  %242 = vmatmul.mubr.bf16.gmra.mrb[0].mxu0 %v147
  %v243 = vpop.f32.mrb[0].mxu0
  %v244 = vadd.f32 %v51, %v243
  %v245 = vpop.f32.mrb[0].mxu0
  %v246 = vpop.f32.mrb[0].mxu0
  %v247 = vadd.f32 %v51, %v246
  %v248 = vpop.f32.mrb[0].mxu0
  %249 = vmatprep.mubr.bf16.mxu0 0
  %250 = vmatmul.mubr.bf16.gmra.mrb[0].mxu0 %v150
  %v251 = vpop.f32.mrb[0].mxu0
  %v252 = vadd.f32 %v51, %v251
  %v253 = vpop.f32.mrb[0].mxu0
  %v254 = vpop.f32.mrb[0].mxu0
  %v255 = vadd.f32 %v51, %v254
  %v256 = vpop.f32.mrb[0].mxu0
  %257 = vmatprep.mubr.bf16.mxu0 0
  %258 = vmatmul.mubr.bf16.gmra.mrb[0].mxu0 %v153
  %v259 = vpop.f32.mrb[0].mxu0
  %v260 = vadd.f32 %v51, %v259
  %v261 = vpop.f32.mrb[0].mxu0
  %v262 = vpop.f32.mrb[0].mxu0
  %v263 = vadd.f32 %v51, %v262
  %v264 = vpop.f32.mrb[0].mxu0
  %265 = vmatprep.mubr.bf16.mxu0 0
  %266 = vmatmul.mubr.bf16.gmra.mrb[0].mxu0 %v156
  %v267 = vpop.f32.mrb[0].mxu0
  %v268 = vadd.f32 %v51, %v267
  %v269 = vpop.f32.mrb[0].mxu0
  %v270 = vpop.f32.mrb[0].mxu0
  %v271 = vadd.f32 %v51, %v270
  %v272 = vpop.f32.mrb[0].mxu0
  %273 = vmatprep.mubr.bf16.mxu0 0
  %274 = vmatmul.mubr.bf16.gmra.mrb[0].mxu0 %v159
  %v275 = vpop.f32.mrb[0].mxu0
  %v276 = vadd.f32 %v51, %v275
  %v277 = vpop.f32.mrb[0].mxu0
  %v278 = vpop.f32.mrb[0].mxu0
  %v279 = vadd.f32 %v51, %v278
  %v280 = vpop.f32.mrb[0].mxu0
  %281 = vmatprep.mubr.bf16.mxu0 0
  %282 = vmatmul.mubr.bf16.gmra.mrb[0].mxu0 %v162
  %v283 = vpop.f32.mrb[0].mxu0
  %v284 = vadd.f32 %v51, %v283
  %v285 = vpop.f32.mrb[0].mxu0
  %v286 = vpop.f32.mrb[0].mxu0
  %v287 = vadd.f32 %v51, %v286
  %v288 = vpop.f32.mrb[0].mxu0
  %289 = vmatprep.mubr.bf16.mxu0 0
  %290 = vmatmul.mubr.bf16.gmra.mrb[0].mxu0 %v165
  %v291 = vpop.f32.mrb[0].mxu0
  %v292 = vadd.f32 %v51, %v291
  %v293 = vpop.f32.mrb[0].mxu0
  %v294 = vpop.f32.mrb[0].mxu0
  %v295 = vadd.f32 %v51, %v294
  %v296 = vpop.f32.mrb[0].mxu0
  %297 = vmatprep.mubr.bf16.mxu0 0
  %298 = vmatmul.mubr.bf16.gmra.mrb[0].mxu0 %v168
  %v299 = vpop.f32.mrb[0].mxu0
  %v300 = vadd.f32 %v51, %v299
  %v301 = vpop.f32.mrb[0].mxu0
  %v302 = vpop.f32.mrb[0].mxu0
  %v303 = vadd.f32 %v51, %v302
  %v304 = vpop.f32.mrb[0].mxu0
  %305 = vmatprep.mubr.bf16.mxu0 0
  %306 = vmatmul.mubr.bf16.gmra.mrb[0].mxu0 %v171
  %v307 = vpop.f32.mrb[0].mxu0
  %v308 = vadd.f32 %v51, %v307
  %v309 = vpop.f32.mrb[0].mxu0
  %v310 = vpop.f32.mrb[0].mxu0
  %v311 = vadd.f32 %v51, %v310
  %v312 = vpop.f32.mrb[0].mxu0
  %313 = vdwg.mxu0
  %v314 = vmax.f32 %v212, 0.0
  %v315 = vmax.f32 %v215, 0.0
  %v316 = vmax.f32 %v220, 0.0
  %v317 = vmax.f32 %v223, 0.0
  %v318 = vmax.f32 %v228, 0.0
  %v319 = vmax.f32 %v231, 0.0
  %v320 = vmax.f32 %v236, 0.0
  %v321 = vmax.f32 %v239, 0.0
  %v322 = vmax.f32 %v244, 0.0
  %v323 = vmax.f32 %v247, 0.0
  %v324 = vmax.f32 %v252, 0.0
  %v325 = vmax.f32 %v255, 0.0
  %v326 = vmax.f32 %v260, 0.0
  %v327 = vmax.f32 %v263, 0.0
  %v328 = vmax.f32 %v268, 0.0
  %v329 = vmax.f32 %v271, 0.0
  %v330 = vmax.f32 %v276, 0.0
  %v331 = vmax.f32 %v279, 0.0
  %v332 = vmax.f32 %v284, 0.0
  %v333 = vmax.f32 %v287, 0.0
  %v334 = vmax.f32 %v292, 0.0
  %v335 = vmax.f32 %v295, 0.0
  %v336 = vmax.f32 %v300, 0.0
  %v337 = vmax.f32 %v303, 0.0
  %v338 = vmax.f32 %v308, 0.0
  %v339 = vmax.f32 %v311, 0.0
  %vm340 = vcmask 490496
  %341 = vst.msk [vmem:[%s3] sm:$0xff] %vm340, %v314
  %342 = vst.msk [vmem:[%s3 + $0x8] sm:$0xff] %vm340, %v315
  %343 = vst.msk [vmem:[%s3 + $0x10] sm:$0xff] %vm340, %v316
  %344 = vst.msk [vmem:[%s3 + $0x18] sm:$0xff] %vm340, %v317
  %345 = vst.msk [vmem:[%s3 + $0x20] sm:$0xff] %vm340, %v318
  %346 = vst.msk [vmem:[%s3 + $0x28] sm:$0xff] %vm340, %v319
  %347 = vst.msk [vmem:[%s3 + $0x30] sm:$0xff] %vm340, %v320
  %348 = vst.msk [vmem:[%s3 + $0x38] sm:$0xff] %vm340, %v321
  %349 = vst.msk [vmem:[%s3 + $0x40] sm:$0xff] %vm340, %v322
  %350 = vst.msk [vmem:[%s3 + $0x48] sm:$0xff] %vm340, %v323
  %351 = vst.msk [vmem:[%s3 + $0x50] sm:$0xff] %vm340, %v324
  %352 = vst.msk [vmem:[%s3 + $0x58] sm:$0xff] %vm340, %v325
  %353 = vst.msk [vmem:[%s3 + $0x60] sm:$0xff] %vm340, %v326
  %354 = vst.msk [vmem:[%s3 + $0x68] sm:$0xff] %vm340, %v327
  %355 = vst.msk [vmem:[%s3 + $0x70] sm:$0xff] %vm340, %v328
  %356 = vst.msk [vmem:[%s3 + $0x78] sm:$0xff] %vm340, %v329
  %357 = vst.msk [vmem:[%s3 + $0x80] sm:$0xff] %vm340, %v330
  %358 = vst.msk [vmem:[%s3 + $0x88] sm:$0xff] %vm340, %v331
  %359 = vst.msk [vmem:[%s3 + $0x90] sm:$0xff] %vm340, %v332
  %360 = vst.msk [vmem:[%s3 + $0x98] sm:$0xff] %vm340, %v333
  %361 = vst.msk [vmem:[%s3 + $0xa0] sm:$0xff] %vm340, %v334
  %362 = vst.msk [vmem:[%s3 + $0xa8] sm:$0xff] %vm340, %v335
  %363 = vst.msk [vmem:[%s3 + $0xb0] sm:$0xff] %vm340, %v336
  %364 = vst.msk [vmem:[%s3 + $0xb8] sm:$0xff] %vm340, %v337
  %365 = vst.msk [vmem:[%s3 + $0xc0] sm:$0xff] %vm340, %v338
  %366 = vst.msk [vmem:[%s3 + $0xc8] sm:$0xff] %vm340, %v339
  // Predicated region
  $region14: #{s2convnet_forward.9} parent=0 // pred_check
    _
  $region15: #{s2convnet_forward.9} parent=0 // pred_check_branch
    %368 = sbr.rel (0) target = $region17
  $region16: #{s2convnet_forward.9} parent=0 // pred_region
    _
  $region17: #{s2convnet_forward.9} parent=0 // pred_fallthru
    _
  // Predicated region
  $region18: #{s2convnet_forward.9} parent=0 // pred_check
    _
  $region19: #{s2convnet_forward.9} parent=0 // pred_check_branch
    %370 = sbr.rel (0) target = $region21
  $region20: #{s2convnet_forward.9} parent=0 // pred_region
    _
  $region21: #{s2convnet_forward.9} parent=0 // pred_fallthru
    _

// kernel: s2convnet_forward.10
$region0: #{s2convnet_forward.10}
  #allocation0 [shape = 'u32[]', space=smem, size = 0x4, offset = 0x4, fixed_abs, tag = 'smem constant byte address 0x4 - core index']
  #allocation1 [shape = 'u32[144,128]{1,0:T(1,128)}', space=vmem, size = 0x12000, scoped, tag = 'internal scratch']
  %s0 = inlined_call_operand.vmem [shape: bf16[128,60], index: 0, kind: input, shape index: {}]
  %s1 = inlined_call_operand.vmem [shape: bf16[60,128], index: 1, kind: input, shape index: {}]
  %s2 = inlined_call_operand.vmem [shape: f32[1,128], index: 2, kind: input, shape index: {}]
  %s3 = inlined_call_operand.vmem [shape: f32[128,128], index: 3, kind: output, shape index: {}]
  %s4 = sld [smem:[#allocation0]]
  $region22: #{s2convnet_forward.10} parent=0
    _
  %s6 = ssub.s32 1, %s4
  %s7 = scalar_select 0, %s6, %s4
  // Predicated region
  $region2: #{s2convnet_forward.10} parent=0 // pred_check
    _
  $region3: #{s2convnet_forward.10} parent=0 // pred_check_branch
    %9 = sbr.rel (0) target = $region5
  $region4: #{s2convnet_forward.10} parent=0 // pred_region
    _
  $region5: #{s2convnet_forward.10} parent=0 // pred_fallthru
    _
  // Predicated region
  $region6: #{s2convnet_forward.10} parent=0 // pred_check
    _
  $region7: #{s2convnet_forward.10} parent=0 // pred_check_branch
    %11 = sbr.rel (0) target = $region9
  $region8: #{s2convnet_forward.10} parent=0 // pred_region
    _
  $region9: #{s2convnet_forward.10} parent=0 // pred_fallthru
    _
  // Predicated region
  $region10: #{s2convnet_forward.10} parent=0 // pred_check
    _
  $region11: #{s2convnet_forward.10} parent=0 // pred_check_branch
    %13 = sbr.rel (0) target = $region13
  $region12: #{s2convnet_forward.10} parent=0 // pred_region
    _
  $region13: #{s2convnet_forward.10} parent=0 // pred_fallthru
    _
  %v15 = vld [vmem:[%s0] sm:$0xf]
  %v16 = vld [vmem:[%s0 + $0x4] sm:$0xf]
  %v17 = vld [vmem:[%s0 + $0x8] sm:$0xf]
  %v18 = vld [vmem:[%s0 + $0xc] sm:$0xf]
  %v19 = vld [vmem:[%s0 + $0x10] sm:$0xf]
  %v20 = vld [vmem:[%s0 + $0x14] sm:$0xf]
  %v21 = vld [vmem:[%s0 + $0x18] sm:$0xf]
  %v22 = vld [vmem:[%s0 + $0x1c] sm:$0xf]
  %v23 = vld [vmem:[%s0 + $0x20] sm:$0xf]
  %v24 = vld [vmem:[%s0 + $0x24] sm:$0xf]
  %v25 = vld [vmem:[%s0 + $0x28] sm:$0xf]
  %v26 = vld [vmem:[%s0 + $0x2c] sm:$0xf]
  %v27 = vld [vmem:[%s0 + $0x30] sm:$0xf]
  %v28 = vld [vmem:[%s0 + $0x34] sm:$0xf]
  %v29 = vld [vmem:[%s0 + $0x38] sm:$0xf]
  %v30 = vld [vmem:[%s0 + $0x3c] sm:$0xf]
  %v31 = vld [vmem:[%s1] sm:$0xf]
  %v32 = vld [vmem:[%s1 + $0x4] sm:$0xf]
  %v33 = vld [vmem:[%s1 + $0x8] sm:$0xf]
  %v34 = vld [vmem:[%s1 + $0xc] sm:$0xf]
  %v35 = vld [vmem:[%s1 + $0x10] sm:$0xf]
  %v36 = vld [vmem:[%s1 + $0x14] sm:$0xf]
  %v37 = vld [vmem:[%s1 + $0x18] sm:$0xf]
  %v38 = vld [vmem:[%s1 + $0x1c] sm:$0x3]
  %v39 = vld [vmem:[%s2] sm:$0x1]
  %v41 = vlaneseq
  %v42 = vshrl.u32 %v41, 7
  %v43 = vsub.s32 0, %v42
  %v44 = vrot.slane %v39, %v43
  %v62 = vunpack.c.l.b16 %v15
  %v63 = vunpack.c.l.b16 %v16
  %v64 = vunpack.c.l.b16 %v17
  %v65 = vunpack.c.l.b16 %v18
  %v66 = vunpack.c.l.b16 %v19
  %v67 = vunpack.c.l.b16 %v20
  %v68 = vunpack.c.l.b16 %v21
  %v69 = vunpack.c.l.b16 %v22
  %v70 = vunpack.c.l.b16 %v23
  %v71 = vunpack.c.l.b16 %v24
  %v72 = vunpack.c.l.b16 %v25
  %v73 = vunpack.c.l.b16 %v26
  %v74 = vunpack.c.l.b16 %v27
  %v75 = vunpack.c.l.b16 %v28
  %v76 = vunpack.c.l.b16 %v29
  %v77 = vunpack.c.l.b16 %v30
  %v78 = vpack.c.b16 %v63, %v62
  %v79 = vpack.c.b16 %v65, %v64
  %v80 = vpack.c.b16 %v67, %v66
  %v81 = vpack.c.b16 %v69, %v68
  %v82 = vpack.c.b16 %v71, %v70
  %v83 = vpack.c.b16 %v73, %v72
  %v84 = vpack.c.b16 %v75, %v74
  %v85 = vpack.c.b16 %v77, %v76
  %v94 = vunpack.c.l.b16 %v31
  %v95 = vunpack.c.l.b16 %v32
  %v96 = vunpack.c.l.b16 %v33
  %v97 = vunpack.c.l.b16 %v34
  %v98 = vunpack.c.l.b16 %v35
  %v99 = vunpack.c.l.b16 %v36
  %v100 = vunpack.c.l.b16 %v37
  %v101 = vunpack.c.l.b16 %v38
  %v102 = vpack.c.b16 %v95, %v94
  %v103 = vpack.c.b16 %v97, %v96
  %v104 = vpack.c.b16 %v99, %v98
  %v105 = vpack.c.b16 %v101, %v100
  %vm109 = vcmask 490496
  %v111 = vsel %vm109, %v78, 0
  %v114 = vsel %vm109, %v79, 0
  %v117 = vsel %vm109, %v80, 0
  %v120 = vsel %vm109, %v81, 0
  %v123 = vsel %vm109, %v82, 0
  %v126 = vsel %vm109, %v83, 0
  %v129 = vsel %vm109, %v84, 0
  %v132 = vsel %vm109, %v85, 0
  %vm134 = vcmask 1045504
  %v136 = vsel %vm134, %v105, 0
  %138 = vmatprep.subr.bf16.mxu0 0
  %139 = vmatpush1.bf16.msra.mxu0 %v102
  %140 = vmatprep.subr.bf16.mxu0 0
  %141 = vmatpush1.bf16.msra.mxu0 %v103
  %142 = vmatprep.subr.bf16.mxu0 0
  %143 = vmatpush1.bf16.msra.mxu0 %v104
  %144 = vmatprep.subr.bf16.mxu0 0
  %145 = vmatpush1.bf16.msra.mxu0 %v136
  %146 = vmatprep.subr.bf16.mxu0 0
  %147 = vmatpush1.bf16.msra.mxu0 0
  %148 = vmatprep.subr.bf16.mxu0 0
  %149 = vmatpush1.bf16.msra.mxu0 0
  %150 = vmatprep.subr.bf16.mxu0 0
  %151 = vmatpush1.bf16.msra.mxu0 0
  %152 = vmatprep.subr.bf16.mxu0 0
  %153 = vmatpush1.bf16.msra.mxu0 0
  %154 = vmatprep.subr.bf16.mxu0 0
  %155 = vmatpush1.bf16.msra.mxu0 0
  %156 = vmatprep.subr.bf16.mxu0 0
  %157 = vmatpush1.bf16.msra.mxu0 0
  %158 = vmatprep.subr.bf16.mxu0 0
  %159 = vmatpush1.bf16.msra.mxu0 0
  %160 = vmatprep.subr.bf16.mxu0 0
  %161 = vmatpush1.bf16.msra.mxu0 0
  %162 = vmatprep.subr.bf16.mxu0 0
  %163 = vmatpush1.bf16.msra.mxu0 0
  %164 = vmatprep.subr.bf16.mxu0 0
  %165 = vmatpush1.bf16.msra.mxu0 0
  %166 = vmatprep.subr.bf16.mxu0 0
  %167 = vmatpush1.bf16.msra.mxu0 0
  %168 = vmatprep.subr.bf16.mxu0 0
  %169 = vmatpush1.bf16.msra.mxu0 0
  %170 = vmatprep.mubr.bf16.mxu0 0
  %171 = vmatmul.mubr.bf16.gmra.mrb[0].mxu0 %v111
  %v172 = vpop.f32.mrb[0].mxu0
  %v173 = vadd.f32 %v44, %v172
  %v174 = vpop.f32.mrb[0].mxu0
  %v175 = vpop.f32.mrb[0].mxu0
  %v176 = vadd.f32 %v44, %v175
  %v177 = vpop.f32.mrb[0].mxu0
  %178 = vmatprep.mubr.bf16.mxu0 0
  %179 = vmatmul.mubr.bf16.gmra.mrb[0].mxu0 %v114
  %v180 = vpop.f32.mrb[0].mxu0
  %v181 = vadd.f32 %v44, %v180
  %v182 = vpop.f32.mrb[0].mxu0
  %v183 = vpop.f32.mrb[0].mxu0
  %v184 = vadd.f32 %v44, %v183
  %v185 = vpop.f32.mrb[0].mxu0
  %186 = vmatprep.mubr.bf16.mxu0 0
  %187 = vmatmul.mubr.bf16.gmra.mrb[0].mxu0 %v117
  %v188 = vpop.f32.mrb[0].mxu0
  %v189 = vadd.f32 %v44, %v188
  %v190 = vpop.f32.mrb[0].mxu0
  %v191 = vpop.f32.mrb[0].mxu0
  %v192 = vadd.f32 %v44, %v191
  %v193 = vpop.f32.mrb[0].mxu0
  %194 = vmatprep.mubr.bf16.mxu0 0
  %195 = vmatmul.mubr.bf16.gmra.mrb[0].mxu0 %v120
  %v196 = vpop.f32.mrb[0].mxu0
  %v197 = vadd.f32 %v44, %v196
  %v198 = vpop.f32.mrb[0].mxu0
  %v199 = vpop.f32.mrb[0].mxu0
  %v200 = vadd.f32 %v44, %v199
  %v201 = vpop.f32.mrb[0].mxu0
  %202 = vmatprep.mubr.bf16.mxu0 0
  %203 = vmatmul.mubr.bf16.gmra.mrb[0].mxu0 %v123
  %v204 = vpop.f32.mrb[0].mxu0
  %v205 = vadd.f32 %v44, %v204
  %v206 = vpop.f32.mrb[0].mxu0
  %v207 = vpop.f32.mrb[0].mxu0
  %v208 = vadd.f32 %v44, %v207
  %v209 = vpop.f32.mrb[0].mxu0
  %210 = vmatprep.mubr.bf16.mxu0 0
  %211 = vmatmul.mubr.bf16.gmra.mrb[0].mxu0 %v126
  %v212 = vpop.f32.mrb[0].mxu0
  %v213 = vadd.f32 %v44, %v212
  %v214 = vpop.f32.mrb[0].mxu0
  %v215 = vpop.f32.mrb[0].mxu0
  %v216 = vadd.f32 %v44, %v215
  %v217 = vpop.f32.mrb[0].mxu0
  %218 = vmatprep.mubr.bf16.mxu0 0
  %219 = vmatmul.mubr.bf16.gmra.mrb[0].mxu0 %v129
  %v220 = vpop.f32.mrb[0].mxu0
  %v221 = vadd.f32 %v44, %v220
  %v222 = vpop.f32.mrb[0].mxu0
  %v223 = vpop.f32.mrb[0].mxu0
  %v224 = vadd.f32 %v44, %v223
  %v225 = vpop.f32.mrb[0].mxu0
  %226 = vmatprep.mubr.bf16.mxu0 0
  %227 = vmatmul.mubr.bf16.gmra.mrb[0].mxu0 %v132
  %v228 = vpop.f32.mrb[0].mxu0
  %v229 = vadd.f32 %v44, %v228
  %v230 = vpop.f32.mrb[0].mxu0
  %v231 = vpop.f32.mrb[0].mxu0
  %v232 = vadd.f32 %v44, %v231
  %v233 = vpop.f32.mrb[0].mxu0
  %234 = vdwg.mxu0
  %v235 = vmax.f32 %v173, 0.0
  %v236 = vmax.f32 %v176, 0.0
  %v237 = vmax.f32 %v181, 0.0
  %v238 = vmax.f32 %v184, 0.0
  %v239 = vmax.f32 %v189, 0.0
  %v240 = vmax.f32 %v192, 0.0
  %v241 = vmax.f32 %v197, 0.0
  %v242 = vmax.f32 %v200, 0.0
  %v243 = vmax.f32 %v205, 0.0
  %v244 = vmax.f32 %v208, 0.0
  %v245 = vmax.f32 %v213, 0.0
  %v246 = vmax.f32 %v216, 0.0
  %v247 = vmax.f32 %v221, 0.0
  %v248 = vmax.f32 %v224, 0.0
  %v249 = vmax.f32 %v229, 0.0
  %v250 = vmax.f32 %v232, 0.0
  %251 = vst [vmem:[%s3] sm:$0xff] %v235
  %252 = vst [vmem:[%s3 + $0x8] sm:$0xff] %v236
  %253 = vst [vmem:[%s3 + $0x10] sm:$0xff] %v237
  %254 = vst [vmem:[%s3 + $0x18] sm:$0xff] %v238
  %255 = vst [vmem:[%s3 + $0x20] sm:$0xff] %v239
  %256 = vst [vmem:[%s3 + $0x28] sm:$0xff] %v240
  %257 = vst [vmem:[%s3 + $0x30] sm:$0xff] %v241
  %258 = vst [vmem:[%s3 + $0x38] sm:$0xff] %v242
  %259 = vst [vmem:[%s3 + $0x40] sm:$0xff] %v243
  %260 = vst [vmem:[%s3 + $0x48] sm:$0xff] %v244
  %261 = vst [vmem:[%s3 + $0x50] sm:$0xff] %v245
  %262 = vst [vmem:[%s3 + $0x58] sm:$0xff] %v246
  %263 = vst [vmem:[%s3 + $0x60] sm:$0xff] %v247
  %264 = vst [vmem:[%s3 + $0x68] sm:$0xff] %v248
  %265 = vst [vmem:[%s3 + $0x70] sm:$0xff] %v249
  %266 = vst [vmem:[%s3 + $0x78] sm:$0xff] %v250
  // Predicated region
  $region14: #{s2convnet_forward.10} parent=0 // pred_check
    _
  $region15: #{s2convnet_forward.10} parent=0 // pred_check_branch
    %268 = sbr.rel (0) target = $region17
  $region16: #{s2convnet_forward.10} parent=0 // pred_region
    _
  $region17: #{s2convnet_forward.10} parent=0 // pred_fallthru
    _
  // Predicated region
  $region18: #{s2convnet_forward.10} parent=0 // pred_check
    _
  $region19: #{s2convnet_forward.10} parent=0 // pred_check_branch
    %270 = sbr.rel (0) target = $region21
  $region20: #{s2convnet_forward.10} parent=0 // pred_region
    _
  $region21: #{s2convnet_forward.10} parent=0 // pred_fallthru
    _

// kernel: s2convnet_forward.11
$region0: #{s2convnet_forward.11}
  #allocation0 [shape = 'u32[]', space=smem, size = 0x4, offset = 0x4, fixed_abs, tag = 'smem constant byte address 0x4 - core index']
  #allocation1 [shape = 'u32[144,128]{1,0:T(1,128)}', space=vmem, size = 0x12000, scoped, tag = 'internal scratch']
  %s0 = inlined_call_operand.vmem [shape: bf16[80,128], index: 0, kind: input, shape index: {}]
  %s1 = inlined_call_operand.vmem [shape: bf16[128,256], index: 1, kind: input, shape index: {}]
  %s2 = inlined_call_operand.vmem [shape: f32[1,256], index: 2, kind: input, shape index: {}]
  %s3 = inlined_call_operand.vmem [shape: f32[80,256], index: 3, kind: output, shape index: {}]
  %s4 = sld [smem:[#allocation0]]
  $region22: #{s2convnet_forward.11} parent=0
    _
  %s6 = ssub.s32 1, %s4
  %s7 = scalar_select 0, %s6, %s4
  // Predicated region
  $region2: #{s2convnet_forward.11} parent=0 // pred_check
    _
  $region3: #{s2convnet_forward.11} parent=0 // pred_check_branch
    %9 = sbr.rel (0) target = $region5
  $region4: #{s2convnet_forward.11} parent=0 // pred_region
    _
  $region5: #{s2convnet_forward.11} parent=0 // pred_fallthru
    _
  // Predicated region
  $region6: #{s2convnet_forward.11} parent=0 // pred_check
    _
  $region7: #{s2convnet_forward.11} parent=0 // pred_check_branch
    %11 = sbr.rel (0) target = $region9
  $region8: #{s2convnet_forward.11} parent=0 // pred_region
    _
  $region9: #{s2convnet_forward.11} parent=0 // pred_fallthru
    _
  // Predicated region
  $region10: #{s2convnet_forward.11} parent=0 // pred_check
    _
  $region11: #{s2convnet_forward.11} parent=0 // pred_check_branch
    %13 = sbr.rel (0) target = $region13
  $region12: #{s2convnet_forward.11} parent=0 // pred_region
    _
  $region13: #{s2convnet_forward.11} parent=0 // pred_fallthru
    _
  %v15 = vld [vmem:[%s0] sm:$0xf]
  %v16 = vld [vmem:[%s0 + $0x4] sm:$0xf]
  %v17 = vld [vmem:[%s0 + $0x8] sm:$0xf]
  %v18 = vld [vmem:[%s0 + $0xc] sm:$0xf]
  %v19 = vld [vmem:[%s0 + $0x10] sm:$0xf]
  %v20 = vld [vmem:[%s0 + $0x14] sm:$0xf]
  %v21 = vld [vmem:[%s0 + $0x18] sm:$0xf]
  %v22 = vld [vmem:[%s0 + $0x1c] sm:$0xf]
  %v23 = vld [vmem:[%s0 + $0x20] sm:$0xf]
  %v24 = vld [vmem:[%s0 + $0x24] sm:$0xf]
  %v25 = vld [vmem:[%s1] sm:$0xff]
  %v26 = vld [vmem:[%s1 + $0x8] sm:$0xff]
  %v27 = vld [vmem:[%s1 + $0x10] sm:$0xff]
  %v28 = vld [vmem:[%s1 + $0x18] sm:$0xff]
  %v29 = vld [vmem:[%s1 + $0x20] sm:$0xff]
  %v30 = vld [vmem:[%s1 + $0x28] sm:$0xff]
  %v31 = vld [vmem:[%s1 + $0x30] sm:$0xff]
  %v32 = vld [vmem:[%s1 + $0x38] sm:$0xff]
  %v33 = vld [vmem:[%s1 + $0x40] sm:$0xff]
  %v34 = vld [vmem:[%s1 + $0x48] sm:$0xff]
  %v35 = vld [vmem:[%s1 + $0x50] sm:$0xff]
  %v36 = vld [vmem:[%s1 + $0x58] sm:$0xff]
  %v37 = vld [vmem:[%s1 + $0x60] sm:$0xff]
  %v38 = vld [vmem:[%s1 + $0x68] sm:$0xff]
  %v39 = vld [vmem:[%s1 + $0x70] sm:$0xff]
  %v40 = vld [vmem:[%s1 + $0x78] sm:$0xff]
  %v41 = vld [vmem:[%s2] sm:$0x3]
  %v43 = vlaneseq
  %v44 = vshrl.u32 %v43, 7
  %v45 = vsub.s32 0, %v44
  %v46 = vrot.slane %v41, %v45
  %v47 = vlaneseq
  %v48 = vshrl.u32 %v47, 7
  %v49 = vsub.s32 1, %v48
  %v50 = vrot.slane %v41, %v49
  %v63 = vunpack.c.l.b16 %v15
  %v64 = vunpack.c.l.b16 %v16
  %v65 = vunpack.c.l.b16 %v17
  %v66 = vunpack.c.l.b16 %v18
  %v67 = vunpack.c.l.b16 %v19
  %v68 = vunpack.c.l.b16 %v20
  %v69 = vunpack.c.l.b16 %v21
  %v70 = vunpack.c.l.b16 %v22
  %v71 = vunpack.c.l.b16 %v23
  %v72 = vunpack.c.l.b16 %v24
  %v73 = vpack.c.b16 %v64, %v63
  %v74 = vpack.c.b16 %v66, %v65
  %v75 = vpack.c.b16 %v68, %v67
  %v76 = vpack.c.b16 %v70, %v69
  %v77 = vpack.c.b16 %v72, %v71
  %v99 = vunpack.c.l.b16 %v25
  %v100 = vunpack.c.h.b16 %v25
  %v101 = vunpack.c.l.b16 %v26
  %v102 = vunpack.c.h.b16 %v26
  %v103 = vunpack.c.l.b16 %v27
  %v104 = vunpack.c.h.b16 %v27
  %v105 = vunpack.c.l.b16 %v28
  %v106 = vunpack.c.h.b16 %v28
  %v107 = vunpack.c.l.b16 %v29
  %v108 = vunpack.c.h.b16 %v29
  %v109 = vunpack.c.l.b16 %v30
  %v110 = vunpack.c.h.b16 %v30
  %v111 = vunpack.c.l.b16 %v31
  %v112 = vunpack.c.h.b16 %v31
  %v113 = vunpack.c.l.b16 %v32
  %v114 = vunpack.c.h.b16 %v32
  %v115 = vunpack.c.l.b16 %v33
  %v116 = vunpack.c.h.b16 %v33
  %v117 = vunpack.c.l.b16 %v34
  %v118 = vunpack.c.h.b16 %v34
  %v119 = vunpack.c.l.b16 %v35
  %v120 = vunpack.c.h.b16 %v35
  %v121 = vunpack.c.l.b16 %v36
  %v122 = vunpack.c.h.b16 %v36
  %v123 = vunpack.c.l.b16 %v37
  %v124 = vunpack.c.h.b16 %v37
  %v125 = vunpack.c.l.b16 %v38
  %v126 = vunpack.c.h.b16 %v38
  %v127 = vunpack.c.l.b16 %v39
  %v128 = vunpack.c.h.b16 %v39
  %v129 = vunpack.c.l.b16 %v40
  %v130 = vunpack.c.h.b16 %v40
  %v131 = vpack.c.b16 %v101, %v99
  %v132 = vpack.c.b16 %v102, %v100
  %v133 = vpack.c.b16 %v105, %v103
  %v134 = vpack.c.b16 %v106, %v104
  %v135 = vpack.c.b16 %v109, %v107
  %v136 = vpack.c.b16 %v110, %v108
  %v137 = vpack.c.b16 %v113, %v111
  %v138 = vpack.c.b16 %v114, %v112
  %v139 = vpack.c.b16 %v117, %v115
  %v140 = vpack.c.b16 %v118, %v116
  %v141 = vpack.c.b16 %v121, %v119
  %v142 = vpack.c.b16 %v122, %v120
  %v143 = vpack.c.b16 %v125, %v123
  %v144 = vpack.c.b16 %v126, %v124
  %v145 = vpack.c.b16 %v129, %v127
  %v146 = vpack.c.b16 %v130, %v128
  %163 = vmatprep.subr.bf16.mxu0 %v132
  %164 = vmatpush1.bf16.msra.mxu0 %v131
  %165 = vmatprep.subr.bf16.mxu0 %v134
  %166 = vmatpush1.bf16.msra.mxu0 %v133
  %167 = vmatprep.subr.bf16.mxu0 %v136
  %168 = vmatpush1.bf16.msra.mxu0 %v135
  %169 = vmatprep.subr.bf16.mxu0 %v138
  %170 = vmatpush1.bf16.msra.mxu0 %v137
  %171 = vmatprep.subr.bf16.mxu0 %v140
  %172 = vmatpush1.bf16.msra.mxu0 %v139
  %173 = vmatprep.subr.bf16.mxu0 %v142
  %174 = vmatpush1.bf16.msra.mxu0 %v141
  %175 = vmatprep.subr.bf16.mxu0 %v144
  %176 = vmatpush1.bf16.msra.mxu0 %v143
  %177 = vmatprep.subr.bf16.mxu0 %v146
  %178 = vmatpush1.bf16.msra.mxu0 %v145
  %179 = vmatprep.subr.bf16.mxu0 0
  %180 = vmatpush1.bf16.msra.mxu0 0
  %181 = vmatprep.subr.bf16.mxu0 0
  %182 = vmatpush1.bf16.msra.mxu0 0
  %183 = vmatprep.subr.bf16.mxu0 0
  %184 = vmatpush1.bf16.msra.mxu0 0
  %185 = vmatprep.subr.bf16.mxu0 0
  %186 = vmatpush1.bf16.msra.mxu0 0
  %187 = vmatprep.subr.bf16.mxu0 0
  %188 = vmatpush1.bf16.msra.mxu0 0
  %189 = vmatprep.subr.bf16.mxu0 0
  %190 = vmatpush1.bf16.msra.mxu0 0
  %191 = vmatprep.subr.bf16.mxu0 0
  %192 = vmatpush1.bf16.msra.mxu0 0
  %193 = vmatprep.subr.bf16.mxu0 0
  %194 = vmatpush1.bf16.msra.mxu0 0
  %195 = vmatprep.mubr.bf16.mxu0 0
  %196 = vmatmul.mubr.bf16.gmra.mrb[0].mxu0 %v73
  %v197 = vpop.f32.mrb[0].mxu0
  %v198 = vadd.f32 %v46, %v197
  %v199 = vpop.f32.mrb[0].mxu0
  %v200 = vadd.f32 %v50, %v199
  %v201 = vpop.f32.mrb[0].mxu0
  %v202 = vadd.f32 %v46, %v201
  %v203 = vpop.f32.mrb[0].mxu0
  %v204 = vadd.f32 %v50, %v203
  %205 = vmatprep.mubr.bf16.mxu0 0
  %206 = vmatmul.mubr.bf16.gmra.mrb[0].mxu0 %v74
  %v207 = vpop.f32.mrb[0].mxu0
  %v208 = vadd.f32 %v46, %v207
  %v209 = vpop.f32.mrb[0].mxu0
  %v210 = vadd.f32 %v50, %v209
  %v211 = vpop.f32.mrb[0].mxu0
  %v212 = vadd.f32 %v46, %v211
  %v213 = vpop.f32.mrb[0].mxu0
  %v214 = vadd.f32 %v50, %v213
  %215 = vmatprep.mubr.bf16.mxu0 0
  %216 = vmatmul.mubr.bf16.gmra.mrb[0].mxu0 %v75
  %v217 = vpop.f32.mrb[0].mxu0
  %v218 = vadd.f32 %v46, %v217
  %v219 = vpop.f32.mrb[0].mxu0
  %v220 = vadd.f32 %v50, %v219
  %v221 = vpop.f32.mrb[0].mxu0
  %v222 = vadd.f32 %v46, %v221
  %v223 = vpop.f32.mrb[0].mxu0
  %v224 = vadd.f32 %v50, %v223
  %225 = vmatprep.mubr.bf16.mxu0 0
  %226 = vmatmul.mubr.bf16.gmra.mrb[0].mxu0 %v76
  %v227 = vpop.f32.mrb[0].mxu0
  %v228 = vadd.f32 %v46, %v227
  %v229 = vpop.f32.mrb[0].mxu0
  %v230 = vadd.f32 %v50, %v229
  %v231 = vpop.f32.mrb[0].mxu0
  %v232 = vadd.f32 %v46, %v231
  %v233 = vpop.f32.mrb[0].mxu0
  %v234 = vadd.f32 %v50, %v233
  %235 = vmatprep.mubr.bf16.mxu0 0
  %236 = vmatmul.mubr.bf16.gmra.mrb[0].mxu0 %v77
  %v237 = vpop.f32.mrb[0].mxu0
  %v238 = vadd.f32 %v46, %v237
  %v239 = vpop.f32.mrb[0].mxu0
  %v240 = vadd.f32 %v50, %v239
  %v241 = vpop.f32.mrb[0].mxu0
  %v242 = vadd.f32 %v46, %v241
  %v243 = vpop.f32.mrb[0].mxu0
  %v244 = vadd.f32 %v50, %v243
  %245 = vdwg.mxu0
  %v246 = vmax.f32 %v198, 0.0
  %v247 = vmax.f32 %v200, 0.0
  %v248 = vmax.f32 %v202, 0.0
  %v249 = vmax.f32 %v204, 0.0
  %v250 = vmax.f32 %v208, 0.0
  %v251 = vmax.f32 %v210, 0.0
  %v252 = vmax.f32 %v212, 0.0
  %v253 = vmax.f32 %v214, 0.0
  %v254 = vmax.f32 %v218, 0.0
  %v255 = vmax.f32 %v220, 0.0
  %v256 = vmax.f32 %v222, 0.0
  %v257 = vmax.f32 %v224, 0.0
  %v258 = vmax.f32 %v228, 0.0
  %v259 = vmax.f32 %v230, 0.0
  %v260 = vmax.f32 %v232, 0.0
  %v261 = vmax.f32 %v234, 0.0
  %v262 = vmax.f32 %v238, 0.0
  %v263 = vmax.f32 %v240, 0.0
  %v264 = vmax.f32 %v242, 0.0
  %v265 = vmax.f32 %v244, 0.0
  %266 = vst [vmem:[%s3] sm:$0xff] %v246
  %267 = vst [vmem:[%s3 + $0x8] sm:$0xff] %v247
  %268 = vst [vmem:[%s3 + $0x10] sm:$0xff] %v248
  %269 = vst [vmem:[%s3 + $0x18] sm:$0xff] %v249
  %270 = vst [vmem:[%s3 + $0x20] sm:$0xff] %v250
  %271 = vst [vmem:[%s3 + $0x28] sm:$0xff] %v251
  %272 = vst [vmem:[%s3 + $0x30] sm:$0xff] %v252
  %273 = vst [vmem:[%s3 + $0x38] sm:$0xff] %v253
  %274 = vst [vmem:[%s3 + $0x40] sm:$0xff] %v254
  %275 = vst [vmem:[%s3 + $0x48] sm:$0xff] %v255
  %276 = vst [vmem:[%s3 + $0x50] sm:$0xff] %v256
  %277 = vst [vmem:[%s3 + $0x58] sm:$0xff] %v257
  %278 = vst [vmem:[%s3 + $0x60] sm:$0xff] %v258
  %279 = vst [vmem:[%s3 + $0x68] sm:$0xff] %v259
  %280 = vst [vmem:[%s3 + $0x70] sm:$0xff] %v260
  %281 = vst [vmem:[%s3 + $0x78] sm:$0xff] %v261
  %282 = vst [vmem:[%s3 + $0x80] sm:$0xff] %v262
  %283 = vst [vmem:[%s3 + $0x88] sm:$0xff] %v263
  %284 = vst [vmem:[%s3 + $0x90] sm:$0xff] %v264
  %285 = vst [vmem:[%s3 + $0x98] sm:$0xff] %v265
  // Predicated region
  $region14: #{s2convnet_forward.11} parent=0 // pred_check
    _
  $region15: #{s2convnet_forward.11} parent=0 // pred_check_branch
    %287 = sbr.rel (0) target = $region17
  $region16: #{s2convnet_forward.11} parent=0 // pred_region
    _
  $region17: #{s2convnet_forward.11} parent=0 // pred_fallthru
    _
  // Predicated region
  $region18: #{s2convnet_forward.11} parent=0 // pred_check
    _
  $region19: #{s2convnet_forward.11} parent=0 // pred_check_branch
    %289 = sbr.rel (0) target = $region21
  $region20: #{s2convnet_forward.11} parent=0 // pred_region
    _
  $region21: #{s2convnet_forward.11} parent=0 // pred_fallthru
    _

// kernel: s2convnet_forward.12
$region0: #{s2convnet_forward.12}
  #allocation0 [shape = 'u32[]', space=smem, size = 0x4, offset = 0x4, fixed_abs, tag = 'smem constant byte address 0x4 - core index']
  #allocation1 [shape = 'u32[144,128]{1,0:T(1,128)}', space=vmem, size = 0x12000, scoped, tag = 'internal scratch']
  %s0 = inlined_call_operand.vmem [shape: bf16[32,256], index: 0, kind: input, shape index: {}]
  %s1 = inlined_call_operand.vmem [shape: bf16[256,256], index: 1, kind: input, shape index: {}]
  %s2 = inlined_call_operand.vmem [shape: f32[1,256], index: 2, kind: input, shape index: {}]
  %s3 = inlined_call_operand.vmem [shape: f32[32,256], index: 3, kind: output, shape index: {}]
  %s4 = sld [smem:[#allocation0]]
  $region22: #{s2convnet_forward.12} parent=0
    _
  %s6 = ssub.s32 1, %s4
  %s7 = scalar_select 0, %s6, %s4
  // Predicated region
  $region2: #{s2convnet_forward.12} parent=0 // pred_check
    _
  $region3: #{s2convnet_forward.12} parent=0 // pred_check_branch
    %9 = sbr.rel (0) target = $region5
  $region4: #{s2convnet_forward.12} parent=0 // pred_region
    _
  $region5: #{s2convnet_forward.12} parent=0 // pred_fallthru
    _
  // Predicated region
  $region6: #{s2convnet_forward.12} parent=0 // pred_check
    _
  $region7: #{s2convnet_forward.12} parent=0 // pred_check_branch
    %11 = sbr.rel (0) target = $region9
  $region8: #{s2convnet_forward.12} parent=0 // pred_region
    _
  $region9: #{s2convnet_forward.12} parent=0 // pred_fallthru
    _
  // Predicated region
  $region10: #{s2convnet_forward.12} parent=0 // pred_check
    _
  $region11: #{s2convnet_forward.12} parent=0 // pred_check_branch
    %13 = sbr.rel (0) target = $region13
  $region12: #{s2convnet_forward.12} parent=0 // pred_region
    _
  $region13: #{s2convnet_forward.12} parent=0 // pred_fallthru
    _
  %v14 = vld [vmem:[%s0] sm:$0xff]
  %v15 = vld [vmem:[%s0 + $0x8] sm:$0xff]
  %v16 = vld [vmem:[%s0 + $0x10] sm:$0xff]
  %v17 = vld [vmem:[%s0 + $0x18] sm:$0xff]
  %v18 = vld [vmem:[%s1] sm:$0xff]
  %v19 = vld [vmem:[%s1 + $0x8] sm:$0xff]
  %v20 = vld [vmem:[%s1 + $0x10] sm:$0xff]
  %v21 = vld [vmem:[%s1 + $0x18] sm:$0xff]
  %v22 = vld [vmem:[%s1 + $0x20] sm:$0xff]
  %v23 = vld [vmem:[%s1 + $0x28] sm:$0xff]
  %v24 = vld [vmem:[%s1 + $0x30] sm:$0xff]
  %v25 = vld [vmem:[%s1 + $0x38] sm:$0xff]
  %v26 = vld [vmem:[%s1 + $0x40] sm:$0xff]
  %v27 = vld [vmem:[%s1 + $0x48] sm:$0xff]
  %v28 = vld [vmem:[%s1 + $0x50] sm:$0xff]
  %v29 = vld [vmem:[%s1 + $0x58] sm:$0xff]
  %v30 = vld [vmem:[%s1 + $0x60] sm:$0xff]
  %v31 = vld [vmem:[%s1 + $0x68] sm:$0xff]
  %v32 = vld [vmem:[%s1 + $0x70] sm:$0xff]
  %v33 = vld [vmem:[%s1 + $0x78] sm:$0xff]
  %v34 = vld [vmem:[%s1 + $0x80] sm:$0xff]
  %v35 = vld [vmem:[%s1 + $0x88] sm:$0xff]
  %v36 = vld [vmem:[%s1 + $0x90] sm:$0xff]
  %v37 = vld [vmem:[%s1 + $0x98] sm:$0xff]
  %v38 = vld [vmem:[%s1 + $0xa0] sm:$0xff]
  %v39 = vld [vmem:[%s1 + $0xa8] sm:$0xff]
  %v40 = vld [vmem:[%s1 + $0xb0] sm:$0xff]
  %v41 = vld [vmem:[%s1 + $0xb8] sm:$0xff]
  %v42 = vld [vmem:[%s1 + $0xc0] sm:$0xff]
  %v43 = vld [vmem:[%s1 + $0xc8] sm:$0xff]
  %v44 = vld [vmem:[%s1 + $0xd0] sm:$0xff]
  %v45 = vld [vmem:[%s1 + $0xd8] sm:$0xff]
  %v46 = vld [vmem:[%s1 + $0xe0] sm:$0xff]
  %v47 = vld [vmem:[%s1 + $0xe8] sm:$0xff]
  %v48 = vld [vmem:[%s1 + $0xf0] sm:$0xff]
  %v49 = vld [vmem:[%s1 + $0xf8] sm:$0xff]
  %v50 = vld [vmem:[%s2] sm:$0x3]
  %v52 = vlaneseq
  %v53 = vshrl.u32 %v52, 7
  %v54 = vsub.s32 0, %v53
  %v55 = vrot.slane %v50, %v54
  %v56 = vlaneseq
  %v57 = vshrl.u32 %v56, 7
  %v58 = vsub.s32 1, %v57
  %v59 = vrot.slane %v50, %v58
  %v66 = vunpack.c.l.b16 %v14
  %v67 = vunpack.c.h.b16 %v14
  %v68 = vunpack.c.l.b16 %v15
  %v69 = vunpack.c.h.b16 %v15
  %v70 = vunpack.c.l.b16 %v16
  %v71 = vunpack.c.h.b16 %v16
  %v72 = vunpack.c.l.b16 %v17
  %v73 = vunpack.c.h.b16 %v17
  %v74 = vpack.c.b16 %v68, %v66
  %v75 = vpack.c.b16 %v69, %v67
  %v76 = vpack.c.b16 %v72, %v70
  %v77 = vpack.c.b16 %v73, %v71
  %v114 = vunpack.c.l.b16 %v18
  %v115 = vunpack.c.h.b16 %v18
  %v116 = vunpack.c.l.b16 %v19
  %v117 = vunpack.c.h.b16 %v19
  %v118 = vunpack.c.l.b16 %v20
  %v119 = vunpack.c.h.b16 %v20
  %v120 = vunpack.c.l.b16 %v21
  %v121 = vunpack.c.h.b16 %v21
  %v122 = vunpack.c.l.b16 %v22
  %v123 = vunpack.c.h.b16 %v22
  %v124 = vunpack.c.l.b16 %v23
  %v125 = vunpack.c.h.b16 %v23
  %v126 = vunpack.c.l.b16 %v24
  %v127 = vunpack.c.h.b16 %v24
  %v128 = vunpack.c.l.b16 %v25
  %v129 = vunpack.c.h.b16 %v25
  %v130 = vunpack.c.l.b16 %v26
  %v131 = vunpack.c.h.b16 %v26
  %v132 = vunpack.c.l.b16 %v27
  %v133 = vunpack.c.h.b16 %v27
  %v134 = vunpack.c.l.b16 %v28
  %v135 = vunpack.c.h.b16 %v28
  %v136 = vunpack.c.l.b16 %v29
  %v137 = vunpack.c.h.b16 %v29
  %v138 = vunpack.c.l.b16 %v30
  %v139 = vunpack.c.h.b16 %v30
  %v140 = vunpack.c.l.b16 %v31
  %v141 = vunpack.c.h.b16 %v31
  %v142 = vunpack.c.l.b16 %v32
  %v143 = vunpack.c.h.b16 %v32
  %v144 = vunpack.c.l.b16 %v33
  %v145 = vunpack.c.h.b16 %v33
  %v146 = vunpack.c.l.b16 %v34
  %v147 = vunpack.c.h.b16 %v34
  %v148 = vunpack.c.l.b16 %v35
  %v149 = vunpack.c.h.b16 %v35
  %v150 = vunpack.c.l.b16 %v36
  %v151 = vunpack.c.h.b16 %v36
  %v152 = vunpack.c.l.b16 %v37
  %v153 = vunpack.c.h.b16 %v37
  %v154 = vunpack.c.l.b16 %v38
  %v155 = vunpack.c.h.b16 %v38
  %v156 = vunpack.c.l.b16 %v39
  %v157 = vunpack.c.h.b16 %v39
  %v158 = vunpack.c.l.b16 %v40
  %v159 = vunpack.c.h.b16 %v40
  %v160 = vunpack.c.l.b16 %v41
  %v161 = vunpack.c.h.b16 %v41
  %v162 = vunpack.c.l.b16 %v42
  %v163 = vunpack.c.h.b16 %v42
  %v164 = vunpack.c.l.b16 %v43
  %v165 = vunpack.c.h.b16 %v43
  %v166 = vunpack.c.l.b16 %v44
  %v167 = vunpack.c.h.b16 %v44
  %v168 = vunpack.c.l.b16 %v45
  %v169 = vunpack.c.h.b16 %v45
  %v170 = vunpack.c.l.b16 %v46
  %v171 = vunpack.c.h.b16 %v46
  %v172 = vunpack.c.l.b16 %v47
  %v173 = vunpack.c.h.b16 %v47
  %v174 = vunpack.c.l.b16 %v48
  %v175 = vunpack.c.h.b16 %v48
  %v176 = vunpack.c.l.b16 %v49
  %v177 = vunpack.c.h.b16 %v49
  %v178 = vpack.c.b16 %v116, %v114
  %v179 = vpack.c.b16 %v117, %v115
  %v180 = vpack.c.b16 %v120, %v118
  %v181 = vpack.c.b16 %v121, %v119
  %v182 = vpack.c.b16 %v124, %v122
  %v183 = vpack.c.b16 %v125, %v123
  %v184 = vpack.c.b16 %v128, %v126
  %v185 = vpack.c.b16 %v129, %v127
  %v186 = vpack.c.b16 %v132, %v130
  %v187 = vpack.c.b16 %v133, %v131
  %v188 = vpack.c.b16 %v136, %v134
  %v189 = vpack.c.b16 %v137, %v135
  %v190 = vpack.c.b16 %v140, %v138
  %v191 = vpack.c.b16 %v141, %v139
  %v192 = vpack.c.b16 %v144, %v142
  %v193 = vpack.c.b16 %v145, %v143
  %v194 = vpack.c.b16 %v148, %v146
  %v195 = vpack.c.b16 %v149, %v147
  %v196 = vpack.c.b16 %v152, %v150
  %v197 = vpack.c.b16 %v153, %v151
  %v198 = vpack.c.b16 %v156, %v154
  %v199 = vpack.c.b16 %v157, %v155
  %v200 = vpack.c.b16 %v160, %v158
  %v201 = vpack.c.b16 %v161, %v159
  %v202 = vpack.c.b16 %v164, %v162
  %v203 = vpack.c.b16 %v165, %v163
  %v204 = vpack.c.b16 %v168, %v166
  %v205 = vpack.c.b16 %v169, %v167
  %v206 = vpack.c.b16 %v172, %v170
  %v207 = vpack.c.b16 %v173, %v171
  %v208 = vpack.c.b16 %v176, %v174
  %v209 = vpack.c.b16 %v177, %v175
  %242 = vmatprep.subr.bf16.mxu0 %v179
  %243 = vmatpush1.bf16.msra.mxu0 %v178
  %244 = vmatprep.subr.bf16.mxu0 %v181
  %245 = vmatpush1.bf16.msra.mxu0 %v180
  %246 = vmatprep.subr.bf16.mxu0 %v183
  %247 = vmatpush1.bf16.msra.mxu0 %v182
  %248 = vmatprep.subr.bf16.mxu0 %v185
  %249 = vmatpush1.bf16.msra.mxu0 %v184
  %250 = vmatprep.subr.bf16.mxu0 %v187
  %251 = vmatpush1.bf16.msra.mxu0 %v186
  %252 = vmatprep.subr.bf16.mxu0 %v189
  %253 = vmatpush1.bf16.msra.mxu0 %v188
  %254 = vmatprep.subr.bf16.mxu0 %v191
  %255 = vmatpush1.bf16.msra.mxu0 %v190
  %256 = vmatprep.subr.bf16.mxu0 %v193
  %257 = vmatpush1.bf16.msra.mxu0 %v192
  %258 = vmatprep.subr.bf16.mxu0 %v195
  %259 = vmatpush1.bf16.msra.mxu0 %v194
  %260 = vmatprep.subr.bf16.mxu0 %v197
  %261 = vmatpush1.bf16.msra.mxu0 %v196
  %262 = vmatprep.subr.bf16.mxu0 %v199
  %263 = vmatpush1.bf16.msra.mxu0 %v198
  %264 = vmatprep.subr.bf16.mxu0 %v201
  %265 = vmatpush1.bf16.msra.mxu0 %v200
  %266 = vmatprep.subr.bf16.mxu0 %v203
  %267 = vmatpush1.bf16.msra.mxu0 %v202
  %268 = vmatprep.subr.bf16.mxu0 %v205
  %269 = vmatpush1.bf16.msra.mxu0 %v204
  %270 = vmatprep.subr.bf16.mxu0 %v207
  %271 = vmatpush1.bf16.msra.mxu0 %v206
  %272 = vmatprep.subr.bf16.mxu0 %v209
  %273 = vmatpush1.bf16.msra.mxu0 %v208
  %274 = vmatprep.mubr.bf16.mxu0 %v75
  %275 = vmatmul.mubr.bf16.gmra.mrb[0].mxu0 %v74
  %v276 = vpop.f32.mrb[0].mxu0
  %v277 = vadd.f32 %v55, %v276
  %v278 = vpop.f32.mrb[0].mxu0
  %v279 = vadd.f32 %v59, %v278
  %v280 = vpop.f32.mrb[0].mxu0
  %v281 = vadd.f32 %v55, %v280
  %v282 = vpop.f32.mrb[0].mxu0
  %v283 = vadd.f32 %v59, %v282
  %284 = vmatprep.mubr.bf16.mxu0 %v77
  %285 = vmatmul.mubr.bf16.gmra.mrb[0].mxu0 %v76
  %v286 = vpop.f32.mrb[0].mxu0
  %v287 = vadd.f32 %v55, %v286
  %v288 = vpop.f32.mrb[0].mxu0
  %v289 = vadd.f32 %v59, %v288
  %v290 = vpop.f32.mrb[0].mxu0
  %v291 = vadd.f32 %v55, %v290
  %v292 = vpop.f32.mrb[0].mxu0
  %v293 = vadd.f32 %v59, %v292
  %294 = vdwg.mxu0
  %v295 = vmax.f32 %v277, 0.0
  %v296 = vmax.f32 %v279, 0.0
  %v297 = vmax.f32 %v281, 0.0
  %v298 = vmax.f32 %v283, 0.0
  %v299 = vmax.f32 %v287, 0.0
  %v300 = vmax.f32 %v289, 0.0
  %v301 = vmax.f32 %v291, 0.0
  %v302 = vmax.f32 %v293, 0.0
  %303 = vst [vmem:[%s3] sm:$0xff] %v295
  %304 = vst [vmem:[%s3 + $0x8] sm:$0xff] %v296
  %305 = vst [vmem:[%s3 + $0x10] sm:$0xff] %v297
  %306 = vst [vmem:[%s3 + $0x18] sm:$0xff] %v298
  %307 = vst [vmem:[%s3 + $0x20] sm:$0xff] %v299
  %308 = vst [vmem:[%s3 + $0x28] sm:$0xff] %v300
  %309 = vst [vmem:[%s3 + $0x30] sm:$0xff] %v301
  %310 = vst [vmem:[%s3 + $0x38] sm:$0xff] %v302
  // Predicated region
  $region14: #{s2convnet_forward.12} parent=0 // pred_check
    _
  $region15: #{s2convnet_forward.12} parent=0 // pred_check_branch
    %312 = sbr.rel (0) target = $region17
  $region16: #{s2convnet_forward.12} parent=0 // pred_region
    _
  $region17: #{s2convnet_forward.12} parent=0 // pred_fallthru
    _
  // Predicated region
  $region18: #{s2convnet_forward.12} parent=0 // pred_check
    _
  $region19: #{s2convnet_forward.12} parent=0 // pred_check_branch
    %314 = sbr.rel (0) target = $region21
  $region20: #{s2convnet_forward.12} parent=0 // pred_region
    _
  $region21: #{s2convnet_forward.12} parent=0 // pred_fallthru
    _

// kernel: s2convnet_forward.13
$region0: #{s2convnet_forward.13}
  #allocation0 [shape = 'u32[]', space=smem, size = 0x4, offset = 0x4, fixed_abs, tag = 'smem constant byte address 0x4 - core index']
  #allocation1 [shape = 'u32[144,128]{1,0:T(1,128)}', space=vmem, size = 0x12000, scoped, tag = 'internal scratch']
  #allocation2 [shape = 'f32[1,1]{1,0:T(1,128)S(1)}', space=vmem, size = 0x200, scoped, tag = 'scoped memory for s2convnet_forward.13']
  %s0 = inlined_call_operand.vmem [shape: f32[2,16,256], index: 0, kind: input, shape index: {}]
  %s1 = inlined_call_operand.vmem [shape: f32[16,1], index: 1, kind: input, shape index: {}]
  %s2 = inlined_call_operand.vmem [shape: f32[256,256], index: 2, kind: input, shape index: {}]
  %s3 = inlined_call_operand.vmem [shape: f32[1,256], index: 3, kind: input, shape index: {}]
  %s4 = inlined_call_operand.vmem [shape: f32[256,190], index: 4, kind: input, shape index: {}]
  %s5 = inlined_call_operand.vmem [shape: f32[1,190], index: 5, kind: input, shape index: {}]
  %s6 = inlined_call_operand.vmem [shape: f32[190,128], index: 6, kind: input, shape index: {}]
  %s7 = inlined_call_operand.vmem [shape: f32[1,128], index: 7, kind: input, shape index: {}]
  %s8 = inlined_call_operand.vmem [shape: f32[128,64], index: 8, kind: input, shape index: {}]
  %s9 = inlined_call_operand.vmem [shape: f32[1,64], index: 9, kind: input, shape index: {}]
  %s10 = inlined_call_operand.vmem [shape: f32[64,12], index: 10, kind: input, shape index: {}]
  %s11 = inlined_call_operand.vmem [shape: f32[1,12], index: 11, kind: input, shape index: {}]
  %s12 = inlined_call_operand.vmem [shape: f32[1,12], index: 12, kind: input, shape index: {}]
  %s13 = inlined_call_operand.<no memory space> [shape: f32[1,1], index: 13, kind: input, shape index: {}]
  %s14 = inlined_call_operand.vmem [shape: f32[2,1], index: 14, kind: output, shape index: {}]
  %s15 = sld [smem:[#allocation0]]
  $region66: #{s2convnet_forward.13} parent=0
    _
  %s17 = ssub.s32 1, %s15
  %s18 = scalar_select 0, %s17, %s15
  %v19 = vstv %s13
  %20 = vst [vmem:[#allocation2] sm:$0x1] %v19
  // Predicated region
  $region2: #{s2convnet_forward.13} parent=0 // pred_check
    _
  $region3: #{s2convnet_forward.13} parent=0 // pred_check_branch
    %22 = sbr.rel (0) target = $region5
  $region4: #{s2convnet_forward.13} parent=0 // pred_region
    _
  $region5: #{s2convnet_forward.13} parent=0 // pred_fallthru
    _
  // Predicated region
  $region6: #{s2convnet_forward.13} parent=0 // pred_check
    _
  $region7: #{s2convnet_forward.13} parent=0 // pred_check_branch
    %24 = sbr.rel (0) target = $region9
  $region8: #{s2convnet_forward.13} parent=0 // pred_region
    _
  $region9: #{s2convnet_forward.13} parent=0 // pred_fallthru
    _
  // Predicated region
  $region10: #{s2convnet_forward.13} parent=0 // pred_check
    _
  $region11: #{s2convnet_forward.13} parent=0 // pred_check_branch
    %26 = sbr.rel (0) target = $region13
  $region12: #{s2convnet_forward.13} parent=0 // pred_region
    _
  $region13: #{s2convnet_forward.13} parent=0 // pred_fallthru
    _
  // Predicated region
  $region14: #{s2convnet_forward.13} parent=0 // pred_check
    _
  $region15: #{s2convnet_forward.13} parent=0 // pred_check_branch
    %28 = sbr.rel (0) target = $region17
  $region16: #{s2convnet_forward.13} parent=0 // pred_region
    _
  $region17: #{s2convnet_forward.13} parent=0 // pred_fallthru
    _
  // Predicated region
  $region18: #{s2convnet_forward.13} parent=0 // pred_check
    _
  $region19: #{s2convnet_forward.13} parent=0 // pred_check_branch
    %30 = sbr.rel (0) target = $region21
  $region20: #{s2convnet_forward.13} parent=0 // pred_region
    _
  $region21: #{s2convnet_forward.13} parent=0 // pred_fallthru
    _
  // Predicated region
  $region22: #{s2convnet_forward.13} parent=0 // pred_check
    _
  $region23: #{s2convnet_forward.13} parent=0 // pred_check_branch
    %32 = sbr.rel (0) target = $region25
  $region24: #{s2convnet_forward.13} parent=0 // pred_region
    _
  $region25: #{s2convnet_forward.13} parent=0 // pred_fallthru
    _
  // Predicated region
  $region26: #{s2convnet_forward.13} parent=0 // pred_check
    _
  $region27: #{s2convnet_forward.13} parent=0 // pred_check_branch
    %34 = sbr.rel (0) target = $region29
  $region28: #{s2convnet_forward.13} parent=0 // pred_region
    _
  $region29: #{s2convnet_forward.13} parent=0 // pred_fallthru
    _
  // Predicated region
  $region30: #{s2convnet_forward.13} parent=0 // pred_check
    _
  $region31: #{s2convnet_forward.13} parent=0 // pred_check_branch
    %36 = sbr.rel (0) target = $region33
  $region32: #{s2convnet_forward.13} parent=0 // pred_region
    _
  $region33: #{s2convnet_forward.13} parent=0 // pred_fallthru
    _
  // Predicated region
  $region34: #{s2convnet_forward.13} parent=0 // pred_check
    _
  $region35: #{s2convnet_forward.13} parent=0 // pred_check_branch
    %38 = sbr.rel (0) target = $region37
  $region36: #{s2convnet_forward.13} parent=0 // pred_region
    _
  $region37: #{s2convnet_forward.13} parent=0 // pred_fallthru
    _
  // Predicated region
  $region38: #{s2convnet_forward.13} parent=0 // pred_check
    _
  $region39: #{s2convnet_forward.13} parent=0 // pred_check_branch
    %40 = sbr.rel (0) target = $region41
  $region40: #{s2convnet_forward.13} parent=0 // pred_region
    _
  $region41: #{s2convnet_forward.13} parent=0 // pred_fallthru
    _
  // Predicated region
  $region42: #{s2convnet_forward.13} parent=0 // pred_check
    _
  $region43: #{s2convnet_forward.13} parent=0 // pred_check_branch
    %42 = sbr.rel (0) target = $region45
  $region44: #{s2convnet_forward.13} parent=0 // pred_region
    _
  $region45: #{s2convnet_forward.13} parent=0 // pred_fallthru
    _
  // Predicated region
  $region46: #{s2convnet_forward.13} parent=0 // pred_check
    _
  $region47: #{s2convnet_forward.13} parent=0 // pred_check_branch
    %44 = sbr.rel (0) target = $region49
  $region48: #{s2convnet_forward.13} parent=0 // pred_region
    _
  $region49: #{s2convnet_forward.13} parent=0 // pred_fallthru
    _
  // Predicated region
  $region50: #{s2convnet_forward.13} parent=0 // pred_check
    _
  $region51: #{s2convnet_forward.13} parent=0 // pred_check_branch
    %46 = sbr.rel (0) target = $region53
  $region52: #{s2convnet_forward.13} parent=0 // pred_region
    _
  $region53: #{s2convnet_forward.13} parent=0 // pred_fallthru
    _
  // Predicated region
  $region54: #{s2convnet_forward.13} parent=0 // pred_check
    _
  $region55: #{s2convnet_forward.13} parent=0 // pred_check_branch
    %48 = sbr.rel (0) target = $region57
  $region56: #{s2convnet_forward.13} parent=0 // pred_region
    _
  $region57: #{s2convnet_forward.13} parent=0 // pred_fallthru
    _
  %v49 = vld [vmem:[%s0] sm:$0xff]
  %v50 = vld [vmem:[%s0 + $0x8] sm:$0xff]
  %v51 = vld [vmem:[%s0 + $0x10] sm:$0xff]
  %v52 = vld [vmem:[%s0 + $0x18] sm:$0xff]
  %v53 = vld [vmem:[%s0 + $0x20] sm:$0xff]
  %v54 = vld [vmem:[%s0 + $0x28] sm:$0xff]
  %v55 = vld [vmem:[%s0 + $0x30] sm:$0xff]
  %v56 = vld [vmem:[%s0 + $0x38] sm:$0xff]
  %v57 = vld [vmem:[%s1] sm:$0xff]
  %v58 = vld [vmem:[%s1 + $0x8] sm:$0xff]
  %60 = vset.pattern.permute.xlu0 0
  %61 = vperm.xlu0 %60, %v57
  %v62 = vpop.permute.xlu0 %61
  %65 = vset.pattern.permute.xlu0 0
  %66 = vperm.xlu0 %65, %v58
  %v67 = vpop.permute.xlu0 %66
  %v69 = vmul.f32 %v49, %v62
  %v70 = vmul.f32 %v50, %v62
  %v71 = vmul.f32 %v51, %v67
  %v72 = vmul.f32 %v52, %v67
  %v73 = vmul.f32 %v53, %v62
  %v74 = vmul.f32 %v54, %v62
  %v75 = vmul.f32 %v55, %v67
  %v76 = vmul.f32 %v56, %v67
  %v77 = vadd.f32 %v69, %v71
  %v78 = vrot.slane %v77, 4
  %v79 = vadd.f32 %v77, %v78
  %v80 = vrot.slane %v79, 2
  %v81 = vadd.f32 %v79, %v80
  %v82 = vrot.slane %v81, 1
  %v83 = vadd.f32 %v81, %v82
  %v84 = vadd.f32 %v70, %v72
  %v85 = vrot.slane %v84, 4
  %v86 = vadd.f32 %v84, %v85
  %v87 = vrot.slane %v86, 2
  %v88 = vadd.f32 %v86, %v87
  %v89 = vrot.slane %v88, 1
  %v90 = vadd.f32 %v88, %v89
  %v91 = vadd.f32 %v73, %v75
  %v92 = vrot.slane %v91, 4
  %v93 = vadd.f32 %v91, %v92
  %v94 = vrot.slane %v93, 2
  %v95 = vadd.f32 %v93, %v94
  %v96 = vrot.slane %v95, 1
  %v97 = vadd.f32 %v95, %v96
  %v98 = vadd.f32 %v74, %v76
  %v99 = vrot.slane %v98, 4
  %v100 = vadd.f32 %v98, %v99
  %v101 = vrot.slane %v100, 2
  %v102 = vadd.f32 %v100, %v101
  %v103 = vrot.slane %v102, 1
  %v104 = vadd.f32 %v102, %v103
  %v105 = vld [vmem:[%s2] sm:$0xff]
  %v106 = vld [vmem:[%s2 + $0x8] sm:$0xff]
  %v107 = vld [vmem:[%s2 + $0x10] sm:$0xff]
  %v108 = vld [vmem:[%s2 + $0x18] sm:$0xff]
  %v109 = vld [vmem:[%s2 + $0x20] sm:$0xff]
  %v110 = vld [vmem:[%s2 + $0x28] sm:$0xff]
  %v111 = vld [vmem:[%s2 + $0x30] sm:$0xff]
  %v112 = vld [vmem:[%s2 + $0x38] sm:$0xff]
  %v113 = vld [vmem:[%s2 + $0x40] sm:$0xff]
  %v114 = vld [vmem:[%s2 + $0x48] sm:$0xff]
  %v115 = vld [vmem:[%s2 + $0x50] sm:$0xff]
  %v116 = vld [vmem:[%s2 + $0x58] sm:$0xff]
  %v117 = vld [vmem:[%s2 + $0x60] sm:$0xff]
  %v118 = vld [vmem:[%s2 + $0x68] sm:$0xff]
  %v119 = vld [vmem:[%s2 + $0x70] sm:$0xff]
  %v120 = vld [vmem:[%s2 + $0x78] sm:$0xff]
  %v121 = vld [vmem:[%s2 + $0x80] sm:$0xff]
  %v122 = vld [vmem:[%s2 + $0x88] sm:$0xff]
  %v123 = vld [vmem:[%s2 + $0x90] sm:$0xff]
  %v124 = vld [vmem:[%s2 + $0x98] sm:$0xff]
  %v125 = vld [vmem:[%s2 + $0xa0] sm:$0xff]
  %v126 = vld [vmem:[%s2 + $0xa8] sm:$0xff]
  %v127 = vld [vmem:[%s2 + $0xb0] sm:$0xff]
  %v128 = vld [vmem:[%s2 + $0xb8] sm:$0xff]
  %v129 = vld [vmem:[%s2 + $0xc0] sm:$0xff]
  %v130 = vld [vmem:[%s2 + $0xc8] sm:$0xff]
  %v131 = vld [vmem:[%s2 + $0xd0] sm:$0xff]
  %v132 = vld [vmem:[%s2 + $0xd8] sm:$0xff]
  %v133 = vld [vmem:[%s2 + $0xe0] sm:$0xff]
  %v134 = vld [vmem:[%s2 + $0xe8] sm:$0xff]
  %v135 = vld [vmem:[%s2 + $0xf0] sm:$0xff]
  %v136 = vld [vmem:[%s2 + $0xf8] sm:$0xff]
  %v137 = vld [vmem:[%s2 + $0x100] sm:$0xff]
  %v138 = vld [vmem:[%s2 + $0x108] sm:$0xff]
  %v139 = vld [vmem:[%s2 + $0x110] sm:$0xff]
  %v140 = vld [vmem:[%s2 + $0x118] sm:$0xff]
  %v141 = vld [vmem:[%s2 + $0x120] sm:$0xff]
  %v142 = vld [vmem:[%s2 + $0x128] sm:$0xff]
  %v143 = vld [vmem:[%s2 + $0x130] sm:$0xff]
  %v144 = vld [vmem:[%s2 + $0x138] sm:$0xff]
  %v145 = vld [vmem:[%s2 + $0x140] sm:$0xff]
  %v146 = vld [vmem:[%s2 + $0x148] sm:$0xff]
  %v147 = vld [vmem:[%s2 + $0x150] sm:$0xff]
  %v148 = vld [vmem:[%s2 + $0x158] sm:$0xff]
  %v149 = vld [vmem:[%s2 + $0x160] sm:$0xff]
  %v150 = vld [vmem:[%s2 + $0x168] sm:$0xff]
  %v151 = vld [vmem:[%s2 + $0x170] sm:$0xff]
  %v152 = vld [vmem:[%s2 + $0x178] sm:$0xff]
  %v153 = vld [vmem:[%s2 + $0x180] sm:$0xff]
  %v154 = vld [vmem:[%s2 + $0x188] sm:$0xff]
  %v155 = vld [vmem:[%s2 + $0x190] sm:$0xff]
  %v156 = vld [vmem:[%s2 + $0x198] sm:$0xff]
  %v157 = vld [vmem:[%s2 + $0x1a0] sm:$0xff]
  %v158 = vld [vmem:[%s2 + $0x1a8] sm:$0xff]
  %v159 = vld [vmem:[%s2 + $0x1b0] sm:$0xff]
  %v160 = vld [vmem:[%s2 + $0x1b8] sm:$0xff]
  %v161 = vld [vmem:[%s2 + $0x1c0] sm:$0xff]
  %v162 = vld [vmem:[%s2 + $0x1c8] sm:$0xff]
  %v163 = vld [vmem:[%s2 + $0x1d0] sm:$0xff]
  %v164 = vld [vmem:[%s2 + $0x1d8] sm:$0xff]
  %v165 = vld [vmem:[%s2 + $0x1e0] sm:$0xff]
  %v166 = vld [vmem:[%s2 + $0x1e8] sm:$0xff]
  %v167 = vld [vmem:[%s2 + $0x1f0] sm:$0xff]
  %v168 = vld [vmem:[%s2 + $0x1f8] sm:$0xff]
  %v169 = vld [vmem:[%s3] sm:$0x3]
  %v171 = vlaneseq
  %v172 = vshrl.u32 %v171, 7
  %v173 = vsub.s32 0, %v172
  %v174 = vrot.slane %v169, %v173
  %v175 = vlaneseq
  %v176 = vshrl.u32 %v175, 7
  %v177 = vsub.s32 1, %v176
  %v178 = vrot.slane %v169, %v177
  %vm185 = vcmask 1041409
  %v186 = vsel %vm185, %v97, %v83
  %v187 = vsel %vm185, %v104, %v90
  %190 = vmatprep.subr.mxu0 %v106
  %191 = vmatpush1.msra.mxu0 %v105
  %192 = vmatprep.subr.mxu0 %v108
  %193 = vmatpush1.msra.mxu0 %v107
  %194 = vmatprep.subr.mxu0 %v110
  %195 = vmatpush1.msra.mxu0 %v109
  %196 = vmatprep.subr.mxu0 %v112
  %197 = vmatpush1.msra.mxu0 %v111
  %198 = vmatprep.subr.mxu0 %v114
  %199 = vmatpush1.msra.mxu0 %v113
  %200 = vmatprep.subr.mxu0 %v116
  %201 = vmatpush1.msra.mxu0 %v115
  %202 = vmatprep.subr.mxu0 %v118
  %203 = vmatpush1.msra.mxu0 %v117
  %204 = vmatprep.subr.mxu0 %v120
  %205 = vmatpush1.msra.mxu0 %v119
  %206 = vmatprep.subr.mxu0 %v122
  %207 = vmatpush1.msra.mxu0 %v121
  %208 = vmatprep.subr.mxu0 %v124
  %209 = vmatpush1.msra.mxu0 %v123
  %210 = vmatprep.subr.mxu0 %v126
  %211 = vmatpush1.msra.mxu0 %v125
  %212 = vmatprep.subr.mxu0 %v128
  %213 = vmatpush1.msra.mxu0 %v127
  %214 = vmatprep.subr.mxu0 %v130
  %215 = vmatpush1.msra.mxu0 %v129
  %216 = vmatprep.subr.mxu0 %v132
  %217 = vmatpush1.msra.mxu0 %v131
  %218 = vmatprep.subr.mxu0 %v134
  %219 = vmatpush1.msra.mxu0 %v133
  %220 = vmatprep.subr.mxu0 %v136
  %221 = vmatpush1.msra.mxu0 %v135
  %222 = vmatprep.subr.mxu0 %v138
  %223 = vmatpush1.msra.mxu0 %v137
  %224 = vmatprep.subr.mxu0 %v140
  %225 = vmatpush1.msra.mxu0 %v139
  %226 = vmatprep.subr.mxu0 %v142
  %227 = vmatpush1.msra.mxu0 %v141
  %228 = vmatprep.subr.mxu0 %v144
  %229 = vmatpush1.msra.mxu0 %v143
  %230 = vmatprep.subr.mxu0 %v146
  %231 = vmatpush1.msra.mxu0 %v145
  %232 = vmatprep.subr.mxu0 %v148
  %233 = vmatpush1.msra.mxu0 %v147
  %234 = vmatprep.subr.mxu0 %v150
  %235 = vmatpush1.msra.mxu0 %v149
  %236 = vmatprep.subr.mxu0 %v152
  %237 = vmatpush1.msra.mxu0 %v151
  %238 = vmatprep.subr.mxu0 %v154
  %239 = vmatpush1.msra.mxu0 %v153
  %240 = vmatprep.subr.mxu0 %v156
  %241 = vmatpush1.msra.mxu0 %v155
  %242 = vmatprep.subr.mxu0 %v158
  %243 = vmatpush1.msra.mxu0 %v157
  %244 = vmatprep.subr.mxu0 %v160
  %245 = vmatpush1.msra.mxu0 %v159
  %246 = vmatprep.subr.mxu0 %v162
  %247 = vmatpush1.msra.mxu0 %v161
  %248 = vmatprep.subr.mxu0 %v164
  %249 = vmatpush1.msra.mxu0 %v163
  %250 = vmatprep.subr.mxu0 %v166
  %251 = vmatpush1.msra.mxu0 %v165
  %252 = vmatprep.subr.mxu0 %v168
  %253 = vmatpush1.msra.mxu0 %v167
  %254 = vmatprep.mubr.f32.mxu0 %v187
  %255 = vmatmul.mubr.f32.gmra.mrb[0].mxu0 %v186
  %v256 = vpop.f32.mrb[0].mxu0
  %v257 = vadd.f32 %v174, %v256
  %v258 = vpop.f32.mrb[0].mxu0
  %v259 = vadd.f32 %v178, %v258
  %260 = vdwg.mxu0
  %v261 = vmax.f32 %v257, 0.0
  %v262 = vmax.f32 %v259, 0.0
  %v263 = vld [vmem:[%s4] sm:$0xff]
  %v264 = vld [vmem:[%s4 + $0x8] sm:$0xff]
  %v265 = vld [vmem:[%s4 + $0x10] sm:$0xff]
  %v266 = vld [vmem:[%s4 + $0x18] sm:$0xff]
  %v267 = vld [vmem:[%s4 + $0x20] sm:$0xff]
  %v268 = vld [vmem:[%s4 + $0x28] sm:$0xff]
  %v269 = vld [vmem:[%s4 + $0x30] sm:$0xff]
  %v270 = vld [vmem:[%s4 + $0x38] sm:$0xff]
  %v271 = vld [vmem:[%s4 + $0x40] sm:$0xff]
  %v272 = vld [vmem:[%s4 + $0x48] sm:$0xff]
  %v273 = vld [vmem:[%s4 + $0x50] sm:$0xff]
  %v274 = vld [vmem:[%s4 + $0x58] sm:$0xff]
  %v275 = vld [vmem:[%s4 + $0x60] sm:$0xff]
  %v276 = vld [vmem:[%s4 + $0x68] sm:$0xff]
  %v277 = vld [vmem:[%s4 + $0x70] sm:$0xff]
  %v278 = vld [vmem:[%s4 + $0x78] sm:$0xff]
  %v279 = vld [vmem:[%s4 + $0x80] sm:$0xff]
  %v280 = vld [vmem:[%s4 + $0x88] sm:$0xff]
  %v281 = vld [vmem:[%s4 + $0x90] sm:$0xff]
  %v282 = vld [vmem:[%s4 + $0x98] sm:$0xff]
  %v283 = vld [vmem:[%s4 + $0xa0] sm:$0xff]
  %v284 = vld [vmem:[%s4 + $0xa8] sm:$0xff]
  %v285 = vld [vmem:[%s4 + $0xb0] sm:$0xff]
  %v286 = vld [vmem:[%s4 + $0xb8] sm:$0xff]
  %v287 = vld [vmem:[%s4 + $0xc0] sm:$0xff]
  %v288 = vld [vmem:[%s4 + $0xc8] sm:$0xff]
  %v289 = vld [vmem:[%s4 + $0xd0] sm:$0xff]
  %v290 = vld [vmem:[%s4 + $0xd8] sm:$0xff]
  %v291 = vld [vmem:[%s4 + $0xe0] sm:$0xff]
  %v292 = vld [vmem:[%s4 + $0xe8] sm:$0xff]
  %v293 = vld [vmem:[%s4 + $0xf0] sm:$0xff]
  %v294 = vld [vmem:[%s4 + $0xf8] sm:$0xff]
  %v295 = vld [vmem:[%s4 + $0x100] sm:$0xff]
  %v296 = vld [vmem:[%s4 + $0x108] sm:$0xff]
  %v297 = vld [vmem:[%s4 + $0x110] sm:$0xff]
  %v298 = vld [vmem:[%s4 + $0x118] sm:$0xff]
  %v299 = vld [vmem:[%s4 + $0x120] sm:$0xff]
  %v300 = vld [vmem:[%s4 + $0x128] sm:$0xff]
  %v301 = vld [vmem:[%s4 + $0x130] sm:$0xff]
  %v302 = vld [vmem:[%s4 + $0x138] sm:$0xff]
  %v303 = vld [vmem:[%s4 + $0x140] sm:$0xff]
  %v304 = vld [vmem:[%s4 + $0x148] sm:$0xff]
  %v305 = vld [vmem:[%s4 + $0x150] sm:$0xff]
  %v306 = vld [vmem:[%s4 + $0x158] sm:$0xff]
  %v307 = vld [vmem:[%s4 + $0x160] sm:$0xff]
  %v308 = vld [vmem:[%s4 + $0x168] sm:$0xff]
  %v309 = vld [vmem:[%s4 + $0x170] sm:$0xff]
  %v310 = vld [vmem:[%s4 + $0x178] sm:$0xff]
  %v311 = vld [vmem:[%s4 + $0x180] sm:$0xff]
  %v312 = vld [vmem:[%s4 + $0x188] sm:$0xff]
  %v313 = vld [vmem:[%s4 + $0x190] sm:$0xff]
  %v314 = vld [vmem:[%s4 + $0x198] sm:$0xff]
  %v315 = vld [vmem:[%s4 + $0x1a0] sm:$0xff]
  %v316 = vld [vmem:[%s4 + $0x1a8] sm:$0xff]
  %v317 = vld [vmem:[%s4 + $0x1b0] sm:$0xff]
  %v318 = vld [vmem:[%s4 + $0x1b8] sm:$0xff]
  %v319 = vld [vmem:[%s4 + $0x1c0] sm:$0xff]
  %v320 = vld [vmem:[%s4 + $0x1c8] sm:$0xff]
  %v321 = vld [vmem:[%s4 + $0x1d0] sm:$0xff]
  %v322 = vld [vmem:[%s4 + $0x1d8] sm:$0xff]
  %v323 = vld [vmem:[%s4 + $0x1e0] sm:$0xff]
  %v324 = vld [vmem:[%s4 + $0x1e8] sm:$0xff]
  %v325 = vld [vmem:[%s4 + $0x1f0] sm:$0xff]
  %v326 = vld [vmem:[%s4 + $0x1f8] sm:$0xff]
  %v327 = vld [vmem:[%s5] sm:$0x3]
  %v329 = vlaneseq
  %v330 = vshrl.u32 %v329, 7
  %v331 = vsub.s32 0, %v330
  %v332 = vrot.slane %v327, %v331
  %v333 = vlaneseq
  %v334 = vshrl.u32 %v333, 7
  %v335 = vsub.s32 1, %v334
  %v336 = vrot.slane %v327, %v335
  %339 = vmatprep.subr.mxu0 %v264
  %340 = vmatpush1.msra.mxu0 %v263
  %341 = vmatprep.subr.mxu0 %v266
  %342 = vmatpush1.msra.mxu0 %v265
  %343 = vmatprep.subr.mxu0 %v268
  %344 = vmatpush1.msra.mxu0 %v267
  %345 = vmatprep.subr.mxu0 %v270
  %346 = vmatpush1.msra.mxu0 %v269
  %347 = vmatprep.subr.mxu0 %v272
  %348 = vmatpush1.msra.mxu0 %v271
  %349 = vmatprep.subr.mxu0 %v274
  %350 = vmatpush1.msra.mxu0 %v273
  %351 = vmatprep.subr.mxu0 %v276
  %352 = vmatpush1.msra.mxu0 %v275
  %353 = vmatprep.subr.mxu0 %v278
  %354 = vmatpush1.msra.mxu0 %v277
  %355 = vmatprep.subr.mxu0 %v280
  %356 = vmatpush1.msra.mxu0 %v279
  %357 = vmatprep.subr.mxu0 %v282
  %358 = vmatpush1.msra.mxu0 %v281
  %359 = vmatprep.subr.mxu0 %v284
  %360 = vmatpush1.msra.mxu0 %v283
  %361 = vmatprep.subr.mxu0 %v286
  %362 = vmatpush1.msra.mxu0 %v285
  %363 = vmatprep.subr.mxu0 %v288
  %364 = vmatpush1.msra.mxu0 %v287
  %365 = vmatprep.subr.mxu0 %v290
  %366 = vmatpush1.msra.mxu0 %v289
  %367 = vmatprep.subr.mxu0 %v292
  %368 = vmatpush1.msra.mxu0 %v291
  %369 = vmatprep.subr.mxu0 %v294
  %370 = vmatpush1.msra.mxu0 %v293
  %371 = vmatprep.subr.mxu0 %v296
  %372 = vmatpush1.msra.mxu0 %v295
  %373 = vmatprep.subr.mxu0 %v298
  %374 = vmatpush1.msra.mxu0 %v297
  %375 = vmatprep.subr.mxu0 %v300
  %376 = vmatpush1.msra.mxu0 %v299
  %377 = vmatprep.subr.mxu0 %v302
  %378 = vmatpush1.msra.mxu0 %v301
  %379 = vmatprep.subr.mxu0 %v304
  %380 = vmatpush1.msra.mxu0 %v303
  %381 = vmatprep.subr.mxu0 %v306
  %382 = vmatpush1.msra.mxu0 %v305
  %383 = vmatprep.subr.mxu0 %v308
  %384 = vmatpush1.msra.mxu0 %v307
  %385 = vmatprep.subr.mxu0 %v310
  %386 = vmatpush1.msra.mxu0 %v309
  %387 = vmatprep.subr.mxu0 %v312
  %388 = vmatpush1.msra.mxu0 %v311
  %389 = vmatprep.subr.mxu0 %v314
  %390 = vmatpush1.msra.mxu0 %v313
  %391 = vmatprep.subr.mxu0 %v316
  %392 = vmatpush1.msra.mxu0 %v315
  %393 = vmatprep.subr.mxu0 %v318
  %394 = vmatpush1.msra.mxu0 %v317
  %395 = vmatprep.subr.mxu0 %v320
  %396 = vmatpush1.msra.mxu0 %v319
  %397 = vmatprep.subr.mxu0 %v322
  %398 = vmatpush1.msra.mxu0 %v321
  %399 = vmatprep.subr.mxu0 %v324
  %400 = vmatpush1.msra.mxu0 %v323
  %401 = vmatprep.subr.mxu0 %v326
  %402 = vmatpush1.msra.mxu0 %v325
  %403 = vmatprep.mubr.f32.mxu0 %v262
  %404 = vmatmul.mubr.f32.gmra.mrb[0].mxu0 %v261
  %v405 = vpop.f32.mrb[0].mxu0
  %v406 = vadd.f32 %v332, %v405
  %v407 = vpop.f32.mrb[0].mxu0
  %v408 = vadd.f32 %v336, %v407
  %409 = vdwg.mxu0
  %v410 = vmax.f32 %v406, 0.0
  %v411 = vmax.f32 %v408, 0.0
  %v412 = vld [vmem:[%s6] sm:$0xff]
  %v413 = vld [vmem:[%s6 + $0x8] sm:$0xff]
  %v414 = vld [vmem:[%s6 + $0x10] sm:$0xff]
  %v415 = vld [vmem:[%s6 + $0x18] sm:$0xff]
  %v416 = vld [vmem:[%s6 + $0x20] sm:$0xff]
  %v417 = vld [vmem:[%s6 + $0x28] sm:$0xff]
  %v418 = vld [vmem:[%s6 + $0x30] sm:$0xff]
  %v419 = vld [vmem:[%s6 + $0x38] sm:$0xff]
  %v420 = vld [vmem:[%s6 + $0x40] sm:$0xff]
  %v421 = vld [vmem:[%s6 + $0x48] sm:$0xff]
  %v422 = vld [vmem:[%s6 + $0x50] sm:$0xff]
  %v423 = vld [vmem:[%s6 + $0x58] sm:$0xff]
  %v424 = vld [vmem:[%s6 + $0x60] sm:$0xff]
  %v425 = vld [vmem:[%s6 + $0x68] sm:$0xff]
  %v426 = vld [vmem:[%s6 + $0x70] sm:$0xff]
  %v427 = vld [vmem:[%s6 + $0x78] sm:$0xff]
  %v428 = vld [vmem:[%s6 + $0x80] sm:$0xff]
  %v429 = vld [vmem:[%s6 + $0x88] sm:$0xff]
  %v430 = vld [vmem:[%s6 + $0x90] sm:$0xff]
  %v431 = vld [vmem:[%s6 + $0x98] sm:$0xff]
  %v432 = vld [vmem:[%s6 + $0xa0] sm:$0xff]
  %v433 = vld [vmem:[%s6 + $0xa8] sm:$0xff]
  %v434 = vld [vmem:[%s6 + $0xb0] sm:$0xff]
  %v435 = vld [vmem:[%s6 + $0xb8] sm:$0x3f]
  %v436 = vld [vmem:[%s7] sm:$0x1]
  %v438 = vlaneseq
  %v439 = vshrl.u32 %v438, 7
  %v440 = vsub.s32 0, %v439
  %v441 = vrot.slane %v436, %v440
  %vm443 = vcmask 506880
  %v445 = vsel %vm443, %v411, 0
  %vm447 = vcmask 1045504
  %v449 = vsel %vm447, %v435, 0
  %451 = vmatprep.subr.mxu0 0.0
  %452 = vmatpush1.msra.mxu0 %v412
  %453 = vmatprep.subr.mxu0 0.0
  %454 = vmatpush1.msra.mxu0 %v413
  %455 = vmatprep.subr.mxu0 0.0
  %456 = vmatpush1.msra.mxu0 %v414
  %457 = vmatprep.subr.mxu0 0.0
  %458 = vmatpush1.msra.mxu0 %v415
  %459 = vmatprep.subr.mxu0 0.0
  %460 = vmatpush1.msra.mxu0 %v416
  %461 = vmatprep.subr.mxu0 0.0
  %462 = vmatpush1.msra.mxu0 %v417
  %463 = vmatprep.subr.mxu0 0.0
  %464 = vmatpush1.msra.mxu0 %v418
  %465 = vmatprep.subr.mxu0 0.0
  %466 = vmatpush1.msra.mxu0 %v419
  %467 = vmatprep.subr.mxu0 0.0
  %468 = vmatpush1.msra.mxu0 %v420
  %469 = vmatprep.subr.mxu0 0.0
  %470 = vmatpush1.msra.mxu0 %v421
  %471 = vmatprep.subr.mxu0 0.0
  %472 = vmatpush1.msra.mxu0 %v422
  %473 = vmatprep.subr.mxu0 0.0
  %474 = vmatpush1.msra.mxu0 %v423
  %475 = vmatprep.subr.mxu0 0.0
  %476 = vmatpush1.msra.mxu0 %v424
  %477 = vmatprep.subr.mxu0 0.0
  %478 = vmatpush1.msra.mxu0 %v425
  %479 = vmatprep.subr.mxu0 0.0
  %480 = vmatpush1.msra.mxu0 %v426
  %481 = vmatprep.subr.mxu0 0.0
  %482 = vmatpush1.msra.mxu0 %v427
  %483 = vmatprep.subr.mxu0 0.0
  %484 = vmatpush1.msra.mxu0 %v428
  %485 = vmatprep.subr.mxu0 0.0
  %486 = vmatpush1.msra.mxu0 %v429
  %487 = vmatprep.subr.mxu0 0.0
  %488 = vmatpush1.msra.mxu0 %v430
  %489 = vmatprep.subr.mxu0 0.0
  %490 = vmatpush1.msra.mxu0 %v431
  %491 = vmatprep.subr.mxu0 0.0
  %492 = vmatpush1.msra.mxu0 %v432
  %493 = vmatprep.subr.mxu0 0.0
  %494 = vmatpush1.msra.mxu0 %v433
  %495 = vmatprep.subr.mxu0 0.0
  %496 = vmatpush1.msra.mxu0 %v434
  %497 = vmatprep.subr.mxu0 0.0
  %498 = vmatpush1.msra.mxu0 %v449
  %499 = vmatprep.subr.mxu0 0.0
  %500 = vmatpush1.msra.mxu0 0.0
  %501 = vmatprep.subr.mxu0 0.0
  %502 = vmatpush1.msra.mxu0 0.0
  %503 = vmatprep.subr.mxu0 0.0
  %504 = vmatpush1.msra.mxu0 0.0
  %505 = vmatprep.subr.mxu0 0.0
  %506 = vmatpush1.msra.mxu0 0.0
  %507 = vmatprep.subr.mxu0 0.0
  %508 = vmatpush1.msra.mxu0 0.0
  %509 = vmatprep.subr.mxu0 0.0
  %510 = vmatpush1.msra.mxu0 0.0
  %511 = vmatprep.subr.mxu0 0.0
  %512 = vmatpush1.msra.mxu0 0.0
  %513 = vmatprep.subr.mxu0 0.0
  %514 = vmatpush1.msra.mxu0 0.0
  %515 = vmatprep.mubr.f32.mxu0 %v445
  %516 = vmatmul.mubr.f32.gmra.mrb[0].mxu0 %v410
  %v517 = vpop.f32.mrb[0].mxu0
  %v518 = vadd.f32 %v441, %v517
  %v519 = vpop.f32.mrb[0].mxu0
  %520 = vdwg.mxu0
  %v521 = vmax.f32 %v518, 0.0
  %v522 = vld [vmem:[%s8] sm:$0xff]
  %v523 = vld [vmem:[%s8 + $0x8] sm:$0xff]
  %v524 = vld [vmem:[%s8 + $0x10] sm:$0xff]
  %v525 = vld [vmem:[%s8 + $0x18] sm:$0xff]
  %v526 = vld [vmem:[%s8 + $0x20] sm:$0xff]
  %v527 = vld [vmem:[%s8 + $0x28] sm:$0xff]
  %v528 = vld [vmem:[%s8 + $0x30] sm:$0xff]
  %v529 = vld [vmem:[%s8 + $0x38] sm:$0xff]
  %v530 = vld [vmem:[%s8 + $0x40] sm:$0xff]
  %v531 = vld [vmem:[%s8 + $0x48] sm:$0xff]
  %v532 = vld [vmem:[%s8 + $0x50] sm:$0xff]
  %v533 = vld [vmem:[%s8 + $0x58] sm:$0xff]
  %v534 = vld [vmem:[%s8 + $0x60] sm:$0xff]
  %v535 = vld [vmem:[%s8 + $0x68] sm:$0xff]
  %v536 = vld [vmem:[%s8 + $0x70] sm:$0xff]
  %v537 = vld [vmem:[%s8 + $0x78] sm:$0xff]
  %v538 = vld [vmem:[%s9] sm:$0x1]
  %v540 = vlaneseq
  %v541 = vshrl.u32 %v540, 7
  %v542 = vsub.s32 0, %v541
  %v543 = vrot.slane %v538, %v542
  %545 = vmatprep.subr.mxu0 0.0
  %546 = vmatpush1.msra.mxu0 %v522
  %547 = vmatprep.subr.mxu0 0.0
  %548 = vmatpush1.msra.mxu0 %v523
  %549 = vmatprep.subr.mxu0 0.0
  %550 = vmatpush1.msra.mxu0 %v524
  %551 = vmatprep.subr.mxu0 0.0
  %552 = vmatpush1.msra.mxu0 %v525
  %553 = vmatprep.subr.mxu0 0.0
  %554 = vmatpush1.msra.mxu0 %v526
  %555 = vmatprep.subr.mxu0 0.0
  %556 = vmatpush1.msra.mxu0 %v527
  %557 = vmatprep.subr.mxu0 0.0
  %558 = vmatpush1.msra.mxu0 %v528
  %559 = vmatprep.subr.mxu0 0.0
  %560 = vmatpush1.msra.mxu0 %v529
  %561 = vmatprep.subr.mxu0 0.0
  %562 = vmatpush1.msra.mxu0 %v530
  %563 = vmatprep.subr.mxu0 0.0
  %564 = vmatpush1.msra.mxu0 %v531
  %565 = vmatprep.subr.mxu0 0.0
  %566 = vmatpush1.msra.mxu0 %v532
  %567 = vmatprep.subr.mxu0 0.0
  %568 = vmatpush1.msra.mxu0 %v533
  %569 = vmatprep.subr.mxu0 0.0
  %570 = vmatpush1.msra.mxu0 %v534
  %571 = vmatprep.subr.mxu0 0.0
  %572 = vmatpush1.msra.mxu0 %v535
  %573 = vmatprep.subr.mxu0 0.0
  %574 = vmatpush1.msra.mxu0 %v536
  %575 = vmatprep.subr.mxu0 0.0
  %576 = vmatpush1.msra.mxu0 %v537
  %577 = vmatprep.subr.mxu0 0.0
  %578 = vmatpush1.msra.mxu0 0.0
  %579 = vmatprep.subr.mxu0 0.0
  %580 = vmatpush1.msra.mxu0 0.0
  %581 = vmatprep.subr.mxu0 0.0
  %582 = vmatpush1.msra.mxu0 0.0
  %583 = vmatprep.subr.mxu0 0.0
  %584 = vmatpush1.msra.mxu0 0.0
  %585 = vmatprep.subr.mxu0 0.0
  %586 = vmatpush1.msra.mxu0 0.0
  %587 = vmatprep.subr.mxu0 0.0
  %588 = vmatpush1.msra.mxu0 0.0
  %589 = vmatprep.subr.mxu0 0.0
  %590 = vmatpush1.msra.mxu0 0.0
  %591 = vmatprep.subr.mxu0 0.0
  %592 = vmatpush1.msra.mxu0 0.0
  %593 = vmatprep.subr.mxu0 0.0
  %594 = vmatpush1.msra.mxu0 0.0
  %595 = vmatprep.subr.mxu0 0.0
  %596 = vmatpush1.msra.mxu0 0.0
  %597 = vmatprep.subr.mxu0 0.0
  %598 = vmatpush1.msra.mxu0 0.0
  %599 = vmatprep.subr.mxu0 0.0
  %600 = vmatpush1.msra.mxu0 0.0
  %601 = vmatprep.subr.mxu0 0.0
  %602 = vmatpush1.msra.mxu0 0.0
  %603 = vmatprep.subr.mxu0 0.0
  %604 = vmatpush1.msra.mxu0 0.0
  %605 = vmatprep.subr.mxu0 0.0
  %606 = vmatpush1.msra.mxu0 0.0
  %607 = vmatprep.subr.mxu0 0.0
  %608 = vmatpush1.msra.mxu0 0.0
  %609 = vmatprep.mubr.f32.mxu0 0.0
  %610 = vmatmul.mubr.f32.gmra.mrb[0].mxu0 %v521
  %v611 = vpop.f32.mrb[0].mxu0
  %v612 = vadd.f32 %v543, %v611
  %v613 = vpop.f32.mrb[0].mxu0
  %614 = vdwg.mxu0
  %v615 = vmax.f32 %v612, 0.0
  %v616 = vld [vmem:[%s10] sm:$0xff]
  %v617 = vld [vmem:[%s10 + $0x8] sm:$0xff]
  %v618 = vld [vmem:[%s10 + $0x10] sm:$0xff]
  %v619 = vld [vmem:[%s10 + $0x18] sm:$0xff]
  %v620 = vld [vmem:[%s10 + $0x20] sm:$0xff]
  %v621 = vld [vmem:[%s10 + $0x28] sm:$0xff]
  %v622 = vld [vmem:[%s10 + $0x30] sm:$0xff]
  %v623 = vld [vmem:[%s10 + $0x38] sm:$0xff]
  %v624 = vld [vmem:[%s11] sm:$0x1]
  %v626 = vlaneseq
  %v627 = vshrl.u32 %v626, 7
  %v628 = vsub.s32 0, %v627
  %v629 = vrot.slane %v624, %v628
  %vm631 = vcmask 523264
  %v633 = vsel %vm631, %v615, 0
  %635 = vmatprep.subr.mxu0 0.0
  %636 = vmatpush1.msra.mxu0 %v616
  %637 = vmatprep.subr.mxu0 0.0
  %638 = vmatpush1.msra.mxu0 %v617
  %639 = vmatprep.subr.mxu0 0.0
  %640 = vmatpush1.msra.mxu0 %v618
  %641 = vmatprep.subr.mxu0 0.0
  %642 = vmatpush1.msra.mxu0 %v619
  %643 = vmatprep.subr.mxu0 0.0
  %644 = vmatpush1.msra.mxu0 %v620
  %645 = vmatprep.subr.mxu0 0.0
  %646 = vmatpush1.msra.mxu0 %v621
  %647 = vmatprep.subr.mxu0 0.0
  %648 = vmatpush1.msra.mxu0 %v622
  %649 = vmatprep.subr.mxu0 0.0
  %650 = vmatpush1.msra.mxu0 %v623
  %651 = vmatprep.subr.mxu0 0.0
  %652 = vmatpush1.msra.mxu0 0.0
  %653 = vmatprep.subr.mxu0 0.0
  %654 = vmatpush1.msra.mxu0 0.0
  %655 = vmatprep.subr.mxu0 0.0
  %656 = vmatpush1.msra.mxu0 0.0
  %657 = vmatprep.subr.mxu0 0.0
  %658 = vmatpush1.msra.mxu0 0.0
  %659 = vmatprep.subr.mxu0 0.0
  %660 = vmatpush1.msra.mxu0 0.0
  %661 = vmatprep.subr.mxu0 0.0
  %662 = vmatpush1.msra.mxu0 0.0
  %663 = vmatprep.subr.mxu0 0.0
  %664 = vmatpush1.msra.mxu0 0.0
  %665 = vmatprep.subr.mxu0 0.0
  %666 = vmatpush1.msra.mxu0 0.0
  %667 = vmatprep.subr.mxu0 0.0
  %668 = vmatpush1.msra.mxu0 0.0
  %669 = vmatprep.subr.mxu0 0.0
  %670 = vmatpush1.msra.mxu0 0.0
  %671 = vmatprep.subr.mxu0 0.0
  %672 = vmatpush1.msra.mxu0 0.0
  %673 = vmatprep.subr.mxu0 0.0
  %674 = vmatpush1.msra.mxu0 0.0
  %675 = vmatprep.subr.mxu0 0.0
  %676 = vmatpush1.msra.mxu0 0.0
  %677 = vmatprep.subr.mxu0 0.0
  %678 = vmatpush1.msra.mxu0 0.0
  %679 = vmatprep.subr.mxu0 0.0
  %680 = vmatpush1.msra.mxu0 0.0
  %681 = vmatprep.subr.mxu0 0.0
  %682 = vmatpush1.msra.mxu0 0.0
  %683 = vmatprep.subr.mxu0 0.0
  %684 = vmatpush1.msra.mxu0 0.0
  %685 = vmatprep.subr.mxu0 0.0
  %686 = vmatpush1.msra.mxu0 0.0
  %687 = vmatprep.subr.mxu0 0.0
  %688 = vmatpush1.msra.mxu0 0.0
  %689 = vmatprep.subr.mxu0 0.0
  %690 = vmatpush1.msra.mxu0 0.0
  %691 = vmatprep.subr.mxu0 0.0
  %692 = vmatpush1.msra.mxu0 0.0
  %693 = vmatprep.subr.mxu0 0.0
  %694 = vmatpush1.msra.mxu0 0.0
  %695 = vmatprep.subr.mxu0 0.0
  %696 = vmatpush1.msra.mxu0 0.0
  %697 = vmatprep.subr.mxu0 0.0
  %698 = vmatpush1.msra.mxu0 0.0
  %699 = vmatprep.mubr.f32.mxu0 0.0
  %700 = vmatmul.mubr.f32.gmra.mrb[0].mxu0 %v633
  %v701 = vpop.f32.mrb[0].mxu0
  %v702 = vadd.f32 %v629, %v701
  %v703 = vpop.f32.mrb[0].mxu0
  %704 = vdwg.mxu0
  %v705 = vmax.f32 %v702, 0.0
  %v706 = vld [vmem:[%s12] sm:$0x1]
  %v708 = vlaneseq
  %v709 = vshrl.u32 %v708, 7
  %v710 = vsub.s32 0, %v709
  %v711 = vrot.slane %v706, %v710
  %v713 = vmul.f32 %v705, %v711
  %vm714 = vcmask 91136
  %v715 = vsel %vm714, %v713, 0.0
  %716 = vadd.xlane.f32.xlu0 %v715
  %v717 = vpop.xlane.xlu0 %716
  %v718 = vld [vmem:[#allocation2] sm:$0x1]
  %v720 = vlaneseq
  %v721 = vshrl.u32 %v720, 7
  %v722 = vsub.s32 0, %v721
  %v723 = vrot.slane %v718, %v722
  %v725 = vadd.f32 %v717, %v723
  %v726 = vxor.u32 %v725, 2147483648
  %v727 = vmul.f32 %v726, 1.442695
  %v728 = vpow.pop %v727
  %v729 = vadd.f32 %v728, 1.0
  %v730 = vrcp.pop %v729
  %v731 = vmul.f32 1.0, %v730
  %vm732 = vcmask 1024
  %733 = vst.msk [vmem:[%s14] sm:$0x3] %vm732, %v731
  // Predicated region
  $region58: #{s2convnet_forward.13} parent=0 // pred_check
    _
  $region59: #{s2convnet_forward.13} parent=0 // pred_check_branch
    %735 = sbr.rel (0) target = $region61
  $region60: #{s2convnet_forward.13} parent=0 // pred_region
    _
  $region61: #{s2convnet_forward.13} parent=0 // pred_fallthru
    _
  // Predicated region
  $region62: #{s2convnet_forward.13} parent=0 // pred_check
    _
  $region63: #{s2convnet_forward.13} parent=0 // pred_check_branch
    %737 = sbr.rel (0) target = $region65
  $region64: #{s2convnet_forward.13} parent=0 // pred_region
    _
  $region65: #{s2convnet_forward.13} parent=0 // pred_fallthru
    _

</llo_original>
